<compile_context>
chip_gen: v6e
topology: v6e:2x2x1
jax: 0.10.0
libtpu: 0.0.40
codegen_flags: <defaults>
</compile_context>

<pallas_src>
import numpy as np
import jax
import jax.numpy as jnp
from jax import lax
from jax.experimental import pallas as pl
from jax.experimental.pallas import tpu as pltpu

C_PAD = 128          # lane-dense channel padding for all conv channels
BN_EPS = 1e-5


# ---------------------------------------------------------------------------
# Parameter preprocessing (wrapper-side glue, plain JAX / numpy)
# ---------------------------------------------------------------------------
def _fold_bn_scale_shift(bias, gamma, beta, mean, var, eps=BN_EPS):
    """Fold conv bias + BatchNorm (eval / running stats) into per-channel
    scale/shift, zero-padded to C_PAD lanes.  Returns [2, C_PAD] f32."""
    inv_std = lax.rsqrt(var + eps)
    scale = gamma * inv_std
    shift = (bias - mean) * scale + beta
    c = scale.shape[0]
    sb = jnp.zeros((2, C_PAD), jnp.float32)
    sb = sb.at[0, :c].set(scale.astype(jnp.float32))
    sb = sb.at[1, :c].set(shift.astype(jnp.float32))
    return sb


def _conv3x3_weight_mat(w_oihw):
    """[Cout, Cin, 3, 3] -> [9, C_PAD, C_PAD] bf16, k-index = kh*3 + kw."""
    cout, cin, kh, kw = w_oihw.shape
    w = jnp.transpose(w_oihw, (2, 3, 1, 0)).reshape(kh * kw, cin, cout)
    w = jnp.pad(w, ((0, 0), (0, C_PAD - cin), (0, C_PAD - cout)))
    return w.astype(jnp.bfloat16)


def _conv1_weight_mat(w_oihw, k_pad):
    """[Cout, Cin, 3, 3] -> [k_pad, C_PAD] bf16 (im2col order kh, kw, cin)."""
    cout, cin, kh, kw = w_oihw.shape
    w = jnp.transpose(w_oihw, (2, 3, 1, 0)).reshape(kh * kw * cin, cout)
    w = jnp.pad(w, ((0, k_pad - kh * kw * cin), (0, C_PAD - cout)))
    return w.astype(jnp.bfloat16)


def _parity_perm_matrix(oh, ow, gap):
    """0/1 matrix mapping a row-major (oh x ow) activation to parity-major
    blocks, each preceded by `gap` all-zero rows."""
    bh, bw = oh // 2, ow // 2
    pb = bh * bw + gap
    pm = np.zeros((4 * pb, oh * ow), np.float32)
    for g, (a, b) in enumerate([(0, 0), (0, 1), (1, 0), (1, 1)]):
        for i in range(bh):
            for j in range(bw):
                pm[g * pb + gap + i * bw + j, (2 * i + a) * ow + (2 * j + b)] = 1.0
    return pm


def _conv1_patches_parity(x_nhwc, gap, k_pad, stride=3, padding=1, ksz=3):
    """im2col for conv1 with output rows re-ordered into parity-major blocks
    (each preceded by `gap` zero rows).  Single gather + single bf16 cast.
    Returns bf16 [N, 4*(OH//2*OW//2+gap), k_pad]."""
    n, h, w, cin = x_nhwc.shape
    oh = (h + 2 * padding - ksz) // stride + 1
    ow = (w + 2 * padding - ksz) // stride + 1
    xp = jnp.pad(x_nhwc, ((0, 0), (padding, padding), (padding, padding), (0, 0)))
    cols = [xp[:, kh:kh + stride * oh:stride, kw:kw + stride * ow:stride, :]
            for kh in range(ksz) for kw in range(ksz)]
    patches = jnp.concatenate(cols, axis=-1).reshape(n, oh * ow, ksz * ksz * cin)
    # pad features to k_pad and append one all-zero row that the gap rows gather
    patches = jnp.pad(patches, ((0, 0), (0, 1), (0, k_pad - ksz * ksz * cin)))
    zero_row = oh * ow
    pos = np.arange(oh * ow).reshape(oh, ow)
    rows = []
    for (a, b) in [(0, 0), (0, 1), (1, 0), (1, 1)]:
        rows.extend([zero_row] * gap)
        rows.extend(pos[a::2, b::2].reshape(-1).tolist())      # i-major, j-minor
    idx = jnp.asarray(np.asarray(rows, np.int32))
    ext = jnp.take(patches, idx, axis=1).astype(jnp.bfloat16)
    return ext, oh, ow


# ---------------------------------------------------------------------------
# In-kernel helper: 3x3 / stride-2 / pad-1 conv over parity-blocked activation
# ---------------------------------------------------------------------------
def _conv_s2_parity(x_ext, w_ref, bh, bw, gap):
    """x_ext: [4*(bh*bw+gap), C_PAD] f32, four parity blocks each preceded by
    `gap` spacer rows.  Every (kh, kw) tap is a static contiguous row slice;
    reads that would touch conv zero-padding are masked with a cheap iota
    compare (no modulo when bw is a power of two).  9 bf16 MXU matmuls
    accumulated in f32."""
    mb, pb = bh * bw, bh * bw + gap
    flat = lax.broadcasted_iota(jnp.int32, (mb, C_PAD), 0)
    ow_idx = (flat & (bw - 1)) if (bw & (bw - 1)) == 0 else (flat % bw)
    row_ok = flat >= bw                 # output row i >= 1  (top padding)
    col_ok = ow_idx >= 1                # output col j >= 1  (left padding)
    masks = {(1, 1): jnp.logical_and(row_ok, col_ok),
             (1, 0): row_ok,
             (0, 1): col_ok}
    acc = jnp.zeros((mb, C_PAD), jnp.float32)
    for kh in range(3):
        a, dh = (0, 0) if kh == 1 else (1, 1 - kh // 2)
        for kw in range(3):
            b, dw = (0, 0) if kw == 1 else (1, 1 - kw // 2)
            g = 2 * a + b
            start = g * pb + gap - (dh * bw + dw)
            blk = x_ext[start:start + mb, :]
            if dh or dw:
                blk = jnp.where(masks[(dh, dw)], blk, jnp.zeros_like(blk))
            acc = acc + jnp.dot(blk.astype(jnp.bfloat16), w_ref[kh * 3 + kw],
                                preferred_element_type=jnp.float32)
    return acc


# ---------------------------------------------------------------------------
# Full fused forward pass
# ---------------------------------------------------------------------------
def model_forward(x_nchw, p, batch_tile=8):
    x = jnp.transpose(x_nchw, (0, 2, 3, 1)).astype(jnp.float32)   # NCHW -> NHWC
    n = x.shape[0]

    cin = x.shape[-1]
    k1 = 3 * 3 * cin
    k_pad = ((k1 + 31) // 32) * 32
    gap2, gap3 = 16, 8

    patches, oh1, ow1 = _conv1_patches_parity(x, gap2, k_pad)
    assert oh1 % 4 == 0 and ow1 % 4 == 0, "spatial size must survive two stride-2 convs"
    bh2, bw2 = oh1 // 2, ow1 // 2            # conv2 output grid (8x8 here)
    bh3, bw3 = bh2 // 2, bw2 // 2            # conv3 output grid (4x4 here)
    assert gap2 >= bw2 + 1 and gap3 >= bw3 + 1, \
        "parity-slab trick needs gap >= bw + 1 (negative static slice otherwise)"
    m2, m3 = bh2 * bw2, bh3 * bw3
    m1e = 4 * (m2 + gap2)                    # conv1 rows per image (parity + gaps)
    m2e = 4 * (m3 + gap3)

    # batch tile: amortise per-step cost but keep grid length >= 2 so
    # dimension_semantics=("parallel",) can use both v7x TensorCores.
    B = max(1, min(batch_tile, n // 2)) if n >= 2 else 1
    n_tiles = (n + B - 1) // B
    n_pad = n_tiles * B
    if n_pad > n:
        patches = jnp.pad(patches, ((0, n_pad - n), (0, 0), (0, 0)))
    patches = patches.reshape(n_tiles, B * m1e, k_pad)

    w1 = _conv1_weight_mat(p["conv1_w"], k_pad)
    sb1 = _fold_bn_scale_shift(p["conv1_b"], *p["bn1"])
    w2 = _conv3x3_weight_mat(p["conv2_w"])
    sb2 = _fold_bn_scale_shift(p["conv2_b"], *p["bn2"])
    w3 = _conv3x3_weight_mat(p["conv3_w"])
    sb3 = _fold_bn_scale_shift(p["conv3_b"], *p["bn3"])
    # 0/1 permutation matrix is exact in bf16 -> bf16 MXU matmul
    pmat = jnp.asarray(_parity_perm_matrix(bh2, bw2, gap3), np.float32).astype(jnp.bfloat16)

    f = p["fc1_w"].shape[0]                  # real fc output features (64)
    f_pad = ((f + 127) // 128) * 128         # lane-dense padded fc width
    wfc = jnp.zeros((C_PAD, f_pad), jnp.float32)
    wfc = wfc.at[:p["fc1_w"].shape[1], :f].set(
        jnp.transpose(p["fc1_w"]).astype(jnp.float32))
    fccb = jnp.zeros((2, f_pad), jnp.float32)         # row 0: bias, row 1: lane mask
    fccb = fccb.at[0, :f].set(p["fc1_b"].astype(jnp.float32))
    fccb = fccb.at[1, :f].set(1.0)

    def kernel(p_ref, w1_ref, sb1_ref, w2_ref, sb2_ref, pmat_ref,
               w3_ref, sb3_ref, wfc_ref, fccb_ref, o_ref, pool_sc):
        # hoisted constants / small operand loads (don't rebuild per image)
        w1m = w1_ref[...]
        s1, t1 = sb1_ref[0:1, :], sb1_ref[1:2, :]
        s2, t2 = sb2_ref[0:1, :], sb2_ref[1:2, :]
        s3, t3 = sb3_ref[0:1, :], sb3_ref[1:2, :]
        pm = pmat_ref[...]
        pool_w = jnp.full((1, m3), 1.0 / m3, jnp.float32)

        for img in range(B):                                   # static unroll
            # ---- conv1 (im2col matmul) + folded BN + ReLU ----------------
            pimg = p_ref[img * m1e:(img + 1) * m1e, :]
            y1 = jnp.dot(pimg, w1m, preferred_element_type=jnp.float32)
            y1 = jnp.maximum(y1 * s1 + t1, 0.0)

            # ---- conv2 + folded BN + ReLU --------------------------------
            y2 = _conv_s2_parity(y1, w2_ref, bh2, bw2, gap2)
            y2 = jnp.maximum(y2 * s2 + t2, 0.0)

            # re-block row-major conv2 output into parity-major for conv3
            y2p = jnp.dot(pm, y2.astype(jnp.bfloat16),
                          preferred_element_type=jnp.float32)

            # ---- conv3 + folded BN + ReLU --------------------------------
            y3 = _conv_s2_parity(y2p, w3_ref, bh3, bw3, gap3)
            y3 = jnp.maximum(y3 * s3 + t3, 0.0)

            # ---- adaptive avg pool (1x1) as a ones-vector MXU dot --------
            pool_sc[img:img + 1, :] = jnp.dot(
                pool_w, y3, preferred_element_type=jnp.float32)

        # ---- batched head: fc1 + ReLU + (eval dropout = id) + softmax ----
        h = jnp.dot(pool_sc[...], wfc_ref[...], preferred_element_type=jnp.float32)
        h = jnp.maximum(h + fccb_ref[0:1, :], 0.0)
        # second ReLU is a no-op on h >= 0; dropout(eval) = identity.
        mx = jnp.max(h, axis=-1, keepdims=True)
        e = jnp.exp(h - mx) * fccb_ref[1:2, :]      # zero padded fc lanes
        o_ref[...] = e / jnp.sum(e, axis=-1, keepdims=True)   # exact divide

    out = pl.pallas_call(
        kernel,
        out_shape=jax.ShapeDtypeStruct((n_tiles, B, f_pad), jnp.float32),
        grid=(n_tiles,),
        in_specs=[
            pl.BlockSpec((None, B * m1e, k_pad), lambda i: (i, 0, 0)),
            pl.BlockSpec((k_pad, C_PAD), lambda i: (0, 0)),
            pl.BlockSpec((2, C_PAD), lambda i: (0, 0)),
            pl.BlockSpec((9, C_PAD, C_PAD), lambda i: (0, 0, 0)),
            pl.BlockSpec((2, C_PAD), lambda i: (0, 0)),
            pl.BlockSpec((m2e, m2), lambda i: (0, 0)),
            pl.BlockSpec((9, C_PAD, C_PAD), lambda i: (0, 0, 0)),
            pl.BlockSpec((2, C_PAD), lambda i: (0, 0)),
            pl.BlockSpec((C_PAD, f_pad), lambda i: (0, 0)),
            pl.BlockSpec((2, f_pad), lambda i: (0, 0)),
        ],
        out_specs=pl.BlockSpec((None, B, f_pad), lambda i: (i, 0, 0)),
        scratch_shapes=[pltpu.VMEM((B, C_PAD), jnp.float32)],
        compiler_params=pltpu.CompilerParams(
            dimension_semantics=("parallel",)),
    )(patches, w1, sb1, w2, sb2, pmat, w3, sb3, wfc, fccb)

    return out.reshape(n_pad, f_pad)[:n, :f]


# ---------------------------------------------------------------------------
# Pure-JAX reference (for correctness check only)
# ---------------------------------------------------------------------------
def reference_forward(x_nchw, p, eps=BN_EPS):
    def conv_bn_relu(x, w, b, bn, stride):
        gamma, beta, mean, var = bn
        y = lax.conv_general_dilated(
            x, w, window_strides=(stride, stride), padding=[(1, 1), (1, 1)],
            dimension_numbers=("NCHW", "OIHW", "NCHW"))
        y = y + b[None, :, None, None]
        y = (y - mean[None, :, None, None]) \
            * (gamma * lax.rsqrt(var + eps))[None, :, None, None] \
            + beta[None, :, None, None]
        return jnp.maximum(y, 0.0)

    x = conv_bn_relu(x_nchw, p["conv1_w"], p["conv1_b"], p["bn1"], 3)
    x = conv_bn_relu(x, p["conv2_w"], p["conv2_b"], p["bn2"], 2)
    x = conv_bn_relu(x, p["conv3_w"], p["conv3_b"], p["bn3"], 2)
    pooled = jnp.mean(x, axis=(2, 3))
    h = jnp.maximum(pooled @ p["fc1_w"].T + p["fc1_b"], 0.0)
    return jax.nn.softmax(h, axis=-1)


# ---------------------------------------------------------------------------
# Parameter init (deterministic, synthetic)
# ---------------------------------------------------------------------------
def init_params(key):
    ks = jax.random.split(key, 12)
    p = {}

    def conv_params(kw, kb, cout, cin, k):
        w = 0.1 * jax.random.normal(kw, (cout, cin, k, k), jnp.float32)
        b = 0.05 * jax.random.normal(kb, (cout,), jnp.float32)
        return w, b

    def bn_params(kk, c):
        sub = jax.random.split(kk, 4)
        gamma = 1.0 + 0.05 * jax.random.normal(sub[0], (c,), jnp.float32)
        beta = 0.05 * jax.random.normal(sub[1], (c,), jnp.float32)
        mean = 0.05 * jax.random.normal(sub[2], (c,), jnp.float32)
        var = 1.0 + 0.1 * jax.nn.softplus(jax.random.normal(sub[3], (c,), jnp.float32))
        return gamma, beta, mean, var

    p["conv1_w"], p["conv1_b"] = conv_params(ks[0], ks[1], 32, 3, 3)
    p["conv2_w"], p["conv2_b"] = conv_params(ks[2], ks[3], 64, 32, 3)
    p["conv3_w"], p["conv3_b"] = conv_params(ks[4], ks[5], 128, 64, 3)
    p["bn1"] = bn_params(ks[6], 32)
    p["bn2"] = bn_params(ks[7], 64)
    p["bn3"] = bn_params(ks[8], 128)
    p["fc1_w"] = 0.1 * jax.random.normal(ks[9], (64, 128), jnp.float32)
    p["fc1_b"] = 0.05 * jax.random.normal(ks[10], (64,), jnp.float32)
    # fc2 params exist in the torch module but are never used by forward().
    return p


if __name__ == "__main__":
    key = jax.random.PRNGKey(0)
    k_x, k_p = jax.random.split(key)
    params = init_params(k_p)
    fwd = jax.jit(model_forward)

    # N=3ch, H=W=48: conv1(s=3,p=1) -> 16x16, conv2(s=2) -> 8x8, conv3 -> 4x4.
    # n=2 exercises the B=1 / grid=2 path; n=16 exercises B=8 batch tiles.
    for n in (2, 16):
        x = jax.random.normal(jax.random.fold_in(k_x, n), (n, 3, 48, 48),
                              jnp.float32)
        out = jax.block_until_ready(fwd(x, params))

        assert out.shape == (n, 64)
        assert bool(jnp.all(jnp.isfinite(out)))
        assert bool(jnp.allclose(jnp.sum(out, axis=-1), 1.0, atol=5e-3))

        ref = reference_forward(x, params)
        err = float(jnp.max(jnp.abs(out - ref)))
        assert err < 2e-2, err

    print("KERNEL_OK")
</pallas_src>

<mosaic_0001>
module attributes {stable_mosaic.version = 11 : i64} {
  func.func @kernel(%arg0: i32, %arg1: memref<1x320x32xbf16, #tpu.memory_space<vmem>>, %arg2: memref<32x128xbf16, #tpu.memory_space<vmem>>, %arg3: memref<2x128xf32, #tpu.memory_space<vmem>>, %arg4: memref<9x128x128xbf16, #tpu.memory_space<vmem>>, %arg5: memref<2x128xf32, #tpu.memory_space<vmem>>, %arg6: memref<96x64xbf16, #tpu.memory_space<vmem>>, %arg7: memref<9x128x128xbf16, #tpu.memory_space<vmem>>, %arg8: memref<2x128xf32, #tpu.memory_space<vmem>>, %arg9: memref<128x128xf32, #tpu.memory_space<vmem>>, %arg10: memref<2x128xf32, #tpu.memory_space<vmem>>, %arg11: memref<1x1x128xf32, #tpu.memory_space<vmem>>, %arg12: memref<1x128xf32, #tpu.memory_space<vmem>>) attributes {dimension_semantics = [#tpu.dimension_semantics<parallel>], iteration_bounds = array<i64: 2>, scalar_prefetch = 0 : i64, scratch_operands = 1 : i64, tpu.core_type = #tpu.core_type<tc>, window_params = [{transform_indices = @transform_0, window_bounds = array<i64: 1, 320, 32>}, {pipeline_mode = #tpu.pipeline_mode<synchronous>, transform_indices = @transform_1, window_bounds = array<i64: 32, 128>}, {pipeline_mode = #tpu.pipeline_mode<synchronous>, transform_indices = @transform_2, window_bounds = array<i64: 2, 128>}, {pipeline_mode = #tpu.pipeline_mode<synchronous>, transform_indices = @transform_3, window_bounds = array<i64: 9, 128, 128>}, {pipeline_mode = #tpu.pipeline_mode<synchronous>, transform_indices = @transform_4, window_bounds = array<i64: 2, 128>}, {pipeline_mode = #tpu.pipeline_mode<synchronous>, transform_indices = @transform_5, window_bounds = array<i64: 96, 64>}, {pipeline_mode = #tpu.pipeline_mode<synchronous>, transform_indices = @transform_6, window_bounds = array<i64: 9, 128, 128>}, {pipeline_mode = #tpu.pipeline_mode<synchronous>, transform_indices = @transform_7, window_bounds = array<i64: 2, 128>}, {pipeline_mode = #tpu.pipeline_mode<synchronous>, transform_indices = @transform_8, window_bounds = array<i64: 128, 128>}, {pipeline_mode = #tpu.pipeline_mode<synchronous>, transform_indices = @transform_9, window_bounds = array<i64: 2, 128>}, {transform_indices = @transform_10, window_bounds = array<i64: 1, 1, 128>}]} {
    %c0 = arith.constant 0 : index
    %c0_0 = arith.constant 0 : index
    %0 = vector.load %arg2[%c0, %c0_0] : memref<32x128xbf16, #tpu.memory_space<vmem>>, vector<32x128xbf16>
    %c0_1 = arith.constant 0 : index
    %c0_2 = arith.constant 0 : index
    %1 = vector.load %arg3[%c0_1, %c0_2] : memref<2x128xf32, #tpu.memory_space<vmem>>, vector<1x128xf32>
    %c1 = arith.constant 1 : index
    %c0_3 = arith.constant 0 : index
    %2 = vector.load %arg3[%c1, %c0_3] : memref<2x128xf32, #tpu.memory_space<vmem>>, vector<1x128xf32>
    %c0_4 = arith.constant 0 : index
    %c0_5 = arith.constant 0 : index
    %3 = vector.load %arg5[%c0_4, %c0_5] : memref<2x128xf32, #tpu.memory_space<vmem>>, vector<1x128xf32>
    %c1_6 = arith.constant 1 : index
    %c0_7 = arith.constant 0 : index
    %4 = vector.load %arg5[%c1_6, %c0_7] : memref<2x128xf32, #tpu.memory_space<vmem>>, vector<1x128xf32>
    %c0_8 = arith.constant 0 : index
    %c0_9 = arith.constant 0 : index
    %5 = vector.load %arg8[%c0_8, %c0_9] : memref<2x128xf32, #tpu.memory_space<vmem>>, vector<1x128xf32>
    %c1_10 = arith.constant 1 : index
    %c0_11 = arith.constant 0 : index
    %6 = vector.load %arg8[%c1_10, %c0_11] : memref<2x128xf32, #tpu.memory_space<vmem>>, vector<1x128xf32>
    %c0_12 = arith.constant 0 : index
    %c0_13 = arith.constant 0 : index
    %7 = vector.load %arg6[%c0_12, %c0_13] : memref<96x64xbf16, #tpu.memory_space<vmem>>, vector<96x64xbf16>
    %cst = arith.constant 6.250000e-02 : f32
    %8 = vector.broadcast %cst : f32 to vector<1x16xf32>
    %c0_14 = arith.constant 0 : index
    %c0_15 = arith.constant 0 : index
    %c0_16 = arith.constant 0 : index
    %9 = vector.load %arg1[%c0_14, %c0_15, %c0_16] : memref<1x320x32xbf16, #tpu.memory_space<vmem>>, vector<1x320x32xbf16>
    %10 = vector.shape_cast %9 : vector<1x320x32xbf16> to vector<320x32xbf16>
    %cst_17 = arith.constant dense<0.000000e+00> : vector<320x128xf32>
    %11 = tpu.matmul %10, %0, %cst_17 {dimension_numbers = #tpu.dot_dimension_numbers<[1], [0], [0], [1], [0, 0, 1, 1], [], []>} : vector<320x32xbf16>, vector<32x128xbf16>, vector<320x128xf32> -> vector<320x128xf32>
    %12 = vector.broadcast %1 : vector<1x128xf32> to vector<320x128xf32>
    %13 = arith.mulf %11, %12 : vector<320x128xf32>
    %14 = vector.broadcast %2 : vector<1x128xf32> to vector<320x128xf32>
    %15 = arith.addf %13, %14 : vector<320x128xf32>
    %cst_18 = arith.constant 0.000000e+00 : f32
    %16 = vector.broadcast %cst_18 : f32 to vector<320x128xf32>
    %17 = arith.maximumf %15, %16 : vector<320x128xf32>
    %18 = tpu.iota {dimensions = array<i32: 0>} : vector<64x128xi32>
    %c7_i32 = arith.constant 7 : i32
    %19 = vector.broadcast %c7_i32 : i32 to vector<64x128xi32>
    %20 = arith.andi %18, %19 : vector<64x128xi32>
    %c8_i32 = arith.constant 8 : i32
    %21 = vector.broadcast %c8_i32 : i32 to vector<64x128xi32>
    %22 = arith.cmpi sge, %18, %21 : vector<64x128xi32>
    %c1_i32 = arith.constant 1 : i32
    %23 = vector.broadcast %c1_i32 : i32 to vector<64x128xi32>
    %24 = arith.cmpi sge, %20, %23 : vector<64x128xi32>
    %25 = arith.andi %22, %24 : vector<64x128xi1>
    %cst_19 = arith.constant 0.000000e+00 : f32
    %26 = vector.broadcast %cst_19 : f32 to vector<64x128xf32>
    %27 = vector.extract_strided_slice %17 {offsets = [247, 0], sizes = [64, 128], strides = [1, 1]} : vector<320x128xf32> to vector<64x128xf32>
    %cst_20 = arith.constant 0.000000e+00 : f32
    %28 = vector.broadcast %cst_20 : f32 to vector<64x128xf32>
    %29 = arith.select %25, %27, %28 : vector<64x128xi1>, vector<64x128xf32>
    %30 = arith.truncf %29 : vector<64x128xf32> to vector<64x128xbf16>
    %c0_21 = arith.constant 0 : index
    %c0_22 = arith.constant 0 : index
    %c0_23 = arith.constant 0 : index
    %31 = vector.load %arg4[%c0_21, %c0_22, %c0_23] : memref<9x128x128xbf16, #tpu.memory_space<vmem>>, vector<1x128x128xbf16>
    %32 = vector.shape_cast %31 : vector<1x128x128xbf16> to vector<128x128xbf16>
    %cst_24 = arith.constant dense<0.000000e+00> : vector<64x128xf32>
    %33 = tpu.matmul %30, %32, %cst_24 {dimension_numbers = #tpu.dot_dimension_numbers<[1], [0], [0], [1], [0, 0, 1, 1], [], []>} : vector<64x128xbf16>, vector<128x128xbf16>, vector<64x128xf32> -> vector<64x128xf32>
    %34 = arith.addf %26, %33 : vector<64x128xf32>
    %35 = vector.extract_strided_slice %17 {offsets = [168, 0], sizes = [64, 128], strides = [1, 1]} : vector<320x128xf32> to vector<64x128xf32>
    %cst_25 = arith.constant 0.000000e+00 : f32
    %36 = vector.broadcast %cst_25 : f32 to vector<64x128xf32>
    %37 = arith.select %22, %35, %36 : vector<64x128xi1>, vector<64x128xf32>
    %38 = arith.truncf %37 : vector<64x128xf32> to vector<64x128xbf16>
    %c1_26 = arith.constant 1 : index
    %c0_27 = arith.constant 0 : index
    %c0_28 = arith.constant 0 : index
    %39 = vector.load %arg4[%c1_26, %c0_27, %c0_28] : memref<9x128x128xbf16, #tpu.memory_space<vmem>>, vector<1x128x128xbf16>
    %40 = vector.shape_cast %39 : vector<1x128x128xbf16> to vector<128x128xbf16>
    %cst_29 = arith.constant dense<0.000000e+00> : vector<64x128xf32>
    %41 = tpu.matmul %38, %40, %cst_29 {dimension_numbers = #tpu.dot_dimension_numbers<[1], [0], [0], [1], [0, 0, 1, 1], [], []>} : vector<64x128xbf16>, vector<128x128xbf16>, vector<64x128xf32> -> vector<64x128xf32>
    %42 = arith.addf %34, %41 : vector<64x128xf32>
    %43 = vector.extract_strided_slice %17 {offsets = [248, 0], sizes = [64, 128], strides = [1, 1]} : vector<320x128xf32> to vector<64x128xf32>
    %cst_30 = arith.constant 0.000000e+00 : f32
    %44 = vector.broadcast %cst_30 : f32 to vector<64x128xf32>
    %45 = arith.select %22, %43, %44 : vector<64x128xi1>, vector<64x128xf32>
    %46 = arith.truncf %45 : vector<64x128xf32> to vector<64x128xbf16>
    %c2 = arith.constant 2 : index
    %c0_31 = arith.constant 0 : index
    %c0_32 = arith.constant 0 : index
    %47 = vector.load %arg4[%c2, %c0_31, %c0_32] : memref<9x128x128xbf16, #tpu.memory_space<vmem>>, vector<1x128x128xbf16>
    %48 = vector.shape_cast %47 : vector<1x128x128xbf16> to vector<128x128xbf16>
    %cst_33 = arith.constant dense<0.000000e+00> : vector<64x128xf32>
    %49 = tpu.matmul %46, %48, %cst_33 {dimension_numbers = #tpu.dot_dimension_numbers<[1], [0], [0], [1], [0, 0, 1, 1], [], []>} : vector<64x128xbf16>, vector<128x128xbf16>, vector<64x128xf32> -> vector<64x128xf32>
    %50 = arith.addf %42, %49 : vector<64x128xf32>
    %51 = vector.extract_strided_slice %17 {offsets = [95, 0], sizes = [64, 128], strides = [1, 1]} : vector<320x128xf32> to vector<64x128xf32>
    %cst_34 = arith.constant 0.000000e+00 : f32
    %52 = vector.broadcast %cst_34 : f32 to vector<64x128xf32>
    %53 = arith.select %24, %51, %52 : vector<64x128xi1>, vector<64x128xf32>
    %54 = arith.truncf %53 : vector<64x128xf32> to vector<64x128xbf16>
    %c3 = arith.constant 3 : index
    %c0_35 = arith.constant 0 : index
    %c0_36 = arith.constant 0 : index
    %55 = vector.load %arg4[%c3, %c0_35, %c0_36] : memref<9x128x128xbf16, #tpu.memory_space<vmem>>, vector<1x128x128xbf16>
    %56 = vector.shape_cast %55 : vector<1x128x128xbf16> to vector<128x128xbf16>
    %cst_37 = arith.constant dense<0.000000e+00> : vector<64x128xf32>
    %57 = tpu.matmul %54, %56, %cst_37 {dimension_numbers = #tpu.dot_dimension_numbers<[1], [0], [0], [1], [0, 0, 1, 1], [], []>} : vector<64x128xbf16>, vector<128x128xbf16>, vector<64x128xf32> -> vector<64x128xf32>
    %58 = arith.addf %50, %57 : vector<64x128xf32>
    %59 = vector.extract_strided_slice %17 {offsets = [16, 0], sizes = [64, 128], strides = [1, 1]} : vector<320x128xf32> to vector<64x128xf32>
    %60 = arith.truncf %59 : vector<64x128xf32> to vector<64x128xbf16>
    %c4 = arith.constant 4 : index
    %c0_38 = arith.constant 0 : index
    %c0_39 = arith.constant 0 : index
    %61 = vector.load %arg4[%c4, %c0_38, %c0_39] : memref<9x128x128xbf16, #tpu.memory_space<vmem>>, vector<1x128x128xbf16>
    %62 = vector.shape_cast %61 : vector<1x128x128xbf16> to vector<128x128xbf16>
    %cst_40 = arith.constant dense<0.000000e+00> : vector<64x128xf32>
    %63 = tpu.matmul %60, %62, %cst_40 {dimension_numbers = #tpu.dot_dimension_numbers<[1], [0], [0], [1], [0, 0, 1, 1], [], []>} : vector<64x128xbf16>, vector<128x128xbf16>, vector<64x128xf32> -> vector<64x128xf32>
    %64 = arith.addf %58, %63 : vector<64x128xf32>
    %65 = vector.extract_strided_slice %17 {offsets = [96, 0], sizes = [64, 128], strides = [1, 1]} : vector<320x128xf32> to vector<64x128xf32>
    %66 = arith.truncf %65 : vector<64x128xf32> to vector<64x128xbf16>
    %c5 = arith.constant 5 : index
    %c0_41 = arith.constant 0 : index
    %c0_42 = arith.constant 0 : index
    %67 = vector.load %arg4[%c5, %c0_41, %c0_42] : memref<9x128x128xbf16, #tpu.memory_space<vmem>>, vector<1x128x128xbf16>
    %68 = vector.shape_cast %67 : vector<1x128x128xbf16> to vector<128x128xbf16>
    %cst_43 = arith.constant dense<0.000000e+00> : vector<64x128xf32>
    %69 = tpu.matmul %66, %68, %cst_43 {dimension_numbers = #tpu.dot_dimension_numbers<[1], [0], [0], [1], [0, 0, 1, 1], [], []>} : vector<64x128xbf16>, vector<128x128xbf16>, vector<64x128xf32> -> vector<64x128xf32>
    %70 = arith.addf %64, %69 : vector<64x128xf32>
    %71 = vector.extract_strided_slice %17 {offsets = [255, 0], sizes = [64, 128], strides = [1, 1]} : vector<320x128xf32> to vector<64x128xf32>
    %cst_44 = arith.constant 0.000000e+00 : f32
    %72 = vector.broadcast %cst_44 : f32 to vector<64x128xf32>
    %73 = arith.select %24, %71, %72 : vector<64x128xi1>, vector<64x128xf32>
    %74 = arith.truncf %73 : vector<64x128xf32> to vector<64x128xbf16>
    %c6 = arith.constant 6 : index
    %c0_45 = arith.constant 0 : index
    %c0_46 = arith.constant 0 : index
    %75 = vector.load %arg4[%c6, %c0_45, %c0_46] : memref<9x128x128xbf16, #tpu.memory_space<vmem>>, vector<1x128x128xbf16>
    %76 = vector.shape_cast %75 : vector<1x128x128xbf16> to vector<128x128xbf16>
    %cst_47 = arith.constant dense<0.000000e+00> : vector<64x128xf32>
    %77 = tpu.matmul %74, %76, %cst_47 {dimension_numbers = #tpu.dot_dimension_numbers<[1], [0], [0], [1], [0, 0, 1, 1], [], []>} : vector<64x128xbf16>, vector<128x128xbf16>, vector<64x128xf32> -> vector<64x128xf32>
    %78 = arith.addf %70, %77 : vector<64x128xf32>
    %79 = vector.extract_strided_slice %17 {offsets = [176, 0], sizes = [64, 128], strides = [1, 1]} : vector<320x128xf32> to vector<64x128xf32>
    %80 = arith.truncf %79 : vector<64x128xf32> to vector<64x128xbf16>
    %c7 = arith.constant 7 : index
    %c0_48 = arith.constant 0 : index
    %c0_49 = arith.constant 0 : index
    %81 = vector.load %arg4[%c7, %c0_48, %c0_49] : memref<9x128x128xbf16, #tpu.memory_space<vmem>>, vector<1x128x128xbf16>
    %82 = vector.shape_cast %81 : vector<1x128x128xbf16> to vector<128x128xbf16>
    %cst_50 = arith.constant dense<0.000000e+00> : vector<64x128xf32>
    %83 = tpu.matmul %80, %82, %cst_50 {dimension_numbers = #tpu.dot_dimension_numbers<[1], [0], [0], [1], [0, 0, 1, 1], [], []>} : vector<64x128xbf16>, vector<128x128xbf16>, vector<64x128xf32> -> vector<64x128xf32>
    %84 = arith.addf %78, %83 : vector<64x128xf32>
    %85 = vector.extract_strided_slice %17 {offsets = [256, 0], sizes = [64, 128], strides = [1, 1]} : vector<320x128xf32> to vector<64x128xf32>
    %86 = arith.truncf %85 : vector<64x128xf32> to vector<64x128xbf16>
    %c8 = arith.constant 8 : index
    %c0_51 = arith.constant 0 : index
    %c0_52 = arith.constant 0 : index
    %87 = vector.load %arg4[%c8, %c0_51, %c0_52] : memref<9x128x128xbf16, #tpu.memory_space<vmem>>, vector<1x128x128xbf16>
    %88 = vector.shape_cast %87 : vector<1x128x128xbf16> to vector<128x128xbf16>
    %cst_53 = arith.constant dense<0.000000e+00> : vector<64x128xf32>
    %89 = tpu.matmul %86, %88, %cst_53 {dimension_numbers = #tpu.dot_dimension_numbers<[1], [0], [0], [1], [0, 0, 1, 1], [], []>} : vector<64x128xbf16>, vector<128x128xbf16>, vector<64x128xf32> -> vector<64x128xf32>
    %90 = arith.addf %84, %89 : vector<64x128xf32>
    %91 = vector.broadcast %3 : vector<1x128xf32> to vector<64x128xf32>
    %92 = arith.mulf %90, %91 : vector<64x128xf32>
    %93 = vector.broadcast %4 : vector<1x128xf32> to vector<64x128xf32>
    %94 = arith.addf %92, %93 : vector<64x128xf32>
    %cst_54 = arith.constant 0.000000e+00 : f32
    %95 = vector.broadcast %cst_54 : f32 to vector<64x128xf32>
    %96 = arith.maximumf %94, %95 : vector<64x128xf32>
    %97 = arith.truncf %96 : vector<64x128xf32> to vector<64x128xbf16>
    %cst_55 = arith.constant dense<0.000000e+00> : vector<96x128xf32>
    %98 = tpu.matmul %7, %97, %cst_55 {dimension_numbers = #tpu.dot_dimension_numbers<[1], [0], [0], [1], [0, 0, 1, 1], [], []>} : vector<96x64xbf16>, vector<64x128xbf16>, vector<96x128xf32> -> vector<96x128xf32>
    %99 = tpu.iota {dimensions = array<i32: 0>} : vector<16x128xi32>
    %c3_i32 = arith.constant 3 : i32
    %100 = vector.broadcast %c3_i32 : i32 to vector<16x128xi32>
    %101 = arith.andi %99, %100 : vector<16x128xi32>
    %c4_i32 = arith.constant 4 : i32
    %102 = vector.broadcast %c4_i32 : i32 to vector<16x128xi32>
    %103 = arith.cmpi sge, %99, %102 : vector<16x128xi32>
    %c1_i32_56 = arith.constant 1 : i32
    %104 = vector.broadcast %c1_i32_56 : i32 to vector<16x128xi32>
    %105 = arith.cmpi sge, %101, %104 : vector<16x128xi32>
    %106 = arith.andi %103, %105 : vector<16x128xi1>
    %cst_57 = arith.constant 0.000000e+00 : f32
    %107 = vector.broadcast %cst_57 : f32 to vector<16x128xf32>
    %108 = vector.extract_strided_slice %98 {offsets = [75, 0], sizes = [16, 128], strides = [1, 1]} : vector<96x128xf32> to vector<16x128xf32>
    %cst_58 = arith.constant 0.000000e+00 : f32
    %109 = vector.broadcast %cst_58 : f32 to vector<16x128xf32>
    %110 = arith.select %106, %108, %109 : vector<16x128xi1>, vector<16x128xf32>
    %111 = arith.truncf %110 : vector<16x128xf32> to vector<16x128xbf16>
    %c0_59 = arith.constant 0 : index
    %c0_60 = arith.constant 0 : index
    %c0_61 = arith.constant 0 : index
    %112 = vector.load %arg7[%c0_59, %c0_60, %c0_61] : memref<9x128x128xbf16, #tpu.memory_space<vmem>>, vector<1x128x128xbf16>
    %113 = vector.shape_cast %112 : vector<1x128x128xbf16> to vector<128x128xbf16>
    %cst_62 = arith.constant dense<0.000000e+00> : vector<16x128xf32>
    %114 = tpu.matmul %111, %113, %cst_62 {dimension_numbers = #tpu.dot_dimension_numbers<[1], [0], [0], [1], [0, 0, 1, 1], [], []>} : vector<16x128xbf16>, vector<128x128xbf16>, vector<16x128xf32> -> vector<16x128xf32>
    %115 = arith.addf %107, %114 : vector<16x128xf32>
    %116 = vector.extract_strided_slice %98 {offsets = [52, 0], sizes = [16, 128], strides = [1, 1]} : vector<96x128xf32> to vector<16x128xf32>
    %cst_63 = arith.constant 0.000000e+00 : f32
    %117 = vector.broadcast %cst_63 : f32 to vector<16x128xf32>
    %118 = arith.select %103, %116, %117 : vector<16x128xi1>, vector<16x128xf32>
    %119 = arith.truncf %118 : vector<16x128xf32> to vector<16x128xbf16>
    %c1_64 = arith.constant 1 : index
    %c0_65 = arith.constant 0 : index
    %c0_66 = arith.constant 0 : index
    %120 = vector.load %arg7[%c1_64, %c0_65, %c0_66] : memref<9x128x128xbf16, #tpu.memory_space<vmem>>, vector<1x128x128xbf16>
    %121 = vector.shape_cast %120 : vector<1x128x128xbf16> to vector<128x128xbf16>
    %cst_67 = arith.constant dense<0.000000e+00> : vector<16x128xf32>
    %122 = tpu.matmul %119, %121, %cst_67 {dimension_numbers = #tpu.dot_dimension_numbers<[1], [0], [0], [1], [0, 0, 1, 1], [], []>} : vector<16x128xbf16>, vector<128x128xbf16>, vector<16x128xf32> -> vector<16x128xf32>
    %123 = arith.addf %115, %122 : vector<16x128xf32>
    %124 = vector.extract_strided_slice %98 {offsets = [76, 0], sizes = [16, 128], strides = [1, 1]} : vector<96x128xf32> to vector<16x128xf32>
    %cst_68 = arith.constant 0.000000e+00 : f32
    %125 = vector.broadcast %cst_68 : f32 to vector<16x128xf32>
    %126 = arith.select %103, %124, %125 : vector<16x128xi1>, vector<16x128xf32>
    %127 = arith.truncf %126 : vector<16x128xf32> to vector<16x128xbf16>
    %c2_69 = arith.constant 2 : index
    %c0_70 = arith.constant 0 : index
    %c0_71 = arith.constant 0 : index
    %128 = vector.load %arg7[%c2_69, %c0_70, %c0_71] : memref<9x128x128xbf16, #tpu.memory_space<vmem>>, vector<1x128x128xbf16>
    %129 = vector.shape_cast %128 : vector<1x128x128xbf16> to vector<128x128xbf16>
    %cst_72 = arith.constant dense<0.000000e+00> : vector<16x128xf32>
    %130 = tpu.matmul %127, %129, %cst_72 {dimension_numbers = #tpu.dot_dimension_numbers<[1], [0], [0], [1], [0, 0, 1, 1], [], []>} : vector<16x128xbf16>, vector<128x128xbf16>, vector<16x128xf32> -> vector<16x128xf32>
    %131 = arith.addf %123, %130 : vector<16x128xf32>
    %132 = vector.extract_strided_slice %98 {offsets = [31, 0], sizes = [16, 128], strides = [1, 1]} : vector<96x128xf32> to vector<16x128xf32>
    %cst_73 = arith.constant 0.000000e+00 : f32
    %133 = vector.broadcast %cst_73 : f32 to vector<16x128xf32>
    %134 = arith.select %105, %132, %133 : vector<16x128xi1>, vector<16x128xf32>
    %135 = arith.truncf %134 : vector<16x128xf32> to vector<16x128xbf16>
    %c3_74 = arith.constant 3 : index
    %c0_75 = arith.constant 0 : index
    %c0_76 = arith.constant 0 : index
    %136 = vector.load %arg7[%c3_74, %c0_75, %c0_76] : memref<9x128x128xbf16, #tpu.memory_space<vmem>>, vector<1x128x128xbf16>
    %137 = vector.shape_cast %136 : vector<1x128x128xbf16> to vector<128x128xbf16>
    %cst_77 = arith.constant dense<0.000000e+00> : vector<16x128xf32>
    %138 = tpu.matmul %135, %137, %cst_77 {dimension_numbers = #tpu.dot_dimension_numbers<[1], [0], [0], [1], [0, 0, 1, 1], [], []>} : vector<16x128xbf16>, vector<128x128xbf16>, vector<16x128xf32> -> vector<16x128xf32>
    %139 = arith.addf %131, %138 : vector<16x128xf32>
    %140 = vector.extract_strided_slice %98 {offsets = [8, 0], sizes = [16, 128], strides = [1, 1]} : vector<96x128xf32> to vector<16x128xf32>
    %141 = arith.truncf %140 : vector<16x128xf32> to vector<16x128xbf16>
    %c4_78 = arith.constant 4 : index
    %c0_79 = arith.constant 0 : index
    %c0_80 = arith.constant 0 : index
    %142 = vector.load %arg7[%c4_78, %c0_79, %c0_80] : memref<9x128x128xbf16, #tpu.memory_space<vmem>>, vector<1x128x128xbf16>
    %143 = vector.shape_cast %142 : vector<1x128x128xbf16> to vector<128x128xbf16>
    %cst_81 = arith.constant dense<0.000000e+00> : vector<16x128xf32>
    %144 = tpu.matmul %141, %143, %cst_81 {dimension_numbers = #tpu.dot_dimension_numbers<[1], [0], [0], [1], [0, 0, 1, 1], [], []>} : vector<16x128xbf16>, vector<128x128xbf16>, vector<16x128xf32> -> vector<16x128xf32>
    %145 = arith.addf %139, %144 : vector<16x128xf32>
    %146 = vector.extract_strided_slice %98 {offsets = [32, 0], sizes = [16, 128], strides = [1, 1]} : vector<96x128xf32> to vector<16x128xf32>
    %147 = arith.truncf %146 : vector<16x128xf32> to vector<16x128xbf16>
    %c5_82 = arith.constant 5 : index
    %c0_83 = arith.constant 0 : index
    %c0_84 = arith.constant 0 : index
    %148 = vector.load %arg7[%c5_82, %c0_83, %c0_84] : memref<9x128x128xbf16, #tpu.memory_space<vmem>>, vector<1x128x128xbf16>
    %149 = vector.shape_cast %148 : vector<1x128x128xbf16> to vector<128x128xbf16>
    %cst_85 = arith.constant dense<0.000000e+00> : vector<16x128xf32>
    %150 = tpu.matmul %147, %149, %cst_85 {dimension_numbers = #tpu.dot_dimension_numbers<[1], [0], [0], [1], [0, 0, 1, 1], [], []>} : vector<16x128xbf16>, vector<128x128xbf16>, vector<16x128xf32> -> vector<16x128xf32>
    %151 = arith.addf %145, %150 : vector<16x128xf32>
    %152 = vector.extract_strided_slice %98 {offsets = [79, 0], sizes = [16, 128], strides = [1, 1]} : vector<96x128xf32> to vector<16x128xf32>
    %cst_86 = arith.constant 0.000000e+00 : f32
    %153 = vector.broadcast %cst_86 : f32 to vector<16x128xf32>
    %154 = arith.select %105, %152, %153 : vector<16x128xi1>, vector<16x128xf32>
    %155 = arith.truncf %154 : vector<16x128xf32> to vector<16x128xbf16>
    %c6_87 = arith.constant 6 : index
    %c0_88 = arith.constant 0 : index
    %c0_89 = arith.constant 0 : index
    %156 = vector.load %arg7[%c6_87, %c0_88, %c0_89] : memref<9x128x128xbf16, #tpu.memory_space<vmem>>, vector<1x128x128xbf16>
    %157 = vector.shape_cast %156 : vector<1x128x128xbf16> to vector<128x128xbf16>
    %cst_90 = arith.constant dense<0.000000e+00> : vector<16x128xf32>
    %158 = tpu.matmul %155, %157, %cst_90 {dimension_numbers = #tpu.dot_dimension_numbers<[1], [0], [0], [1], [0, 0, 1, 1], [], []>} : vector<16x128xbf16>, vector<128x128xbf16>, vector<16x128xf32> -> vector<16x128xf32>
    %159 = arith.addf %151, %158 : vector<16x128xf32>
    %160 = vector.extract_strided_slice %98 {offsets = [56, 0], sizes = [16, 128], strides = [1, 1]} : vector<96x128xf32> to vector<16x128xf32>
    %161 = arith.truncf %160 : vector<16x128xf32> to vector<16x128xbf16>
    %c7_91 = arith.constant 7 : index
    %c0_92 = arith.constant 0 : index
    %c0_93 = arith.constant 0 : index
    %162 = vector.load %arg7[%c7_91, %c0_92, %c0_93] : memref<9x128x128xbf16, #tpu.memory_space<vmem>>, vector<1x128x128xbf16>
    %163 = vector.shape_cast %162 : vector<1x128x128xbf16> to vector<128x128xbf16>
    %cst_94 = arith.constant dense<0.000000e+00> : vector<16x128xf32>
    %164 = tpu.matmul %161, %163, %cst_94 {dimension_numbers = #tpu.dot_dimension_numbers<[1], [0], [0], [1], [0, 0, 1, 1], [], []>} : vector<16x128xbf16>, vector<128x128xbf16>, vector<16x128xf32> -> vector<16x128xf32>
    %165 = arith.addf %159, %164 : vector<16x128xf32>
    %166 = vector.extract_strided_slice %98 {offsets = [80, 0], sizes = [16, 128], strides = [1, 1]} : vector<96x128xf32> to vector<16x128xf32>
    %167 = arith.truncf %166 : vector<16x128xf32> to vector<16x128xbf16>
    %c8_95 = arith.constant 8 : index
    %c0_96 = arith.constant 0 : index
    %c0_97 = arith.constant 0 : index
    %168 = vector.load %arg7[%c8_95, %c0_96, %c0_97] : memref<9x128x128xbf16, #tpu.memory_space<vmem>>, vector<1x128x128xbf16>
    %169 = vector.shape_cast %168 : vector<1x128x128xbf16> to vector<128x128xbf16>
    %cst_98 = arith.constant dense<0.000000e+00> : vector<16x128xf32>
    %170 = tpu.matmul %167, %169, %cst_98 {dimension_numbers = #tpu.dot_dimension_numbers<[1], [0], [0], [1], [0, 0, 1, 1], [], []>} : vector<16x128xbf16>, vector<128x128xbf16>, vector<16x128xf32> -> vector<16x128xf32>
    %171 = arith.addf %165, %170 : vector<16x128xf32>
    %172 = vector.broadcast %5 : vector<1x128xf32> to vector<16x128xf32>
    %173 = arith.mulf %171, %172 : vector<16x128xf32>
    %174 = vector.broadcast %6 : vector<1x128xf32> to vector<16x128xf32>
    %175 = arith.addf %173, %174 : vector<16x128xf32>
    %cst_99 = arith.constant 0.000000e+00 : f32
    %176 = vector.broadcast %cst_99 : f32 to vector<16x128xf32>
    %177 = arith.maximumf %175, %176 : vector<16x128xf32>
    %cst_100 = arith.constant dense<0.000000e+00> : vector<1x128xf32>
    %178 = tpu.matmul %8, %177, %cst_100 {dimension_numbers = #tpu.dot_dimension_numbers<[1], [0], [0], [1], [0, 0, 1, 1], [], []>} : vector<1x16xf32>, vector<16x128xf32>, vector<1x128xf32> -> vector<1x128xf32>
    %c0_101 = arith.constant 0 : index
    %c0_102 = arith.constant 0 : index
    %179 = vector.load %arg12[%c0_101, %c0_102] : memref<1x128xf32, #tpu.memory_space<vmem>>, vector<1x128xf32>
    tpu.vector_store %arg12[%c0_101, %c0_102], %178 {strides = array<i32>} : memref<1x128xf32, #tpu.memory_space<vmem>>, vector<1x128xf32>,
    %c0_103 = arith.constant 0 : index
    %c0_104 = arith.constant 0 : index
    %180 = vector.load %arg12[%c0_103, %c0_104] : memref<1x128xf32, #tpu.memory_space<vmem>>, vector<1x128xf32>
    %c0_105 = arith.constant 0 : index
    %c0_106 = arith.constant 0 : index
    %181 = vector.load %arg9[%c0_105, %c0_106] : memref<128x128xf32, #tpu.memory_space<vmem>>, vector<128x128xf32>
    %cst_107 = arith.constant dense<0.000000e+00> : vector<1x128xf32>
    %182 = tpu.matmul %180, %181, %cst_107 {dimension_numbers = #tpu.dot_dimension_numbers<[1], [0], [0], [1], [0, 0, 1, 1], [], []>} : vector<1x128xf32>, vector<128x128xf32>, vector<1x128xf32> -> vector<1x128xf32>
    %c0_108 = arith.constant 0 : index
    %c0_109 = arith.constant 0 : index
    %183 = vector.load %arg10[%c0_108, %c0_109] : memref<2x128xf32, #tpu.memory_space<vmem>>, vector<1x128xf32>
    %184 = arith.addf %182, %183 : vector<1x128xf32>
    %cst_110 = arith.constant 0.000000e+00 : f32
    %185 = vector.broadcast %cst_110 : f32 to vector<1x128xf32>
    %186 = arith.maximumf %184, %185 : vector<1x128xf32>
    %cst_111 = arith.constant dense<0xFF800000> : vector<1xf32>
    %187 = vector.multi_reduction <maximumf>, %186, %cst_111 [1] : vector<1x128xf32> to vector<1xf32>
    %188 = vector.shape_cast %187 : vector<1xf32> to vector<1x1xf32>
    %189 = vector.broadcast %188 : vector<1x1xf32> to vector<1x128xf32>
    %190 = arith.subf %186, %189 : vector<1x128xf32>
    %191 = math.exp %190 : vector<1x128xf32>
    %c1_112 = arith.constant 1 : index
    %c0_113 = arith.constant 0 : index
    %192 = vector.load %arg10[%c1_112, %c0_113] : memref<2x128xf32, #tpu.memory_space<vmem>>, vector<1x128xf32>
    %193 = arith.mulf %191, %192 : vector<1x128xf32>
    %cst_114 = arith.constant dense<0.000000e+00> : vector<1xf32>
    %194 = vector.multi_reduction <add>, %193, %cst_114 [1] : vector<1x128xf32> to vector<1xf32>
    %195 = vector.shape_cast %194 : vector<1xf32> to vector<1x1xf32>
    %196 = vector.broadcast %195 : vector<1x1xf32> to vector<1x128xf32>
    %197 = arith.divf %193, %196 : vector<1x128xf32>
    %c0_115 = arith.constant 0 : index
    %c0_116 = arith.constant 0 : index
    %c0_117 = arith.constant 0 : index
    %198 = vector.load %arg11[%c0_115, %c0_116, %c0_117] : memref<1x1x128xf32, #tpu.memory_space<vmem>>, vector<1x1x128xf32>
    %199 = vector.shape_cast %198 : vector<1x1x128xf32> to vector<1x128xf32>
    %200 = vector.shape_cast %197 : vector<1x128xf32> to vector<1x1x128xf32>
    tpu.vector_store %arg11[%c0_115, %c0_116, %c0_117], %200 {strides = array<i32>} : memref<1x1x128xf32, #tpu.memory_space<vmem>>, vector<1x1x128xf32>,
    return
  }
  func.func @transform_0(%arg0: i32) -> (i32, i32, i32) {
    %c0_i32 = arith.constant 0 : i32
    %c0_i32_0 = arith.constant 0 : i32
    %c0_i32_1 = arith.constant 0 : i32
    return %arg0, %c0_i32, %c0_i32_0 : i32, i32, i32
  }
  func.func @transform_1(%arg0: i32) -> (i32, i32) {
    %c0_i32 = arith.constant 0 : i32
    %c0_i32_0 = arith.constant 0 : i32
    %c0_i32_1 = arith.constant 0 : i32
    return %c0_i32, %c0_i32_0 : i32, i32
  }
  func.func @transform_2(%arg0: i32) -> (i32, i32) {
    %c0_i32 = arith.constant 0 : i32
    %c0_i32_0 = arith.constant 0 : i32
    %c0_i32_1 = arith.constant 0 : i32
    return %c0_i32, %c0_i32_0 : i32, i32
  }
  func.func @transform_3(%arg0: i32) -> (i32, i32, i32) {
    %c0_i32 = arith.constant 0 : i32
    %c0_i32_0 = arith.constant 0 : i32
    %c0_i32_1 = arith.constant 0 : i32
    %c0_i32_2 = arith.constant 0 : i32
    return %c0_i32, %c0_i32_0, %c0_i32_1 : i32, i32, i32
  }
  func.func @transform_4(%arg0: i32) -> (i32, i32) {
    %c0_i32 = arith.constant 0 : i32
    %c0_i32_0 = arith.constant 0 : i32
    %c0_i32_1 = arith.constant 0 : i32
    return %c0_i32, %c0_i32_0 : i32, i32
  }
  func.func @transform_5(%arg0: i32) -> (i32, i32) {
    %c0_i32 = arith.constant 0 : i32
    %c0_i32_0 = arith.constant 0 : i32
    %c0_i32_1 = arith.constant 0 : i32
    return %c0_i32, %c0_i32_0 : i32, i32
  }
  func.func @transform_6(%arg0: i32) -> (i32, i32, i32) {
    %c0_i32 = arith.constant 0 : i32
    %c0_i32_0 = arith.constant 0 : i32
    %c0_i32_1 = arith.constant 0 : i32
    %c0_i32_2 = arith.constant 0 : i32
    return %c0_i32, %c0_i32_0, %c0_i32_1 : i32, i32, i32
  }
  func.func @transform_7(%arg0: i32) -> (i32, i32) {
    %c0_i32 = arith.constant 0 : i32
    %c0_i32_0 = arith.constant 0 : i32
    %c0_i32_1 = arith.constant 0 : i32
    return %c0_i32, %c0_i32_0 : i32, i32
  }
  func.func @transform_8(%arg0: i32) -> (i32, i32) {
    %c0_i32 = arith.constant 0 : i32
    %c0_i32_0 = arith.constant 0 : i32
    %c0_i32_1 = arith.constant 0 : i32
    return %c0_i32, %c0_i32_0 : i32, i32
  }
  func.func @transform_9(%arg0: i32) -> (i32, i32) {
    %c0_i32 = arith.constant 0 : i32
    %c0_i32_0 = arith.constant 0 : i32
    %c0_i32_1 = arith.constant 0 : i32
    return %c0_i32, %c0_i32_0 : i32, i32
  }
  func.func @transform_10(%arg0: i32) -> (i32, i32, i32) {
    %c0_i32 = arith.constant 0 : i32
    %c0_i32_0 = arith.constant 0 : i32
    %c0_i32_1 = arith.constant 0 : i32
    return %arg0, %c0_i32, %c0_i32_0 : i32, i32, i32
  }
}

</mosaic_0001>

<llo_original>
// kernel: model_forward.1
$region0: #{model_forward.1}
  #allocation0 [shape = 'u32[]', space=smem, size = 0x4, offset = 0x4, fixed_abs, tag = 'smem constant byte address 0x4 - core index']
  #allocation1 [shape = 'u32[144,128]{1,0:T(1,128)}', space=vmem, size = 0x12000, scoped, tag = 'internal scratch']
  #allocation2 [shape = 'f32[1,128]{1,0:T(1,128)}', space=vmem, size = 0x200, scoped, tag = 'scratch operand']
  %s0 = inlined_call_operand.vmem [shape: bf16[2,320,32], index: 0, kind: input, shape index: {}]
  %s1 = inlined_call_operand.vmem [shape: bf16[32,128], index: 1, kind: input, shape index: {}]
  %s2 = inlined_call_operand.vmem [shape: f32[2,128], index: 2, kind: input, shape index: {}]
  %s3 = inlined_call_operand.vmem [shape: bf16[9,128,128], index: 3, kind: input, shape index: {}]
  %s4 = inlined_call_operand.vmem [shape: f32[2,128], index: 4, kind: input, shape index: {}]
  %s5 = inlined_call_operand.vmem [shape: bf16[96,64], index: 5, kind: input, shape index: {}]
  %s6 = inlined_call_operand.vmem [shape: bf16[9,128,128], index: 6, kind: input, shape index: {}]
  %s7 = inlined_call_operand.vmem [shape: f32[2,128], index: 7, kind: input, shape index: {}]
  %s8 = inlined_call_operand.vmem [shape: f32[128,128], index: 8, kind: input, shape index: {}]
  %s9 = inlined_call_operand.vmem [shape: f32[2,128], index: 9, kind: input, shape index: {}]
  %s10 = inlined_call_operand.hbm [shape: f32[2,1,128], index: 10, kind: output, shape index: {}]
  %s11 = sld [smem:[#allocation0]]
  $region73: #{model_forward.1} parent=0
    _
  %s13 = ssub.s32 1, %s11
  %s14 = scalar_select 0, %s13, %s11
  $region1: #{model_forward.1} parent=0
    #allocation3 [shape = 'u8[1024]{0}', space=vmem, size = 0x400, scoped, tag = 'output window, operand 0']
    #allocation4 [shape = 's32[2]{0}', space=sflag, size = 0x8, scoped, tag = 'scoped memory for model_forward.1']
    %15 = vsyncpa [#allocation4], 0
    %s16 = scalar_lea.sflag [#allocation4], 1
    %17 = vsyncpa %s16, 0
    loop: start=0, step=1, limit=4
    $region2: #{model_forward.1} parent=1 // loop_pre_header
      _
    $region3: #{model_forward.1} parent=1 // loop_header
      %s19 = sphi 0, %s23
      %p20 = scmp.ge.s32.totalorder %s19, 4
      %s29 = sphi 0, %s31
      %s32 = sphi 0, %s29
      %s33 = sphi 0, %s32
      %s49 = sphi 0, %s33
      %s53 = sphi 0, %s53
      %s55 = sphi 0, %s53
      %s56 = sphi 0, %s55
      %s70 = sphi 0, %s56
      %s74 = sphi 0, %s74
      %s76 = sphi 0, %s74
      %s77 = sphi 0, %s76
      %s91 = sphi 0, %s77
      %s95 = sphi 0, %s95
      %s97 = sphi 0, %s95
      %s98 = sphi 0, %s97
      %s112 = sphi 0, %s98
      %s116 = sphi 0, %s116
      %s118 = sphi 0, %s116
      %s119 = sphi 0, %s118
      %s133 = sphi 0, %s119
      %s137 = sphi 0, %s137
      %s139 = sphi 0, %s137
      %s140 = sphi 0, %s139
      %s154 = sphi 0, %s140
      %s158 = sphi 0, %s158
      %s160 = sphi 0, %s158
      %s161 = sphi 0, %s160
      %s175 = sphi 0, %s161
      %s179 = sphi 0, %s179
      %s181 = sphi 0, %s179
      %s182 = sphi 0, %s181
      %s196 = sphi 0, %s182
      %s200 = sphi 0, %s200
      %s202 = sphi 0, %s200
      %s203 = sphi 0, %s202
      %s217 = sphi 0, %s203
      %s221 = sphi 0, %s221
      %s223 = sphi 0, %s221
      %s224 = sphi 0, %s223
      %s238 = sphi 0, %s224
      %s244 = sphi 0, %s246
      %s247 = sphi 0, %s244
      %s248 = sphi 0, %s247
      %s264 = sphi 0, %s248
    $region4: #{model_forward.1} parent=1 // loop_header_branch
      %22 = sbr.rel (%p20) target = $region8
    $region5: #{model_forward.1} parent=1 // loop_body
      %s24 = ssub.s32 %s19, 1
      %s25 = ssub.s32 %s19, 2
      %s26 = sadd.s32 %s19, 1
      %s27 = ssub.s32 %s19, %s26
      %p28 = scmp.eq.s32.totalorder %s27, 0
      %s30 = sadd.s32 %s29, 1
      %s31 = scalar_select %p28, %s29, %s30
      %p34 = pneg %p28
      %p35 = scmp.eq.s32.totalorder %s19, 1
      %p36 = por %p34, %p35
      %p37 = scmp.ne.s32.totalorder %s29, %s32
      %p38 = scmp.eq.s32.totalorder %s19, 0
      %p39 = por %p37, %p38
      %p40 = scmp.ne.s32.totalorder %s29, %s32
      %p41 = scmp.eq.s32.totalorder %s24, 1
      %p42 = por %p40, %p41
      %p43 = scmp.ne.s32.totalorder %s32, %s33
      %p44 = scmp.eq.s32.totalorder %s24, 0
      %p45 = por %p43, %p44
      %p46 = scmp.ne.s32.totalorder %s32, %s33
      %p47 = scmp.eq.s32.totalorder %s25, 1
      %p48 = por %p46, %p47
      %p50 = scmp.ne.s32.totalorder %s33, %s49
      %p51 = scmp.eq.s32.totalorder %s25, 0
      %p52 = por %p50, %p51
      %s54 = sadd.s32 %s53, 1
      %p57 = scmp.eq.s32.totalorder %s19, 1
      %p58 = scmp.ne.s32.totalorder %s53, %s55
      %p59 = scmp.eq.s32.totalorder %s19, 0
      %p60 = por %p58, %p59
      %p61 = scmp.ne.s32.totalorder %s53, %s55
      %p62 = scmp.eq.s32.totalorder %s24, 1
      %p63 = por %p61, %p62
      %p64 = scmp.ne.s32.totalorder %s55, %s56
      %p65 = scmp.eq.s32.totalorder %s24, 0
      %p66 = por %p64, %p65
      %p67 = scmp.ne.s32.totalorder %s55, %s56
      %p68 = scmp.eq.s32.totalorder %s25, 1
      %p69 = por %p67, %p68
      %p71 = scmp.ne.s32.totalorder %s56, %s70
      %p72 = scmp.eq.s32.totalorder %s25, 0
      %p73 = por %p71, %p72
      %s75 = sadd.s32 %s74, 1
      %p78 = scmp.eq.s32.totalorder %s19, 1
      %p79 = scmp.ne.s32.totalorder %s74, %s76
      %p80 = scmp.eq.s32.totalorder %s19, 0
      %p81 = por %p79, %p80
      %p82 = scmp.ne.s32.totalorder %s74, %s76
      %p83 = scmp.eq.s32.totalorder %s24, 1
      %p84 = por %p82, %p83
      %p85 = scmp.ne.s32.totalorder %s76, %s77
      %p86 = scmp.eq.s32.totalorder %s24, 0
      %p87 = por %p85, %p86
      %p88 = scmp.ne.s32.totalorder %s76, %s77
      %p89 = scmp.eq.s32.totalorder %s25, 1
      %p90 = por %p88, %p89
      %p92 = scmp.ne.s32.totalorder %s77, %s91
      %p93 = scmp.eq.s32.totalorder %s25, 0
      %p94 = por %p92, %p93
      %s96 = sadd.s32 %s95, 1
      %p99 = scmp.eq.s32.totalorder %s19, 1
      %p100 = scmp.ne.s32.totalorder %s95, %s97
      %p101 = scmp.eq.s32.totalorder %s19, 0
      %p102 = por %p100, %p101
      %p103 = scmp.ne.s32.totalorder %s95, %s97
      %p104 = scmp.eq.s32.totalorder %s24, 1
      %p105 = por %p103, %p104
      %p106 = scmp.ne.s32.totalorder %s97, %s98
      %p107 = scmp.eq.s32.totalorder %s24, 0
      %p108 = por %p106, %p107
      %p109 = scmp.ne.s32.totalorder %s97, %s98
      %p110 = scmp.eq.s32.totalorder %s25, 1
      %p111 = por %p109, %p110
      %p113 = scmp.ne.s32.totalorder %s98, %s112
      %p114 = scmp.eq.s32.totalorder %s25, 0
      %p115 = por %p113, %p114
      %s117 = sadd.s32 %s116, 1
      %p120 = scmp.eq.s32.totalorder %s19, 1
      %p121 = scmp.ne.s32.totalorder %s116, %s118
      %p122 = scmp.eq.s32.totalorder %s19, 0
      %p123 = por %p121, %p122
      %p124 = scmp.ne.s32.totalorder %s116, %s118
      %p125 = scmp.eq.s32.totalorder %s24, 1
      %p126 = por %p124, %p125
      %p127 = scmp.ne.s32.totalorder %s118, %s119
      %p128 = scmp.eq.s32.totalorder %s24, 0
      %p129 = por %p127, %p128
      %p130 = scmp.ne.s32.totalorder %s118, %s119
      %p131 = scmp.eq.s32.totalorder %s25, 1
      %p132 = por %p130, %p131
      %p134 = scmp.ne.s32.totalorder %s119, %s133
      %p135 = scmp.eq.s32.totalorder %s25, 0
      %p136 = por %p134, %p135
      %s138 = sadd.s32 %s137, 1
      %p141 = scmp.eq.s32.totalorder %s19, 1
      %p142 = scmp.ne.s32.totalorder %s137, %s139
      %p143 = scmp.eq.s32.totalorder %s19, 0
      %p144 = por %p142, %p143
      %p145 = scmp.ne.s32.totalorder %s137, %s139
      %p146 = scmp.eq.s32.totalorder %s24, 1
      %p147 = por %p145, %p146
      %p148 = scmp.ne.s32.totalorder %s139, %s140
      %p149 = scmp.eq.s32.totalorder %s24, 0
      %p150 = por %p148, %p149
      %p151 = scmp.ne.s32.totalorder %s139, %s140
      %p152 = scmp.eq.s32.totalorder %s25, 1
      %p153 = por %p151, %p152
      %p155 = scmp.ne.s32.totalorder %s140, %s154
      %p156 = scmp.eq.s32.totalorder %s25, 0
      %p157 = por %p155, %p156
      %s159 = sadd.s32 %s158, 1
      %p162 = scmp.eq.s32.totalorder %s19, 1
      %p163 = scmp.ne.s32.totalorder %s158, %s160
      %p164 = scmp.eq.s32.totalorder %s19, 0
      %p165 = por %p163, %p164
      %p166 = scmp.ne.s32.totalorder %s158, %s160
      %p167 = scmp.eq.s32.totalorder %s24, 1
      %p168 = por %p166, %p167
      %p169 = scmp.ne.s32.totalorder %s160, %s161
      %p170 = scmp.eq.s32.totalorder %s24, 0
      %p171 = por %p169, %p170
      %p172 = scmp.ne.s32.totalorder %s160, %s161
      %p173 = scmp.eq.s32.totalorder %s25, 1
      %p174 = por %p172, %p173
      %p176 = scmp.ne.s32.totalorder %s161, %s175
      %p177 = scmp.eq.s32.totalorder %s25, 0
      %p178 = por %p176, %p177
      %s180 = sadd.s32 %s179, 1
      %p183 = scmp.eq.s32.totalorder %s19, 1
      %p184 = scmp.ne.s32.totalorder %s179, %s181
      %p185 = scmp.eq.s32.totalorder %s19, 0
      %p186 = por %p184, %p185
      %p187 = scmp.ne.s32.totalorder %s179, %s181
      %p188 = scmp.eq.s32.totalorder %s24, 1
      %p189 = por %p187, %p188
      %p190 = scmp.ne.s32.totalorder %s181, %s182
      %p191 = scmp.eq.s32.totalorder %s24, 0
      %p192 = por %p190, %p191
      %p193 = scmp.ne.s32.totalorder %s181, %s182
      %p194 = scmp.eq.s32.totalorder %s25, 1
      %p195 = por %p193, %p194
      %p197 = scmp.ne.s32.totalorder %s182, %s196
      %p198 = scmp.eq.s32.totalorder %s25, 0
      %p199 = por %p197, %p198
      %s201 = sadd.s32 %s200, 1
      %p204 = scmp.eq.s32.totalorder %s19, 1
      %p205 = scmp.ne.s32.totalorder %s200, %s202
      %p206 = scmp.eq.s32.totalorder %s19, 0
      %p207 = por %p205, %p206
      %p208 = scmp.ne.s32.totalorder %s200, %s202
      %p209 = scmp.eq.s32.totalorder %s24, 1
      %p210 = por %p208, %p209
      %p211 = scmp.ne.s32.totalorder %s202, %s203
      %p212 = scmp.eq.s32.totalorder %s24, 0
      %p213 = por %p211, %p212
      %p214 = scmp.ne.s32.totalorder %s202, %s203
      %p215 = scmp.eq.s32.totalorder %s25, 1
      %p216 = por %p214, %p215
      %p218 = scmp.ne.s32.totalorder %s203, %s217
      %p219 = scmp.eq.s32.totalorder %s25, 0
      %p220 = por %p218, %p219
      %s222 = sadd.s32 %s221, 1
      %p225 = scmp.eq.s32.totalorder %s19, 1
      %p226 = scmp.ne.s32.totalorder %s221, %s223
      %p227 = scmp.eq.s32.totalorder %s19, 0
      %p228 = por %p226, %p227
      %p229 = scmp.ne.s32.totalorder %s221, %s223
      %p230 = scmp.eq.s32.totalorder %s24, 1
      %p231 = por %p229, %p230
      %p232 = scmp.ne.s32.totalorder %s223, %s224
      %p233 = scmp.eq.s32.totalorder %s24, 0
      %p234 = por %p232, %p233
      %p235 = scmp.ne.s32.totalorder %s223, %s224
      %p236 = scmp.eq.s32.totalorder %s25, 1
      %p237 = por %p235, %p236
      %p239 = scmp.ne.s32.totalorder %s224, %s238
      %p240 = scmp.eq.s32.totalorder %s25, 0
      %p241 = por %p239, %p240
      %s242 = ssub.s32 %s19, %s26
      %p243 = scmp.eq.s32.totalorder %s242, 0
      %s245 = sadd.s32 %s244, 1
      %s246 = scalar_select %p243, %s244, %s245
      %p249 = pneg %p243
      %p250 = scmp.eq.s32.totalorder %s19, 1
      %p251 = por %p249, %p250
      %p252 = scmp.ne.s32.totalorder %s244, %s247
      %p253 = scmp.eq.s32.totalorder %s19, 0
      %p254 = por %p252, %p253
      %p255 = scmp.ne.s32.totalorder %s244, %s247
      %p256 = scmp.eq.s32.totalorder %s24, 1
      %p257 = por %p255, %p256
      %p258 = scmp.ne.s32.totalorder %s247, %s248
      %p259 = scmp.eq.s32.totalorder %s24, 0
      %p260 = por %p258, %p259
      %p261 = scmp.ne.s32.totalorder %s247, %s248
      %p262 = scmp.eq.s32.totalorder %s25, 1
      %p263 = por %p261, %p262
      %p265 = scmp.ne.s32.totalorder %s248, %s264
      %p266 = scmp.eq.s32.totalorder %s25, 0
      %p267 = por %p265, %p266
      %p268 = scmp.le.s32.totalorder 1, %s19
      %p269 = scmp.lt.s32.totalorder %s19, 3
      %p270 = pnand %p268, %p269
      %p271 = pneg %p270
      // Predicated region
      $region9: #{model_forward.1} parent=5 // pred_check
        _
      $region10: #{model_forward.1} parent=5 // pred_check_branch
        %273 = sbr.rel (%p270) target = $region12
      $region11: #{model_forward.1} parent=5 // pred_region
        %s274 = ssub.s32 %s19, 1
        // Predicated region
        $region13: #{model_forward.1} parent=11 // pred_check
          %p275 = pneg %p66
        $region14: #{model_forward.1} parent=11 // pred_check_branch
          %277 = sbr.rel (%p275) target = $region16
        $region15: #{model_forward.1} parent=11 // pred_region
          _
        $region16: #{model_forward.1} parent=11 // pred_fallthru
          _
        // Predicated region
        $region17: #{model_forward.1} parent=11 // pred_check
          %p278 = pneg %p87
        $region18: #{model_forward.1} parent=11 // pred_check_branch
          %280 = sbr.rel (%p278) target = $region20
        $region19: #{model_forward.1} parent=11 // pred_region
          _
        $region20: #{model_forward.1} parent=11 // pred_fallthru
          _
        // Predicated region
        $region21: #{model_forward.1} parent=11 // pred_check
          %p281 = pneg %p108
        $region22: #{model_forward.1} parent=11 // pred_check_branch
          %283 = sbr.rel (%p281) target = $region24
        $region23: #{model_forward.1} parent=11 // pred_region
          _
        $region24: #{model_forward.1} parent=11 // pred_fallthru
          _
        // Predicated region
        $region25: #{model_forward.1} parent=11 // pred_check
          %p284 = pneg %p129
        $region26: #{model_forward.1} parent=11 // pred_check_branch
          %286 = sbr.rel (%p284) target = $region28
        $region27: #{model_forward.1} parent=11 // pred_region
          _
        $region28: #{model_forward.1} parent=11 // pred_fallthru
          _
        // Predicated region
        $region29: #{model_forward.1} parent=11 // pred_check
          %p287 = pneg %p150
        $region30: #{model_forward.1} parent=11 // pred_check_branch
          %289 = sbr.rel (%p287) target = $region32
        $region31: #{model_forward.1} parent=11 // pred_region
          _
        $region32: #{model_forward.1} parent=11 // pred_fallthru
          _
        // Predicated region
        $region33: #{model_forward.1} parent=11 // pred_check
          %p290 = pneg %p171
        $region34: #{model_forward.1} parent=11 // pred_check_branch
          %292 = sbr.rel (%p290) target = $region36
        $region35: #{model_forward.1} parent=11 // pred_region
          _
        $region36: #{model_forward.1} parent=11 // pred_fallthru
          _
        // Predicated region
        $region37: #{model_forward.1} parent=11 // pred_check
          %p293 = pneg %p192
        $region38: #{model_forward.1} parent=11 // pred_check_branch
          %295 = sbr.rel (%p293) target = $region40
        $region39: #{model_forward.1} parent=11 // pred_region
          _
        $region40: #{model_forward.1} parent=11 // pred_fallthru
          _
        // Predicated region
        $region41: #{model_forward.1} parent=11 // pred_check
          %p296 = pneg %p213
        $region42: #{model_forward.1} parent=11 // pred_check_branch
          %298 = sbr.rel (%p296) target = $region44
        $region43: #{model_forward.1} parent=11 // pred_region
          _
        $region44: #{model_forward.1} parent=11 // pred_fallthru
          _
        // Predicated region
        $region45: #{model_forward.1} parent=11 // pred_check
          %p299 = pneg %p234
        $region46: #{model_forward.1} parent=11 // pred_check_branch
          %301 = sbr.rel (%p299) target = $region48
        $region47: #{model_forward.1} parent=11 // pred_region
          _
        $region48: #{model_forward.1} parent=11 // pred_fallthru
          _
      $region12: #{model_forward.1} parent=5 // pred_fallthru
        _
      %p302 = scmp.lt.s32.totalorder %s19, 2
      // Predicated region
      $region49: #{model_forward.1} parent=5 // pred_check
        %p303 = pneg %p302
      $region50: #{model_forward.1} parent=5 // pred_check_branch
        %305 = sbr.rel (%p303) target = $region52
      $region51: #{model_forward.1} parent=5 // pred_region
        // Predicated region
        $region53: #{model_forward.1} parent=51 // pred_check
          %p306 = pneg %p39
        $region54: #{model_forward.1} parent=51 // pred_check_branch
          %308 = sbr.rel (%p306) target = $region56
        $region55: #{model_forward.1} parent=51 // pred_region
          %p309 = scmp.lt.s32.totalorder %s19, 1
          %s310 = scalar_select %p309, %s19, 1
          %s311 = smul.addr %s310, 40
          %s312 = smul.addr %s311, 4
          %s313 = scalar_lea.vmem %s0, %s312
        $region56: #{model_forward.1} parent=51 // pred_fallthru
          _
      $region52: #{model_forward.1} parent=5 // pred_fallthru
        _
      %p314 = scmp.le.s32.totalorder 1, %s19
      %p315 = scmp.lt.s32.totalorder %s19, 3
      %p316 = pnand %p314, %p315
      %p317 = pneg %p316
      // Predicated region
      $region57: #{model_forward.1} parent=5 // pred_check
        _
      $region58: #{model_forward.1} parent=5 // pred_check_branch
        %319 = sbr.rel (%p316) target = $region60
      $region59: #{model_forward.1} parent=5 // pred_region
        %s320 = ssub.s32 %s19, 1
        %p321 = scmp.lt.s32.totalorder %s24, 1
        %s322 = scalar_select %p321, %s24, 1
        %s323 = smul.addr %s322, 40
        %s324 = smul.addr %s323, 4
        %s325 = scalar_lea.vmem %s0, %s324
        %p326 = pneg %p45
        %p327 = pneg %p42
        %p328 = pneg %p66
        %p329 = pneg %p63
        %p330 = pneg %p87
        %p331 = pneg %p84
        %p332 = pneg %p108
        %p333 = pneg %p105
        %p334 = pneg %p129
        %p335 = pneg %p126
        %p336 = pneg %p150
        %p337 = pneg %p147
        %p338 = pneg %p171
        %p339 = pneg %p168
        %p340 = pneg %p192
        %p341 = pneg %p189
        %p342 = pneg %p213
        %p343 = pneg %p210
        %p344 = pneg %p234
        %p345 = pneg %p231
        %p346 = pneg %p260
        %p347 = pneg %p257
        %s348 = sand.u32 %s247, 1
        %s349 = scalar_lea.sflag [#allocation4], %s348
        %s350 = sand.u32 %s247, 1
        %s351 = scalar_lea.vmem [#allocation3], %s350
        %p352 = scmp.lt.s32.totalorder %s24, 1
        %s353 = scalar_select %p352, %s24, 1
        %s354 = smul.addr %s353, 40
        %s355 = smul.addr %s354, 4
        %s356 = scalar_lea.vmem %s0, %s355
        %v358 = vld [vmem:[%s1] sm:$0xf]
        %v359 = vld [vmem:[%s1 + $0x4] sm:$0xf]
        %v360 = vld [vmem:[%s1 + $0x8] sm:$0xf]
        %v361 = vld [vmem:[%s1 + $0xc] sm:$0xf]
        %v362 = vld [vmem:[%s2] sm:$0x1]
        %v363 = vld [vmem:[%s2 + $0x1] sm:$0x1]
        %v364 = vld [vmem:[%s4] sm:$0x1]
        %v365 = vld [vmem:[%s4 + $0x1] sm:$0x1]
        %v366 = vld [vmem:[%s7] sm:$0x1]
        %v367 = vld [vmem:[%s7 + $0x1] sm:$0x1]
        %v368 = vld [vmem:[%s5] sm:$0xf]
        %v369 = vld [vmem:[%s5 + $0x4] sm:$0xf]
        %v370 = vld [vmem:[%s5 + $0x8] sm:$0xf]
        %v371 = vld [vmem:[%s5 + $0xc] sm:$0xf]
        %v372 = vld [vmem:[%s5 + $0x10] sm:$0xf]
        %v373 = vld [vmem:[%s5 + $0x14] sm:$0xf]
        %v374 = vld [vmem:[%s5 + $0x18] sm:$0xf]
        %v375 = vld [vmem:[%s5 + $0x1c] sm:$0xf]
        %v376 = vld [vmem:[%s5 + $0x20] sm:$0xf]
        %v377 = vld [vmem:[%s5 + $0x24] sm:$0xf]
        %v378 = vld [vmem:[%s5 + $0x28] sm:$0xf]
        %v379 = vld [vmem:[%s5 + $0x2c] sm:$0xf]
        %v380 = vld [vmem:[%s356] sm:$0xf]
        %v381 = vld [vmem:[%s356 + $0x4] sm:$0xf]
        %v382 = vld [vmem:[%s356 + $0x8] sm:$0xf]
        %v383 = vld [vmem:[%s356 + $0xc] sm:$0xf]
        %v384 = vld [vmem:[%s356 + $0x10] sm:$0xf]
        %v385 = vld [vmem:[%s356 + $0x14] sm:$0xf]
        %v386 = vld [vmem:[%s356 + $0x18] sm:$0xf]
        %v387 = vld [vmem:[%s356 + $0x1c] sm:$0xf]
        %v388 = vld [vmem:[%s356 + $0x20] sm:$0xf]
        %v389 = vld [vmem:[%s356 + $0x24] sm:$0xf]
        %v390 = vld [vmem:[%s356 + $0x28] sm:$0xf]
        %v391 = vld [vmem:[%s356 + $0x2c] sm:$0xf]
        %v392 = vld [vmem:[%s356 + $0x30] sm:$0xf]
        %v393 = vld [vmem:[%s356 + $0x34] sm:$0xf]
        %v394 = vld [vmem:[%s356 + $0x38] sm:$0xf]
        %v395 = vld [vmem:[%s356 + $0x3c] sm:$0xf]
        %v396 = vld [vmem:[%s356 + $0x40] sm:$0xf]
        %v397 = vld [vmem:[%s356 + $0x44] sm:$0xf]
        %v398 = vld [vmem:[%s356 + $0x48] sm:$0xf]
        %v399 = vld [vmem:[%s356 + $0x4c] sm:$0xf]
        %v400 = vld [vmem:[%s356 + $0x50] sm:$0xf]
        %v401 = vld [vmem:[%s356 + $0x54] sm:$0xf]
        %v402 = vld [vmem:[%s356 + $0x58] sm:$0xf]
        %v403 = vld [vmem:[%s356 + $0x5c] sm:$0xf]
        %v404 = vld [vmem:[%s356 + $0x60] sm:$0xf]
        %v405 = vld [vmem:[%s356 + $0x64] sm:$0xf]
        %v406 = vld [vmem:[%s356 + $0x68] sm:$0xf]
        %v407 = vld [vmem:[%s356 + $0x6c] sm:$0xf]
        %v408 = vld [vmem:[%s356 + $0x70] sm:$0xf]
        %v409 = vld [vmem:[%s356 + $0x74] sm:$0xf]
        %v410 = vld [vmem:[%s356 + $0x78] sm:$0xf]
        %v411 = vld [vmem:[%s356 + $0x7c] sm:$0xf]
        %v412 = vld [vmem:[%s356 + $0x80] sm:$0xf]
        %v413 = vld [vmem:[%s356 + $0x84] sm:$0xf]
        %v414 = vld [vmem:[%s356 + $0x88] sm:$0xf]
        %v415 = vld [vmem:[%s356 + $0x8c] sm:$0xf]
        %v416 = vld [vmem:[%s356 + $0x90] sm:$0xf]
        %v417 = vld [vmem:[%s356 + $0x94] sm:$0xf]
        %v418 = vld [vmem:[%s356 + $0x98] sm:$0xf]
        %v419 = vld [vmem:[%s356 + $0x9c] sm:$0xf]
        %v460 = vunpack.c.l.b16 %v380
        %v461 = vunpack.c.l.b16 %v381
        %v462 = vunpack.c.l.b16 %v382
        %v463 = vunpack.c.l.b16 %v383
        %v464 = vunpack.c.l.b16 %v384
        %v465 = vunpack.c.l.b16 %v385
        %v466 = vunpack.c.l.b16 %v386
        %v467 = vunpack.c.l.b16 %v387
        %v468 = vunpack.c.l.b16 %v388
        %v469 = vunpack.c.l.b16 %v389
        %v470 = vunpack.c.l.b16 %v390
        %v471 = vunpack.c.l.b16 %v391
        %v472 = vunpack.c.l.b16 %v392
        %v473 = vunpack.c.l.b16 %v393
        %v474 = vunpack.c.l.b16 %v394
        %v475 = vunpack.c.l.b16 %v395
        %v476 = vunpack.c.l.b16 %v396
        %v477 = vunpack.c.l.b16 %v397
        %v478 = vunpack.c.l.b16 %v398
        %v479 = vunpack.c.l.b16 %v399
        %v480 = vunpack.c.l.b16 %v400
        %v481 = vunpack.c.l.b16 %v401
        %v482 = vunpack.c.l.b16 %v402
        %v483 = vunpack.c.l.b16 %v403
        %v484 = vunpack.c.l.b16 %v404
        %v485 = vunpack.c.l.b16 %v405
        %v486 = vunpack.c.l.b16 %v406
        %v487 = vunpack.c.l.b16 %v407
        %v488 = vunpack.c.l.b16 %v408
        %v489 = vunpack.c.l.b16 %v409
        %v490 = vunpack.c.l.b16 %v410
        %v491 = vunpack.c.l.b16 %v411
        %v492 = vunpack.c.l.b16 %v412
        %v493 = vunpack.c.l.b16 %v413
        %v494 = vunpack.c.l.b16 %v414
        %v495 = vunpack.c.l.b16 %v415
        %v496 = vunpack.c.l.b16 %v416
        %v497 = vunpack.c.l.b16 %v417
        %v498 = vunpack.c.l.b16 %v418
        %v499 = vunpack.c.l.b16 %v419
        %v500 = vpack.c.b16 %v461, %v460
        %v501 = vpack.c.b16 %v463, %v462
        %v502 = vpack.c.b16 %v465, %v464
        %v503 = vpack.c.b16 %v467, %v466
        %v504 = vpack.c.b16 %v469, %v468
        %v505 = vpack.c.b16 %v471, %v470
        %v506 = vpack.c.b16 %v473, %v472
        %v507 = vpack.c.b16 %v475, %v474
        %v508 = vpack.c.b16 %v477, %v476
        %v509 = vpack.c.b16 %v479, %v478
        %v510 = vpack.c.b16 %v481, %v480
        %v511 = vpack.c.b16 %v483, %v482
        %v512 = vpack.c.b16 %v485, %v484
        %v513 = vpack.c.b16 %v487, %v486
        %v514 = vpack.c.b16 %v489, %v488
        %v515 = vpack.c.b16 %v491, %v490
        %v516 = vpack.c.b16 %v493, %v492
        %v517 = vpack.c.b16 %v495, %v494
        %v518 = vpack.c.b16 %v497, %v496
        %v519 = vpack.c.b16 %v499, %v498
        %v524 = vunpack.c.l.b16 %v358
        %v525 = vunpack.c.l.b16 %v359
        %v526 = vunpack.c.l.b16 %v360
        %v527 = vunpack.c.l.b16 %v361
        %v528 = vpack.c.b16 %v525, %v524
        %v529 = vpack.c.b16 %v527, %v526
        %vm532 = vcmask 261120
        %v534 = vsel %vm532, %v500, 0
        %v537 = vsel %vm532, %v501, 0
        %v540 = vsel %vm532, %v502, 0
        %v543 = vsel %vm532, %v503, 0
        %v546 = vsel %vm532, %v504, 0
        %v549 = vsel %vm532, %v505, 0
        %v552 = vsel %vm532, %v506, 0
        %v555 = vsel %vm532, %v507, 0
        %v558 = vsel %vm532, %v508, 0
        %v561 = vsel %vm532, %v509, 0
        %v564 = vsel %vm532, %v510, 0
        %v567 = vsel %vm532, %v511, 0
        %v570 = vsel %vm532, %v512, 0
        %v573 = vsel %vm532, %v513, 0
        %v576 = vsel %vm532, %v514, 0
        %v579 = vsel %vm532, %v515, 0
        %v582 = vsel %vm532, %v516, 0
        %v585 = vsel %vm532, %v517, 0
        %v588 = vsel %vm532, %v518, 0
        %v591 = vsel %vm532, %v519, 0
        %593 = vmatprep.subr.bf16.mxu0 0
        %594 = vmatpush1.bf16.msra.mxu0 0
        %595 = vmatprep.subr.bf16.mxu0 0
        %596 = vmatpush1.bf16.msra.mxu0 0
        %597 = vmatprep.subr.bf16.mxu0 0
        %598 = vmatpush1.bf16.msra.mxu0 0
        %599 = vmatprep.subr.bf16.mxu0 0
        %600 = vmatpush1.bf16.msra.mxu0 0
        %601 = vmatprep.subr.bf16.mxu0 0
        %602 = vmatpush1.bf16.msra.mxu0 0
        %603 = vmatprep.subr.bf16.mxu0 0
        %604 = vmatpush1.bf16.msra.mxu0 0
        %605 = vmatprep.subr.bf16.mxu0 0
        %606 = vmatpush1.bf16.msra.mxu0 %v529
        %607 = vmatprep.subr.bf16.mxu0 0
        %608 = vmatpush1.bf16.msra.mxu0 %v528
        %609 = vmatprep.subr.bf16.mxu0 0
        %610 = vmatpush2.bf16.msra.mxu0 0
        %611 = vmatprep.subr.bf16.mxu0 0
        %612 = vmatpush2.bf16.msra.mxu0 0
        %613 = vmatprep.subr.bf16.mxu0 0
        %614 = vmatpush2.bf16.msra.mxu0 0
        %615 = vmatprep.subr.bf16.mxu0 0
        %616 = vmatpush2.bf16.msra.mxu0 0
        %617 = vmatprep.subr.bf16.mxu0 0
        %618 = vmatpush2.bf16.msra.mxu0 0
        %619 = vmatprep.subr.bf16.mxu0 0
        %620 = vmatpush2.bf16.msra.mxu0 0
        %621 = vmatprep.subr.bf16.mxu0 0
        %622 = vmatpush2.bf16.msra.mxu0 0
        %623 = vmatprep.subr.bf16.mxu0 0
        %624 = vmatpush2.bf16.msra.mxu0 0
        %625 = vmatprep.mubr.bf16.mxu0 0
        %626 = vmatmul.mubr.bf16.gmra.mxu0 %v534
        %v627 = vpop.f32.mrf.mxu0
        %v628 = vpop.f32.mrf.mxu0
        %v629 = vpop.f32.mrf.mxu0
        %v630 = vpop.f32.mrf.mxu0
        %631 = vmatprep.mubr.bf16.mxu0 0
        %632 = vmatmul.mubr.bf16.gmra.mxu0 %v537
        %v633 = vpop.f32.mrf.mxu0
        %v634 = vadd.f32 0.0, %v633
        %v635 = vpop.f32.mrf.mxu0
        %v636 = vpop.f32.mrf.mxu0
        %v637 = vadd.f32 0.0, %v636
        %v638 = vpop.f32.mrf.mxu0
        %639 = vmatprep.mubr.bf16.mxu0 0
        %640 = vmatmul.mubr.bf16.gmra.mxu0 %v540
        %v641 = vpop.f32.mrf.mxu0
        %v642 = vadd.f32 0.0, %v641
        %v643 = vpop.f32.mrf.mxu0
        %v644 = vpop.f32.mrf.mxu0
        %v645 = vadd.f32 0.0, %v644
        %v646 = vpop.f32.mrf.mxu0
        %647 = vmatprep.mubr.bf16.mxu0 0
        %648 = vmatmul.mubr.bf16.gmra.mxu0 %v543
        %v649 = vpop.f32.mrf.mxu0
        %v650 = vadd.f32 0.0, %v649
        %v651 = vpop.f32.mrf.mxu0
        %v652 = vpop.f32.mrf.mxu0
        %v653 = vadd.f32 0.0, %v652
        %v654 = vpop.f32.mrf.mxu0
        %655 = vmatprep.mubr.bf16.mxu0 0
        %656 = vmatmul.mubr.bf16.gmra.mxu0 %v546
        %v657 = vpop.f32.mrf.mxu0
        %v658 = vadd.f32 0.0, %v657
        %v659 = vpop.f32.mrf.mxu0
        %v660 = vpop.f32.mrf.mxu0
        %v661 = vadd.f32 0.0, %v660
        %v662 = vpop.f32.mrf.mxu0
        %663 = vmatprep.mubr.bf16.mxu0 0
        %664 = vmatmul.mubr.bf16.gmra.mxu0 %v549
        %v665 = vpop.f32.mrf.mxu0
        %v666 = vpop.f32.mrf.mxu0
        %v667 = vpop.f32.mrf.mxu0
        %v668 = vadd.f32 0.0, %v667
        %v669 = vpop.f32.mrf.mxu0
        %670 = vmatprep.mubr.bf16.mxu0 0
        %671 = vmatmul.mubr.bf16.gmra.mxu0 %v552
        %v672 = vpop.f32.mrf.mxu0
        %v673 = vadd.f32 0.0, %v672
        %v674 = vpop.f32.mrf.mxu0
        %v675 = vpop.f32.mrf.mxu0
        %v676 = vadd.f32 0.0, %v675
        %v677 = vpop.f32.mrf.mxu0
        %678 = vmatprep.mubr.bf16.mxu0 0
        %679 = vmatmul.mubr.bf16.gmra.mxu0 %v555
        %v680 = vpop.f32.mrf.mxu0
        %v681 = vadd.f32 0.0, %v680
        %v682 = vpop.f32.mrf.mxu0
        %v683 = vpop.f32.mrf.mxu0
        %v684 = vadd.f32 0.0, %v683
        %v685 = vpop.f32.mrf.mxu0
        %686 = vmatprep.mubr.bf16.mxu0 0
        %687 = vmatmul.mubr.bf16.gmra.mxu0 %v558
        %v688 = vpop.f32.mrf.mxu0
        %v689 = vadd.f32 0.0, %v688
        %v690 = vpop.f32.mrf.mxu0
        %v691 = vpop.f32.mrf.mxu0
        %v692 = vadd.f32 0.0, %v691
        %v693 = vpop.f32.mrf.mxu0
        %694 = vmatprep.mubr.bf16.mxu0 0
        %695 = vmatmul.mubr.bf16.gmra.mxu0 %v561
        %v696 = vpop.f32.mrf.mxu0
        %v697 = vadd.f32 0.0, %v696
        %v698 = vpop.f32.mrf.mxu0
        %v699 = vpop.f32.mrf.mxu0
        %v700 = vadd.f32 0.0, %v699
        %v701 = vpop.f32.mrf.mxu0
        %702 = vmatprep.mubr.bf16.mxu0 0
        %703 = vmatmul.mubr.bf16.gmra.mxu0 %v564
        %v704 = vpop.f32.mrf.mxu0
        %v705 = vpop.f32.mrf.mxu0
        %v706 = vpop.f32.mrf.mxu0
        %v707 = vadd.f32 0.0, %v706
        %v708 = vpop.f32.mrf.mxu0
        %709 = vmatprep.mubr.bf16.mxu0 0
        %710 = vmatmul.mubr.bf16.gmra.mxu0 %v567
        %v711 = vpop.f32.mrf.mxu0
        %v712 = vadd.f32 0.0, %v711
        %v713 = vpop.f32.mrf.mxu0
        %v714 = vpop.f32.mrf.mxu0
        %v715 = vadd.f32 0.0, %v714
        %v716 = vpop.f32.mrf.mxu0
        %717 = vmatprep.mubr.bf16.mxu0 0
        %718 = vmatmul.mubr.bf16.gmra.mxu0 %v570
        %v719 = vpop.f32.mrf.mxu0
        %v720 = vadd.f32 0.0, %v719
        %v721 = vpop.f32.mrf.mxu0
        %v722 = vpop.f32.mrf.mxu0
        %v723 = vadd.f32 0.0, %v722
        %v724 = vpop.f32.mrf.mxu0
        %725 = vmatprep.mubr.bf16.mxu0 0
        %726 = vmatmul.mubr.bf16.gmra.mxu0 %v573
        %v727 = vpop.f32.mrf.mxu0
        %v728 = vadd.f32 0.0, %v727
        %v729 = vpop.f32.mrf.mxu0
        %v730 = vpop.f32.mrf.mxu0
        %v731 = vadd.f32 0.0, %v730
        %v732 = vpop.f32.mrf.mxu0
        %733 = vmatprep.mubr.bf16.mxu0 0
        %734 = vmatmul.mubr.bf16.gmra.mxu0 %v576
        %v735 = vpop.f32.mrf.mxu0
        %v736 = vadd.f32 0.0, %v735
        %v737 = vpop.f32.mrf.mxu0
        %v738 = vpop.f32.mrf.mxu0
        %v739 = vadd.f32 0.0, %v738
        %v740 = vpop.f32.mrf.mxu0
        %741 = vmatprep.mubr.bf16.mxu0 0
        %742 = vmatmul.mubr.bf16.gmra.mxu0 %v579
        %v743 = vpop.f32.mrf.mxu0
        %v744 = vadd.f32 0.0, %v743
        %v745 = vpop.f32.mrf.mxu0
        %v746 = vpop.f32.mrf.mxu0
        %v747 = vadd.f32 0.0, %v746
        %v748 = vpop.f32.mrf.mxu0
        %749 = vmatprep.mubr.bf16.mxu0 0
        %750 = vmatmul.mubr.bf16.gmra.mxu0 %v582
        %v751 = vpop.f32.mrf.mxu0
        %v752 = vadd.f32 0.0, %v751
        %v753 = vpop.f32.mrf.mxu0
        %v754 = vpop.f32.mrf.mxu0
        %v755 = vadd.f32 0.0, %v754
        %v756 = vpop.f32.mrf.mxu0
        %757 = vmatprep.mubr.bf16.mxu0 0
        %758 = vmatmul.mubr.bf16.gmra.mxu0 %v585
        %v759 = vpop.f32.mrf.mxu0
        %v760 = vadd.f32 0.0, %v759
        %v761 = vpop.f32.mrf.mxu0
        %v762 = vpop.f32.mrf.mxu0
        %v763 = vadd.f32 0.0, %v762
        %v764 = vpop.f32.mrf.mxu0
        %765 = vmatprep.mubr.bf16.mxu0 0
        %766 = vmatmul.mubr.bf16.gmra.mxu0 %v588
        %v767 = vpop.f32.mrf.mxu0
        %v768 = vadd.f32 0.0, %v767
        %v769 = vpop.f32.mrf.mxu0
        %v770 = vpop.f32.mrf.mxu0
        %v771 = vadd.f32 0.0, %v770
        %v772 = vpop.f32.mrf.mxu0
        %773 = vmatprep.mubr.bf16.mxu0 0
        %774 = vmatmul.mubr.bf16.gmra.mxu0 %v591
        %v775 = vpop.f32.mrf.mxu0
        %v776 = vadd.f32 0.0, %v775
        %v777 = vpop.f32.mrf.mxu0
        %v778 = vpop.f32.mrf.mxu0
        %v779 = vadd.f32 0.0, %v778
        %v780 = vpop.f32.mrf.mxu0
        %781 = vdwg.mxu0
        %v782 = vlaneseq
        %v783 = vshrl.u32 %v782, 7
        %v784 = vsub.s32 0, %v783
        %v785 = vrot.slane %v362, %v784
        %v786 = vmul.f32 %v634, %v785
        %v787 = vmul.f32 %v637, %v785
        %v788 = vmul.f32 %v642, %v785
        %v789 = vmul.f32 %v645, %v785
        %v790 = vmul.f32 %v650, %v785
        %v791 = vmul.f32 %v653, %v785
        %v792 = vmul.f32 %v658, %v785
        %v793 = vmul.f32 %v661, %v785
        %v794 = vmul.f32 %v668, %v785
        %v795 = vmul.f32 %v673, %v785
        %v796 = vmul.f32 %v676, %v785
        %v797 = vmul.f32 %v681, %v785
        %v798 = vmul.f32 %v684, %v785
        %v799 = vmul.f32 %v689, %v785
        %v800 = vmul.f32 %v692, %v785
        %v801 = vmul.f32 %v697, %v785
        %v802 = vmul.f32 %v700, %v785
        %v803 = vmul.f32 %v707, %v785
        %v804 = vmul.f32 %v712, %v785
        %v805 = vmul.f32 %v715, %v785
        %v806 = vmul.f32 %v720, %v785
        %v807 = vmul.f32 %v723, %v785
        %v808 = vmul.f32 %v728, %v785
        %v809 = vmul.f32 %v731, %v785
        %v810 = vmul.f32 %v736, %v785
        %v811 = vmul.f32 %v739, %v785
        %v812 = vmul.f32 %v744, %v785
        %v813 = vmul.f32 %v747, %v785
        %v814 = vmul.f32 %v752, %v785
        %v815 = vmul.f32 %v755, %v785
        %v816 = vmul.f32 %v760, %v785
        %v817 = vmul.f32 %v763, %v785
        %v818 = vmul.f32 %v768, %v785
        %v819 = vmul.f32 %v771, %v785
        %v820 = vmul.f32 %v776, %v785
        %v821 = vmul.f32 %v779, %v785
        %v822 = vlaneseq
        %v823 = vshrl.u32 %v822, 7
        %v824 = vsub.s32 0, %v823
        %v825 = vrot.slane %v363, %v824
        %v826 = vadd.f32 %v786, %v825
        %v827 = vadd.f32 %v787, %v825
        %v828 = vadd.f32 %v788, %v825
        %v829 = vadd.f32 %v789, %v825
        %v830 = vadd.f32 %v790, %v825
        %v831 = vadd.f32 %v791, %v825
        %v832 = vadd.f32 %v792, %v825
        %v833 = vadd.f32 %v793, %v825
        %v834 = vadd.f32 %v794, %v825
        %v835 = vadd.f32 %v795, %v825
        %v836 = vadd.f32 %v796, %v825
        %v837 = vadd.f32 %v797, %v825
        %v838 = vadd.f32 %v798, %v825
        %v839 = vadd.f32 %v799, %v825
        %v840 = vadd.f32 %v800, %v825
        %v841 = vadd.f32 %v801, %v825
        %v842 = vadd.f32 %v802, %v825
        %v843 = vadd.f32 %v803, %v825
        %v844 = vadd.f32 %v804, %v825
        %v845 = vadd.f32 %v805, %v825
        %v846 = vadd.f32 %v806, %v825
        %v847 = vadd.f32 %v807, %v825
        %v848 = vadd.f32 %v808, %v825
        %v849 = vadd.f32 %v809, %v825
        %v850 = vadd.f32 %v810, %v825
        %v851 = vadd.f32 %v811, %v825
        %v852 = vadd.f32 %v812, %v825
        %v853 = vadd.f32 %v813, %v825
        %v854 = vadd.f32 %v814, %v825
        %v855 = vadd.f32 %v815, %v825
        %v856 = vadd.f32 %v816, %v825
        %v857 = vadd.f32 %v817, %v825
        %v858 = vadd.f32 %v818, %v825
        %v859 = vadd.f32 %v819, %v825
        %v860 = vadd.f32 %v820, %v825
        %v861 = vadd.f32 %v821, %v825
        %v862 = vmax.f32 %v826, 0.0
        %v863 = vmax.f32 %v827, 0.0
        %v864 = vmax.f32 %v828, 0.0
        %v865 = vmax.f32 %v829, 0.0
        %v866 = vmax.f32 %v830, 0.0
        %v867 = vmax.f32 %v831, 0.0
        %v868 = vmax.f32 %v832, 0.0
        %v869 = vmax.f32 %v833, 0.0
        %v870 = vmax.f32 %v834, 0.0
        %v871 = vmax.f32 %v835, 0.0
        %v872 = vmax.f32 %v836, 0.0
        %v873 = vmax.f32 %v837, 0.0
        %v874 = vmax.f32 %v838, 0.0
        %v875 = vmax.f32 %v839, 0.0
        %v876 = vmax.f32 %v840, 0.0
        %v877 = vmax.f32 %v841, 0.0
        %v878 = vmax.f32 %v842, 0.0
        %v879 = vmax.f32 %v843, 0.0
        %v880 = vmax.f32 %v844, 0.0
        %v881 = vmax.f32 %v845, 0.0
        %v882 = vmax.f32 %v846, 0.0
        %v883 = vmax.f32 %v847, 0.0
        %v884 = vmax.f32 %v848, 0.0
        %v885 = vmax.f32 %v849, 0.0
        %v886 = vmax.f32 %v850, 0.0
        %v887 = vmax.f32 %v851, 0.0
        %v888 = vmax.f32 %v852, 0.0
        %v889 = vmax.f32 %v853, 0.0
        %v890 = vmax.f32 %v854, 0.0
        %v891 = vmax.f32 %v855, 0.0
        %v892 = vmax.f32 %v856, 0.0
        %v893 = vmax.f32 %v857, 0.0
        %v894 = vmax.f32 %v858, 0.0
        %v895 = vmax.f32 %v859, 0.0
        %v896 = vmax.f32 %v860, 0.0
        %v897 = vmax.f32 %v861, 0.0
        %v898 = vlaneseq
        %v899 = vshrl.u32 %v898, 7
        %v900 = vadd.s32 %v899, 8
        %v901 = vadd.s32 %v899, 16
        %v902 = vadd.s32 %v899, 24
        %v903 = vadd.s32 %v899, 32
        %v904 = vadd.s32 %v899, 40
        %v905 = vadd.s32 %v899, 48
        %v906 = vadd.s32 %v899, 56
        %v907 = vand.u32 %v899, 7
        %v908 = vand.u32 %v900, 7
        %v909 = vand.u32 %v901, 7
        %v910 = vand.u32 %v902, 7
        %v911 = vand.u32 %v903, 7
        %v912 = vand.u32 %v904, 7
        %v913 = vand.u32 %v905, 7
        %v914 = vand.u32 %v906, 7
        %vm915 = vcmp.ge.s32.totalorder %v899, 8
        %vm916 = vcmp.ge.s32.totalorder %v900, 8
        %vm917 = vcmp.ge.s32.totalorder %v901, 8
        %vm918 = vcmp.ge.s32.totalorder %v902, 8
        %vm919 = vcmp.ge.s32.totalorder %v903, 8
        %vm920 = vcmp.ge.s32.totalorder %v904, 8
        %vm921 = vcmp.ge.s32.totalorder %v905, 8
        %vm922 = vcmp.ge.s32.totalorder %v906, 8
        %vm923 = vcmp.ge.s32.totalorder %v907, 1
        %vm924 = vcmp.ge.s32.totalorder %v908, 1
        %vm925 = vcmp.ge.s32.totalorder %v909, 1
        %vm926 = vcmp.ge.s32.totalorder %v910, 1
        %vm927 = vcmp.ge.s32.totalorder %v911, 1
        %vm928 = vcmp.ge.s32.totalorder %v912, 1
        %vm929 = vcmp.ge.s32.totalorder %v913, 1
        %vm930 = vcmp.ge.s32.totalorder %v914, 1
        %vm931 = vmand %vm915, %vm923
        %vm932 = vmand %vm916, %vm924
        %vm933 = vmand %vm917, %vm925
        %vm934 = vmand %vm918, %vm926
        %vm935 = vmand %vm919, %vm927
        %vm936 = vmand %vm920, %vm928
        %vm937 = vmand %vm921, %vm929
        %vm938 = vmand %vm922, %vm930
        %vm948 = vcmask 1040384
        %v949 = vrot.slane %v888, 7
        %v950 = vrot.slane %v889, 7
        %v951 = vsel %vm948, %v949, %v950
        %v952 = vrot.slane %v890, 7
        %v953 = vsel %vm948, %v950, %v952
        %v954 = vrot.slane %v891, 7
        %v955 = vsel %vm948, %v952, %v954
        %v956 = vrot.slane %v892, 7
        %v957 = vsel %vm948, %v954, %v956
        %v958 = vrot.slane %v893, 7
        %v959 = vsel %vm948, %v956, %v958
        %v960 = vrot.slane %v894, 7
        %v961 = vsel %vm948, %v958, %v960
        %v962 = vrot.slane %v895, 7
        %v963 = vsel %vm948, %v960, %v962
        %v964 = vrot.slane %v896, 7
        %v965 = vsel %vm948, %v962, %v964
        %v974 = vsel %vm931, %v951, 0.0
        %v975 = vsel %vm932, %v953, 0.0
        %v976 = vsel %vm933, %v955, 0.0
        %v977 = vsel %vm934, %v957, 0.0
        %v978 = vsel %vm935, %v959, 0.0
        %v979 = vsel %vm936, %v961, 0.0
        %v980 = vsel %vm937, %v963, 0.0
        %v981 = vsel %vm938, %v965, 0.0
        %v982 = vpack.c.bf16 %v975, %v974
        %v983 = vpack.c.bf16 %v977, %v976
        %v984 = vpack.c.bf16 %v979, %v978
        %v985 = vpack.c.bf16 %v981, %v980
        %v986 = vld [vmem:[%s3] sm:$0xf]
        %v987 = vld [vmem:[%s3 + $0x4] sm:$0xf]
        %v988 = vld [vmem:[%s3 + $0x8] sm:$0xf]
        %v989 = vld [vmem:[%s3 + $0xc] sm:$0xf]
        %v990 = vld [vmem:[%s3 + $0x10] sm:$0xf]
        %v991 = vld [vmem:[%s3 + $0x14] sm:$0xf]
        %v992 = vld [vmem:[%s3 + $0x18] sm:$0xf]
        %v993 = vld [vmem:[%s3 + $0x1c] sm:$0xf]
        %v994 = vld [vmem:[%s3 + $0x20] sm:$0xf]
        %v995 = vld [vmem:[%s3 + $0x24] sm:$0xf]
        %v996 = vld [vmem:[%s3 + $0x28] sm:$0xf]
        %v997 = vld [vmem:[%s3 + $0x2c] sm:$0xf]
        %v998 = vld [vmem:[%s3 + $0x30] sm:$0xf]
        %v999 = vld [vmem:[%s3 + $0x34] sm:$0xf]
        %v1000 = vld [vmem:[%s3 + $0x38] sm:$0xf]
        %v1001 = vld [vmem:[%s3 + $0x3c] sm:$0xf]
        %v1002 = vsel %vm915, %v879, 0.0
        %v1003 = vsel %vm916, %v880, 0.0
        %v1004 = vsel %vm917, %v881, 0.0
        %v1005 = vsel %vm918, %v882, 0.0
        %v1006 = vsel %vm919, %v883, 0.0
        %v1007 = vsel %vm920, %v884, 0.0
        %v1008 = vsel %vm921, %v885, 0.0
        %v1009 = vsel %vm922, %v886, 0.0
        %v1010 = vpack.c.bf16 %v1003, %v1002
        %v1011 = vpack.c.bf16 %v1005, %v1004
        %v1012 = vpack.c.bf16 %v1007, %v1006
        %v1013 = vpack.c.bf16 %v1009, %v1008
        %s1014 = scalar_lea.vmem %s3, 64
        %v1015 = vld [vmem:[%s1014] sm:$0xf]
        %v1016 = vld [vmem:[%s1014 + $0x4] sm:$0xf]
        %v1017 = vld [vmem:[%s1014 + $0x8] sm:$0xf]
        %v1018 = vld [vmem:[%s1014 + $0xc] sm:$0xf]
        %v1019 = vld [vmem:[%s1014 + $0x10] sm:$0xf]
        %v1020 = vld [vmem:[%s1014 + $0x14] sm:$0xf]
        %v1021 = vld [vmem:[%s1014 + $0x18] sm:$0xf]
        %v1022 = vld [vmem:[%s1014 + $0x1c] sm:$0xf]
        %v1023 = vld [vmem:[%s1014 + $0x20] sm:$0xf]
        %v1024 = vld [vmem:[%s1014 + $0x24] sm:$0xf]
        %v1025 = vld [vmem:[%s1014 + $0x28] sm:$0xf]
        %v1026 = vld [vmem:[%s1014 + $0x2c] sm:$0xf]
        %v1027 = vld [vmem:[%s1014 + $0x30] sm:$0xf]
        %v1028 = vld [vmem:[%s1014 + $0x34] sm:$0xf]
        %v1029 = vld [vmem:[%s1014 + $0x38] sm:$0xf]
        %v1030 = vld [vmem:[%s1014 + $0x3c] sm:$0xf]
        %v1047 = vunpack.c.l.b16 %v1015
        %v1048 = vunpack.c.l.b16 %v1016
        %v1049 = vunpack.c.l.b16 %v1017
        %v1050 = vunpack.c.l.b16 %v1018
        %v1051 = vunpack.c.l.b16 %v1019
        %v1052 = vunpack.c.l.b16 %v1020
        %v1053 = vunpack.c.l.b16 %v1021
        %v1054 = vunpack.c.l.b16 %v1022
        %v1055 = vunpack.c.l.b16 %v1023
        %v1056 = vunpack.c.l.b16 %v1024
        %v1057 = vunpack.c.l.b16 %v1025
        %v1058 = vunpack.c.l.b16 %v1026
        %v1059 = vunpack.c.l.b16 %v1027
        %v1060 = vunpack.c.l.b16 %v1028
        %v1061 = vunpack.c.l.b16 %v1029
        %v1062 = vunpack.c.l.b16 %v1030
        %v1063 = vpack.c.b16 %v1048, %v1047
        %v1064 = vpack.c.b16 %v1050, %v1049
        %v1065 = vpack.c.b16 %v1052, %v1051
        %v1066 = vpack.c.b16 %v1054, %v1053
        %v1067 = vpack.c.b16 %v1056, %v1055
        %v1068 = vpack.c.b16 %v1058, %v1057
        %v1069 = vpack.c.b16 %v1060, %v1059
        %v1070 = vpack.c.b16 %v1062, %v1061
        %1079 = vmatprep.subr.bf16.mxu0 0
        %1080 = vmatpush1.bf16.msra.mxu0 %v1070
        %1081 = vmatprep.subr.bf16.mxu0 0
        %1082 = vmatpush1.bf16.msra.mxu0 %v1069
        %1083 = vmatprep.subr.bf16.mxu0 0
        %1084 = vmatpush1.bf16.msra.mxu0 %v1068
        %1085 = vmatprep.subr.bf16.mxu0 0
        %1086 = vmatpush1.bf16.msra.mxu0 %v1067
        %1087 = vmatprep.subr.bf16.mxu0 0
        %1088 = vmatpush1.bf16.msra.mxu0 %v1066
        %1089 = vmatprep.subr.bf16.mxu0 0
        %1090 = vmatpush1.bf16.msra.mxu0 %v1065
        %1091 = vmatprep.subr.bf16.mxu0 0
        %1092 = vmatpush1.bf16.msra.mxu0 %v1064
        %1093 = vmatprep.subr.bf16.mxu0 0
        %1094 = vmatpush1.bf16.msra.mxu0 %v1063
        %1095 = vmatprep.subr.bf16.mxu0 0
        %1096 = vmatpush2.bf16.msra.mxu0 0
        %1097 = vmatprep.subr.bf16.mxu0 0
        %1098 = vmatpush2.bf16.msra.mxu0 0
        %1099 = vmatprep.subr.bf16.mxu0 0
        %1100 = vmatpush2.bf16.msra.mxu0 0
        %1101 = vmatprep.subr.bf16.mxu0 0
        %1102 = vmatpush2.bf16.msra.mxu0 0
        %1103 = vmatprep.subr.bf16.mxu0 0
        %1104 = vmatpush2.bf16.msra.mxu0 0
        %1105 = vmatprep.subr.bf16.mxu0 0
        %1106 = vmatpush2.bf16.msra.mxu0 0
        %1107 = vmatprep.subr.bf16.mxu0 0
        %1108 = vmatpush2.bf16.msra.mxu0 0
        %1109 = vmatprep.subr.bf16.mxu0 0
        %1110 = vmatpush2.bf16.msra.mxu0 0
        %1111 = vmatprep.mubr.bf16.mxu0 0
        %1112 = vmatmul.mubr.bf16.gmra.mxu0 %v1010
        %v1113 = vpop.f32.mrf.mxu0
        %v1114 = vadd.f32 0.0, %v1113
        %v1115 = vpop.f32.mrf.mxu0
        %v1116 = vpop.f32.mrf.mxu0
        %v1117 = vadd.f32 0.0, %v1116
        %v1118 = vpop.f32.mrf.mxu0
        %1119 = vmatprep.mubr.bf16.mxu0 0
        %1120 = vmatmul.mubr.bf16.gmra.mxu0 %v1011
        %v1121 = vpop.f32.mrf.mxu0
        %v1122 = vadd.f32 0.0, %v1121
        %v1123 = vpop.f32.mrf.mxu0
        %v1124 = vpop.f32.mrf.mxu0
        %v1125 = vadd.f32 0.0, %v1124
        %v1126 = vpop.f32.mrf.mxu0
        %1127 = vmatprep.mubr.bf16.mxu0 0
        %1128 = vmatmul.mubr.bf16.gmra.mxu0 %v1012
        %v1129 = vpop.f32.mrf.mxu0
        %v1130 = vadd.f32 0.0, %v1129
        %v1131 = vpop.f32.mrf.mxu0
        %v1132 = vpop.f32.mrf.mxu0
        %v1133 = vadd.f32 0.0, %v1132
        %v1134 = vpop.f32.mrf.mxu0
        %1135 = vmatprep.mubr.bf16.mxu0 0
        %1136 = vmatmul.mubr.bf16.gmra.mxu0 %v1013
        %v1137 = vpop.f32.mrf.mxu0
        %v1138 = vadd.f32 0.0, %v1137
        %v1139 = vpop.f32.mrf.mxu0
        %v1140 = vpop.f32.mrf.mxu0
        %v1141 = vadd.f32 0.0, %v1140
        %v1142 = vpop.f32.mrf.mxu0
        %1143 = vdwg.mxu0
        %v1160 = vunpack.c.l.b16 %v986
        %v1161 = vunpack.c.l.b16 %v987
        %v1162 = vunpack.c.l.b16 %v988
        %v1163 = vunpack.c.l.b16 %v989
        %v1164 = vunpack.c.l.b16 %v990
        %v1165 = vunpack.c.l.b16 %v991
        %v1166 = vunpack.c.l.b16 %v992
        %v1167 = vunpack.c.l.b16 %v993
        %v1168 = vunpack.c.l.b16 %v994
        %v1169 = vunpack.c.l.b16 %v995
        %v1170 = vunpack.c.l.b16 %v996
        %v1171 = vunpack.c.l.b16 %v997
        %v1172 = vunpack.c.l.b16 %v998
        %v1173 = vunpack.c.l.b16 %v999
        %v1174 = vunpack.c.l.b16 %v1000
        %v1175 = vunpack.c.l.b16 %v1001
        %v1176 = vpack.c.b16 %v1161, %v1160
        %v1177 = vpack.c.b16 %v1163, %v1162
        %v1178 = vpack.c.b16 %v1165, %v1164
        %v1179 = vpack.c.b16 %v1167, %v1166
        %v1180 = vpack.c.b16 %v1169, %v1168
        %v1181 = vpack.c.b16 %v1171, %v1170
        %v1182 = vpack.c.b16 %v1173, %v1172
        %v1183 = vpack.c.b16 %v1175, %v1174
        %1192 = vmatprep.subr.bf16.mxu0 0
        %1193 = vmatpush1.bf16.msra.mxu0 %v1183
        %1194 = vmatprep.subr.bf16.mxu0 0
        %1195 = vmatpush1.bf16.msra.mxu0 %v1182
        %1196 = vmatprep.subr.bf16.mxu0 0
        %1197 = vmatpush1.bf16.msra.mxu0 %v1181
        %1198 = vmatprep.subr.bf16.mxu0 0
        %1199 = vmatpush1.bf16.msra.mxu0 %v1180
        %1200 = vmatprep.subr.bf16.mxu0 0
        %1201 = vmatpush1.bf16.msra.mxu0 %v1179
        %1202 = vmatprep.subr.bf16.mxu0 0
        %1203 = vmatpush1.bf16.msra.mxu0 %v1178
        %1204 = vmatprep.subr.bf16.mxu0 0
        %1205 = vmatpush1.bf16.msra.mxu0 %v1177
        %1206 = vmatprep.subr.bf16.mxu0 0
        %1207 = vmatpush1.bf16.msra.mxu0 %v1176
        %1208 = vmatprep.subr.bf16.mxu0 0
        %1209 = vmatpush2.bf16.msra.mxu0 0
        %1210 = vmatprep.subr.bf16.mxu0 0
        %1211 = vmatpush2.bf16.msra.mxu0 0
        %1212 = vmatprep.subr.bf16.mxu0 0
        %1213 = vmatpush2.bf16.msra.mxu0 0
        %1214 = vmatprep.subr.bf16.mxu0 0
        %1215 = vmatpush2.bf16.msra.mxu0 0
        %1216 = vmatprep.subr.bf16.mxu0 0
        %1217 = vmatpush2.bf16.msra.mxu0 0
        %1218 = vmatprep.subr.bf16.mxu0 0
        %1219 = vmatpush2.bf16.msra.mxu0 0
        %1220 = vmatprep.subr.bf16.mxu0 0
        %1221 = vmatpush2.bf16.msra.mxu0 0
        %1222 = vmatprep.subr.bf16.mxu0 0
        %1223 = vmatpush2.bf16.msra.mxu0 0
        %1224 = vmatprep.mubr.bf16.mxu0 0
        %1225 = vmatmul.mubr.bf16.gmra.mxu0 %v982
        %v1226 = vpop.f32.mrf.mxu0
        %v1227 = vadd.f32 %v1114, %v1226
        %v1228 = vpop.f32.mrf.mxu0
        %v1229 = vpop.f32.mrf.mxu0
        %v1230 = vadd.f32 %v1117, %v1229
        %v1231 = vpop.f32.mrf.mxu0
        %1232 = vmatprep.mubr.bf16.mxu0 0
        %1233 = vmatmul.mubr.bf16.gmra.mxu0 %v983
        %v1234 = vpop.f32.mrf.mxu0
        %v1235 = vadd.f32 %v1122, %v1234
        %v1236 = vpop.f32.mrf.mxu0
        %v1237 = vpop.f32.mrf.mxu0
        %v1238 = vadd.f32 %v1125, %v1237
        %v1239 = vpop.f32.mrf.mxu0
        %1240 = vmatprep.mubr.bf16.mxu0 0
        %1241 = vmatmul.mubr.bf16.gmra.mxu0 %v984
        %v1242 = vpop.f32.mrf.mxu0
        %v1243 = vadd.f32 %v1130, %v1242
        %v1244 = vpop.f32.mrf.mxu0
        %v1245 = vpop.f32.mrf.mxu0
        %v1246 = vadd.f32 %v1133, %v1245
        %v1247 = vpop.f32.mrf.mxu0
        %1248 = vmatprep.mubr.bf16.mxu0 0
        %1249 = vmatmul.mubr.bf16.gmra.mxu0 %v985
        %v1250 = vpop.f32.mrf.mxu0
        %v1251 = vadd.f32 %v1138, %v1250
        %v1252 = vpop.f32.mrf.mxu0
        %v1253 = vpop.f32.mrf.mxu0
        %v1254 = vadd.f32 %v1141, %v1253
        %v1255 = vpop.f32.mrf.mxu0
        %1256 = vdwg.mxu0
        %v1257 = vsel %vm915, %v889, 0.0
        %v1258 = vsel %vm916, %v890, 0.0
        %v1259 = vsel %vm917, %v891, 0.0
        %v1260 = vsel %vm918, %v892, 0.0
        %v1261 = vsel %vm919, %v893, 0.0
        %v1262 = vsel %vm920, %v894, 0.0
        %v1263 = vsel %vm921, %v895, 0.0
        %v1264 = vsel %vm922, %v896, 0.0
        %v1265 = vpack.c.bf16 %v1258, %v1257
        %v1266 = vpack.c.bf16 %v1260, %v1259
        %v1267 = vpack.c.bf16 %v1262, %v1261
        %v1268 = vpack.c.bf16 %v1264, %v1263
        %s1269 = scalar_lea.vmem %s3, 128
        %v1270 = vld [vmem:[%s1269] sm:$0xf]
        %v1271 = vld [vmem:[%s1269 + $0x4] sm:$0xf]
        %v1272 = vld [vmem:[%s1269 + $0x8] sm:$0xf]
        %v1273 = vld [vmem:[%s1269 + $0xc] sm:$0xf]
        %v1274 = vld [vmem:[%s1269 + $0x10] sm:$0xf]
        %v1275 = vld [vmem:[%s1269 + $0x14] sm:$0xf]
        %v1276 = vld [vmem:[%s1269 + $0x18] sm:$0xf]
        %v1277 = vld [vmem:[%s1269 + $0x1c] sm:$0xf]
        %v1278 = vld [vmem:[%s1269 + $0x20] sm:$0xf]
        %v1279 = vld [vmem:[%s1269 + $0x24] sm:$0xf]
        %v1280 = vld [vmem:[%s1269 + $0x28] sm:$0xf]
        %v1281 = vld [vmem:[%s1269 + $0x2c] sm:$0xf]
        %v1282 = vld [vmem:[%s1269 + $0x30] sm:$0xf]
        %v1283 = vld [vmem:[%s1269 + $0x34] sm:$0xf]
        %v1284 = vld [vmem:[%s1269 + $0x38] sm:$0xf]
        %v1285 = vld [vmem:[%s1269 + $0x3c] sm:$0xf]
        %v1302 = vunpack.c.l.b16 %v1270
        %v1303 = vunpack.c.l.b16 %v1271
        %v1304 = vunpack.c.l.b16 %v1272
        %v1305 = vunpack.c.l.b16 %v1273
        %v1306 = vunpack.c.l.b16 %v1274
        %v1307 = vunpack.c.l.b16 %v1275
        %v1308 = vunpack.c.l.b16 %v1276
        %v1309 = vunpack.c.l.b16 %v1277
        %v1310 = vunpack.c.l.b16 %v1278
        %v1311 = vunpack.c.l.b16 %v1279
        %v1312 = vunpack.c.l.b16 %v1280
        %v1313 = vunpack.c.l.b16 %v1281
        %v1314 = vunpack.c.l.b16 %v1282
        %v1315 = vunpack.c.l.b16 %v1283
        %v1316 = vunpack.c.l.b16 %v1284
        %v1317 = vunpack.c.l.b16 %v1285
        %v1318 = vpack.c.b16 %v1303, %v1302
        %v1319 = vpack.c.b16 %v1305, %v1304
        %v1320 = vpack.c.b16 %v1307, %v1306
        %v1321 = vpack.c.b16 %v1309, %v1308
        %v1322 = vpack.c.b16 %v1311, %v1310
        %v1323 = vpack.c.b16 %v1313, %v1312
        %v1324 = vpack.c.b16 %v1315, %v1314
        %v1325 = vpack.c.b16 %v1317, %v1316
        %1334 = vmatprep.subr.bf16.mxu0 0
        %1335 = vmatpush1.bf16.msra.mxu0 %v1325
        %1336 = vmatprep.subr.bf16.mxu0 0
        %1337 = vmatpush1.bf16.msra.mxu0 %v1324
        %1338 = vmatprep.subr.bf16.mxu0 0
        %1339 = vmatpush1.bf16.msra.mxu0 %v1323
        %1340 = vmatprep.subr.bf16.mxu0 0
        %1341 = vmatpush1.bf16.msra.mxu0 %v1322
        %1342 = vmatprep.subr.bf16.mxu0 0
        %1343 = vmatpush1.bf16.msra.mxu0 %v1321
        %1344 = vmatprep.subr.bf16.mxu0 0
        %1345 = vmatpush1.bf16.msra.mxu0 %v1320
        %1346 = vmatprep.subr.bf16.mxu0 0
        %1347 = vmatpush1.bf16.msra.mxu0 %v1319
        %1348 = vmatprep.subr.bf16.mxu0 0
        %1349 = vmatpush1.bf16.msra.mxu0 %v1318
        %1350 = vmatprep.subr.bf16.mxu0 0
        %1351 = vmatpush2.bf16.msra.mxu0 0
        %1352 = vmatprep.subr.bf16.mxu0 0
        %1353 = vmatpush2.bf16.msra.mxu0 0
        %1354 = vmatprep.subr.bf16.mxu0 0
        %1355 = vmatpush2.bf16.msra.mxu0 0
        %1356 = vmatprep.subr.bf16.mxu0 0
        %1357 = vmatpush2.bf16.msra.mxu0 0
        %1358 = vmatprep.subr.bf16.mxu0 0
        %1359 = vmatpush2.bf16.msra.mxu0 0
        %1360 = vmatprep.subr.bf16.mxu0 0
        %1361 = vmatpush2.bf16.msra.mxu0 0
        %1362 = vmatprep.subr.bf16.mxu0 0
        %1363 = vmatpush2.bf16.msra.mxu0 0
        %1364 = vmatprep.subr.bf16.mxu0 0
        %1365 = vmatpush2.bf16.msra.mxu0 0
        %1366 = vmatprep.mubr.bf16.mxu0 0
        %1367 = vmatmul.mubr.bf16.gmra.mxu0 %v1265
        %v1368 = vpop.f32.mrf.mxu0
        %v1369 = vadd.f32 0.0, %v1368
        %v1370 = vpop.f32.mrf.mxu0
        %v1371 = vpop.f32.mrf.mxu0
        %v1372 = vadd.f32 0.0, %v1371
        %v1373 = vpop.f32.mrf.mxu0
        %1374 = vmatprep.mubr.bf16.mxu0 0
        %1375 = vmatmul.mubr.bf16.gmra.mxu0 %v1266
        %v1376 = vpop.f32.mrf.mxu0
        %v1377 = vadd.f32 0.0, %v1376
        %v1378 = vpop.f32.mrf.mxu0
        %v1379 = vpop.f32.mrf.mxu0
        %v1380 = vadd.f32 0.0, %v1379
        %v1381 = vpop.f32.mrf.mxu0
        %1382 = vmatprep.mubr.bf16.mxu0 0
        %1383 = vmatmul.mubr.bf16.gmra.mxu0 %v1267
        %v1384 = vpop.f32.mrf.mxu0
        %v1385 = vadd.f32 0.0, %v1384
        %v1386 = vpop.f32.mrf.mxu0
        %v1387 = vpop.f32.mrf.mxu0
        %v1388 = vadd.f32 0.0, %v1387
        %v1389 = vpop.f32.mrf.mxu0
        %1390 = vmatprep.mubr.bf16.mxu0 0
        %1391 = vmatmul.mubr.bf16.gmra.mxu0 %v1268
        %v1392 = vpop.f32.mrf.mxu0
        %v1393 = vadd.f32 0.0, %v1392
        %v1394 = vpop.f32.mrf.mxu0
        %v1395 = vpop.f32.mrf.mxu0
        %v1396 = vadd.f32 0.0, %v1395
        %v1397 = vpop.f32.mrf.mxu0
        %1398 = vdwg.mxu0
        %v1399 = vadd.f32 %v1227, %v1369
        %v1400 = vadd.f32 %v1230, %v1372
        %v1401 = vadd.f32 %v1235, %v1377
        %v1402 = vadd.f32 %v1238, %v1380
        %v1403 = vadd.f32 %v1243, %v1385
        %v1404 = vadd.f32 %v1246, %v1388
        %v1405 = vadd.f32 %v1251, %v1393
        %v1406 = vadd.f32 %v1254, %v1396
        %v1416 = vrot.slane %v870, 7
        %v1417 = vrot.slane %v871, 7
        %v1418 = vsel %vm948, %v1416, %v1417
        %v1419 = vrot.slane %v872, 7
        %v1420 = vsel %vm948, %v1417, %v1419
        %v1421 = vrot.slane %v873, 7
        %v1422 = vsel %vm948, %v1419, %v1421
        %v1423 = vrot.slane %v874, 7
        %v1424 = vsel %vm948, %v1421, %v1423
        %v1425 = vrot.slane %v875, 7
        %v1426 = vsel %vm948, %v1423, %v1425
        %v1427 = vrot.slane %v876, 7
        %v1428 = vsel %vm948, %v1425, %v1427
        %v1429 = vrot.slane %v877, 7
        %v1430 = vsel %vm948, %v1427, %v1429
        %v1431 = vrot.slane %v878, 7
        %v1432 = vsel %vm948, %v1429, %v1431
        %v1441 = vsel %vm923, %v1418, 0.0
        %v1442 = vsel %vm924, %v1420, 0.0
        %v1443 = vsel %vm925, %v1422, 0.0
        %v1444 = vsel %vm926, %v1424, 0.0
        %v1445 = vsel %vm927, %v1426, 0.0
        %v1446 = vsel %vm928, %v1428, 0.0
        %v1447 = vsel %vm929, %v1430, 0.0
        %v1448 = vsel %vm930, %v1432, 0.0
        %v1449 = vpack.c.bf16 %v1442, %v1441
        %v1450 = vpack.c.bf16 %v1444, %v1443
        %v1451 = vpack.c.bf16 %v1446, %v1445
        %v1452 = vpack.c.bf16 %v1448, %v1447
        %s1453 = scalar_lea.vmem %s3, 192
        %v1454 = vld [vmem:[%s1453] sm:$0xf]
        %v1455 = vld [vmem:[%s1453 + $0x4] sm:$0xf]
        %v1456 = vld [vmem:[%s1453 + $0x8] sm:$0xf]
        %v1457 = vld [vmem:[%s1453 + $0xc] sm:$0xf]
        %v1458 = vld [vmem:[%s1453 + $0x10] sm:$0xf]
        %v1459 = vld [vmem:[%s1453 + $0x14] sm:$0xf]
        %v1460 = vld [vmem:[%s1453 + $0x18] sm:$0xf]
        %v1461 = vld [vmem:[%s1453 + $0x1c] sm:$0xf]
        %v1462 = vld [vmem:[%s1453 + $0x20] sm:$0xf]
        %v1463 = vld [vmem:[%s1453 + $0x24] sm:$0xf]
        %v1464 = vld [vmem:[%s1453 + $0x28] sm:$0xf]
        %v1465 = vld [vmem:[%s1453 + $0x2c] sm:$0xf]
        %v1466 = vld [vmem:[%s1453 + $0x30] sm:$0xf]
        %v1467 = vld [vmem:[%s1453 + $0x34] sm:$0xf]
        %v1468 = vld [vmem:[%s1453 + $0x38] sm:$0xf]
        %v1469 = vld [vmem:[%s1453 + $0x3c] sm:$0xf]
        %v1486 = vunpack.c.l.b16 %v1454
        %v1487 = vunpack.c.l.b16 %v1455
        %v1488 = vunpack.c.l.b16 %v1456
        %v1489 = vunpack.c.l.b16 %v1457
        %v1490 = vunpack.c.l.b16 %v1458
        %v1491 = vunpack.c.l.b16 %v1459
        %v1492 = vunpack.c.l.b16 %v1460
        %v1493 = vunpack.c.l.b16 %v1461
        %v1494 = vunpack.c.l.b16 %v1462
        %v1495 = vunpack.c.l.b16 %v1463
        %v1496 = vunpack.c.l.b16 %v1464
        %v1497 = vunpack.c.l.b16 %v1465
        %v1498 = vunpack.c.l.b16 %v1466
        %v1499 = vunpack.c.l.b16 %v1467
        %v1500 = vunpack.c.l.b16 %v1468
        %v1501 = vunpack.c.l.b16 %v1469
        %v1502 = vpack.c.b16 %v1487, %v1486
        %v1503 = vpack.c.b16 %v1489, %v1488
        %v1504 = vpack.c.b16 %v1491, %v1490
        %v1505 = vpack.c.b16 %v1493, %v1492
        %v1506 = vpack.c.b16 %v1495, %v1494
        %v1507 = vpack.c.b16 %v1497, %v1496
        %v1508 = vpack.c.b16 %v1499, %v1498
        %v1509 = vpack.c.b16 %v1501, %v1500
        %1518 = vmatprep.subr.bf16.mxu0 0
        %1519 = vmatpush1.bf16.msra.mxu0 %v1509
        %1520 = vmatprep.subr.bf16.mxu0 0
        %1521 = vmatpush1.bf16.msra.mxu0 %v1508
        %1522 = vmatprep.subr.bf16.mxu0 0
        %1523 = vmatpush1.bf16.msra.mxu0 %v1507
        %1524 = vmatprep.subr.bf16.mxu0 0
        %1525 = vmatpush1.bf16.msra.mxu0 %v1506
        %1526 = vmatprep.subr.bf16.mxu0 0
        %1527 = vmatpush1.bf16.msra.mxu0 %v1505
        %1528 = vmatprep.subr.bf16.mxu0 0
        %1529 = vmatpush1.bf16.msra.mxu0 %v1504
        %1530 = vmatprep.subr.bf16.mxu0 0
        %1531 = vmatpush1.bf16.msra.mxu0 %v1503
        %1532 = vmatprep.subr.bf16.mxu0 0
        %1533 = vmatpush1.bf16.msra.mxu0 %v1502
        %1534 = vmatprep.subr.bf16.mxu0 0
        %1535 = vmatpush2.bf16.msra.mxu0 0
        %1536 = vmatprep.subr.bf16.mxu0 0
        %1537 = vmatpush2.bf16.msra.mxu0 0
        %1538 = vmatprep.subr.bf16.mxu0 0
        %1539 = vmatpush2.bf16.msra.mxu0 0
        %1540 = vmatprep.subr.bf16.mxu0 0
        %1541 = vmatpush2.bf16.msra.mxu0 0
        %1542 = vmatprep.subr.bf16.mxu0 0
        %1543 = vmatpush2.bf16.msra.mxu0 0
        %1544 = vmatprep.subr.bf16.mxu0 0
        %1545 = vmatpush2.bf16.msra.mxu0 0
        %1546 = vmatprep.subr.bf16.mxu0 0
        %1547 = vmatpush2.bf16.msra.mxu0 0
        %1548 = vmatprep.subr.bf16.mxu0 0
        %1549 = vmatpush2.bf16.msra.mxu0 0
        %1550 = vmatprep.mubr.bf16.mxu0 0
        %1551 = vmatmul.mubr.bf16.gmra.mxu0 %v1449
        %v1552 = vpop.f32.mrf.mxu0
        %v1553 = vadd.f32 0.0, %v1552
        %v1554 = vpop.f32.mrf.mxu0
        %v1555 = vpop.f32.mrf.mxu0
        %v1556 = vadd.f32 0.0, %v1555
        %v1557 = vpop.f32.mrf.mxu0
        %1558 = vmatprep.mubr.bf16.mxu0 0
        %1559 = vmatmul.mubr.bf16.gmra.mxu0 %v1450
        %v1560 = vpop.f32.mrf.mxu0
        %v1561 = vadd.f32 0.0, %v1560
        %v1562 = vpop.f32.mrf.mxu0
        %v1563 = vpop.f32.mrf.mxu0
        %v1564 = vadd.f32 0.0, %v1563
        %v1565 = vpop.f32.mrf.mxu0
        %1566 = vmatprep.mubr.bf16.mxu0 0
        %1567 = vmatmul.mubr.bf16.gmra.mxu0 %v1451
        %v1568 = vpop.f32.mrf.mxu0
        %v1569 = vadd.f32 0.0, %v1568
        %v1570 = vpop.f32.mrf.mxu0
        %v1571 = vpop.f32.mrf.mxu0
        %v1572 = vadd.f32 0.0, %v1571
        %v1573 = vpop.f32.mrf.mxu0
        %1574 = vmatprep.mubr.bf16.mxu0 0
        %1575 = vmatmul.mubr.bf16.gmra.mxu0 %v1452
        %v1576 = vpop.f32.mrf.mxu0
        %v1577 = vadd.f32 0.0, %v1576
        %v1578 = vpop.f32.mrf.mxu0
        %v1579 = vpop.f32.mrf.mxu0
        %v1580 = vadd.f32 0.0, %v1579
        %v1581 = vpop.f32.mrf.mxu0
        %1582 = vdwg.mxu0
        %v1583 = vadd.f32 %v1399, %v1553
        %v1584 = vadd.f32 %v1400, %v1556
        %v1585 = vadd.f32 %v1401, %v1561
        %v1586 = vadd.f32 %v1402, %v1564
        %v1587 = vadd.f32 %v1403, %v1569
        %v1588 = vadd.f32 %v1404, %v1572
        %v1589 = vadd.f32 %v1405, %v1577
        %v1590 = vadd.f32 %v1406, %v1580
        %v1591 = vpack.c.bf16 %v863, %v862
        %v1592 = vpack.c.bf16 %v865, %v864
        %v1593 = vpack.c.bf16 %v867, %v866
        %v1594 = vpack.c.bf16 %v869, %v868
        %s1595 = scalar_lea.vmem %s3, 256
        %v1596 = vld [vmem:[%s1595] sm:$0xf]
        %v1597 = vld [vmem:[%s1595 + $0x4] sm:$0xf]
        %v1598 = vld [vmem:[%s1595 + $0x8] sm:$0xf]
        %v1599 = vld [vmem:[%s1595 + $0xc] sm:$0xf]
        %v1600 = vld [vmem:[%s1595 + $0x10] sm:$0xf]
        %v1601 = vld [vmem:[%s1595 + $0x14] sm:$0xf]
        %v1602 = vld [vmem:[%s1595 + $0x18] sm:$0xf]
        %v1603 = vld [vmem:[%s1595 + $0x1c] sm:$0xf]
        %v1604 = vld [vmem:[%s1595 + $0x20] sm:$0xf]
        %v1605 = vld [vmem:[%s1595 + $0x24] sm:$0xf]
        %v1606 = vld [vmem:[%s1595 + $0x28] sm:$0xf]
        %v1607 = vld [vmem:[%s1595 + $0x2c] sm:$0xf]
        %v1608 = vld [vmem:[%s1595 + $0x30] sm:$0xf]
        %v1609 = vld [vmem:[%s1595 + $0x34] sm:$0xf]
        %v1610 = vld [vmem:[%s1595 + $0x38] sm:$0xf]
        %v1611 = vld [vmem:[%s1595 + $0x3c] sm:$0xf]
        %v1628 = vunpack.c.l.b16 %v1596
        %v1629 = vunpack.c.l.b16 %v1597
        %v1630 = vunpack.c.l.b16 %v1598
        %v1631 = vunpack.c.l.b16 %v1599
        %v1632 = vunpack.c.l.b16 %v1600
        %v1633 = vunpack.c.l.b16 %v1601
        %v1634 = vunpack.c.l.b16 %v1602
        %v1635 = vunpack.c.l.b16 %v1603
        %v1636 = vunpack.c.l.b16 %v1604
        %v1637 = vunpack.c.l.b16 %v1605
        %v1638 = vunpack.c.l.b16 %v1606
        %v1639 = vunpack.c.l.b16 %v1607
        %v1640 = vunpack.c.l.b16 %v1608
        %v1641 = vunpack.c.l.b16 %v1609
        %v1642 = vunpack.c.l.b16 %v1610
        %v1643 = vunpack.c.l.b16 %v1611
        %v1644 = vpack.c.b16 %v1629, %v1628
        %v1645 = vpack.c.b16 %v1631, %v1630
        %v1646 = vpack.c.b16 %v1633, %v1632
        %v1647 = vpack.c.b16 %v1635, %v1634
        %v1648 = vpack.c.b16 %v1637, %v1636
        %v1649 = vpack.c.b16 %v1639, %v1638
        %v1650 = vpack.c.b16 %v1641, %v1640
        %v1651 = vpack.c.b16 %v1643, %v1642
        %1660 = vmatprep.subr.bf16.mxu0 0
        %1661 = vmatpush1.bf16.msra.mxu0 %v1651
        %1662 = vmatprep.subr.bf16.mxu0 0
        %1663 = vmatpush1.bf16.msra.mxu0 %v1650
        %1664 = vmatprep.subr.bf16.mxu0 0
        %1665 = vmatpush1.bf16.msra.mxu0 %v1649
        %1666 = vmatprep.subr.bf16.mxu0 0
        %1667 = vmatpush1.bf16.msra.mxu0 %v1648
        %1668 = vmatprep.subr.bf16.mxu0 0
        %1669 = vmatpush1.bf16.msra.mxu0 %v1647
        %1670 = vmatprep.subr.bf16.mxu0 0
        %1671 = vmatpush1.bf16.msra.mxu0 %v1646
        %1672 = vmatprep.subr.bf16.mxu0 0
        %1673 = vmatpush1.bf16.msra.mxu0 %v1645
        %1674 = vmatprep.subr.bf16.mxu0 0
        %1675 = vmatpush1.bf16.msra.mxu0 %v1644
        %1676 = vmatprep.subr.bf16.mxu0 0
        %1677 = vmatpush2.bf16.msra.mxu0 0
        %1678 = vmatprep.subr.bf16.mxu0 0
        %1679 = vmatpush2.bf16.msra.mxu0 0
        %1680 = vmatprep.subr.bf16.mxu0 0
        %1681 = vmatpush2.bf16.msra.mxu0 0
        %1682 = vmatprep.subr.bf16.mxu0 0
        %1683 = vmatpush2.bf16.msra.mxu0 0
        %1684 = vmatprep.subr.bf16.mxu0 0
        %1685 = vmatpush2.bf16.msra.mxu0 0
        %1686 = vmatprep.subr.bf16.mxu0 0
        %1687 = vmatpush2.bf16.msra.mxu0 0
        %1688 = vmatprep.subr.bf16.mxu0 0
        %1689 = vmatpush2.bf16.msra.mxu0 0
        %1690 = vmatprep.subr.bf16.mxu0 0
        %1691 = vmatpush2.bf16.msra.mxu0 0
        %1692 = vmatprep.mubr.bf16.mxu0 0
        %1693 = vmatmul.mubr.bf16.gmra.mxu0 %v1591
        %v1694 = vpop.f32.mrf.mxu0
        %v1695 = vadd.f32 0.0, %v1694
        %v1696 = vpop.f32.mrf.mxu0
        %v1697 = vpop.f32.mrf.mxu0
        %v1698 = vadd.f32 0.0, %v1697
        %v1699 = vpop.f32.mrf.mxu0
        %1700 = vmatprep.mubr.bf16.mxu0 0
        %1701 = vmatmul.mubr.bf16.gmra.mxu0 %v1592
        %v1702 = vpop.f32.mrf.mxu0
        %v1703 = vadd.f32 0.0, %v1702
        %v1704 = vpop.f32.mrf.mxu0
        %v1705 = vpop.f32.mrf.mxu0
        %v1706 = vadd.f32 0.0, %v1705
        %v1707 = vpop.f32.mrf.mxu0
        %1708 = vmatprep.mubr.bf16.mxu0 0
        %1709 = vmatmul.mubr.bf16.gmra.mxu0 %v1593
        %v1710 = vpop.f32.mrf.mxu0
        %v1711 = vadd.f32 0.0, %v1710
        %v1712 = vpop.f32.mrf.mxu0
        %v1713 = vpop.f32.mrf.mxu0
        %v1714 = vadd.f32 0.0, %v1713
        %v1715 = vpop.f32.mrf.mxu0
        %1716 = vmatprep.mubr.bf16.mxu0 0
        %1717 = vmatmul.mubr.bf16.gmra.mxu0 %v1594
        %v1718 = vpop.f32.mrf.mxu0
        %v1719 = vadd.f32 0.0, %v1718
        %v1720 = vpop.f32.mrf.mxu0
        %v1721 = vpop.f32.mrf.mxu0
        %v1722 = vadd.f32 0.0, %v1721
        %v1723 = vpop.f32.mrf.mxu0
        %1724 = vdwg.mxu0
        %v1725 = vadd.f32 %v1583, %v1695
        %v1726 = vadd.f32 %v1584, %v1698
        %v1727 = vadd.f32 %v1585, %v1703
        %v1728 = vadd.f32 %v1586, %v1706
        %v1729 = vadd.f32 %v1587, %v1711
        %v1730 = vadd.f32 %v1588, %v1714
        %v1731 = vadd.f32 %v1589, %v1719
        %v1732 = vadd.f32 %v1590, %v1722
        %v1733 = vpack.c.bf16 %v872, %v871
        %v1734 = vpack.c.bf16 %v874, %v873
        %v1735 = vpack.c.bf16 %v876, %v875
        %v1736 = vpack.c.bf16 %v878, %v877
        %s1737 = scalar_lea.vmem %s3, 320
        %v1738 = vld [vmem:[%s1737] sm:$0xf]
        %v1739 = vld [vmem:[%s1737 + $0x4] sm:$0xf]
        %v1740 = vld [vmem:[%s1737 + $0x8] sm:$0xf]
        %v1741 = vld [vmem:[%s1737 + $0xc] sm:$0xf]
        %v1742 = vld [vmem:[%s1737 + $0x10] sm:$0xf]
        %v1743 = vld [vmem:[%s1737 + $0x14] sm:$0xf]
        %v1744 = vld [vmem:[%s1737 + $0x18] sm:$0xf]
        %v1745 = vld [vmem:[%s1737 + $0x1c] sm:$0xf]
        %v1746 = vld [vmem:[%s1737 + $0x20] sm:$0xf]
        %v1747 = vld [vmem:[%s1737 + $0x24] sm:$0xf]
        %v1748 = vld [vmem:[%s1737 + $0x28] sm:$0xf]
        %v1749 = vld [vmem:[%s1737 + $0x2c] sm:$0xf]
        %v1750 = vld [vmem:[%s1737 + $0x30] sm:$0xf]
        %v1751 = vld [vmem:[%s1737 + $0x34] sm:$0xf]
        %v1752 = vld [vmem:[%s1737 + $0x38] sm:$0xf]
        %v1753 = vld [vmem:[%s1737 + $0x3c] sm:$0xf]
        %v1770 = vunpack.c.l.b16 %v1738
        %v1771 = vunpack.c.l.b16 %v1739
        %v1772 = vunpack.c.l.b16 %v1740
        %v1773 = vunpack.c.l.b16 %v1741
        %v1774 = vunpack.c.l.b16 %v1742
        %v1775 = vunpack.c.l.b16 %v1743
        %v1776 = vunpack.c.l.b16 %v1744
        %v1777 = vunpack.c.l.b16 %v1745
        %v1778 = vunpack.c.l.b16 %v1746
        %v1779 = vunpack.c.l.b16 %v1747
        %v1780 = vunpack.c.l.b16 %v1748
        %v1781 = vunpack.c.l.b16 %v1749
        %v1782 = vunpack.c.l.b16 %v1750
        %v1783 = vunpack.c.l.b16 %v1751
        %v1784 = vunpack.c.l.b16 %v1752
        %v1785 = vunpack.c.l.b16 %v1753
        %v1786 = vpack.c.b16 %v1771, %v1770
        %v1787 = vpack.c.b16 %v1773, %v1772
        %v1788 = vpack.c.b16 %v1775, %v1774
        %v1789 = vpack.c.b16 %v1777, %v1776
        %v1790 = vpack.c.b16 %v1779, %v1778
        %v1791 = vpack.c.b16 %v1781, %v1780
        %v1792 = vpack.c.b16 %v1783, %v1782
        %v1793 = vpack.c.b16 %v1785, %v1784
        %1802 = vmatprep.subr.bf16.mxu0 0
        %1803 = vmatpush1.bf16.msra.mxu0 %v1793
        %1804 = vmatprep.subr.bf16.mxu0 0
        %1805 = vmatpush1.bf16.msra.mxu0 %v1792
        %1806 = vmatprep.subr.bf16.mxu0 0
        %1807 = vmatpush1.bf16.msra.mxu0 %v1791
        %1808 = vmatprep.subr.bf16.mxu0 0
        %1809 = vmatpush1.bf16.msra.mxu0 %v1790
        %1810 = vmatprep.subr.bf16.mxu0 0
        %1811 = vmatpush1.bf16.msra.mxu0 %v1789
        %1812 = vmatprep.subr.bf16.mxu0 0
        %1813 = vmatpush1.bf16.msra.mxu0 %v1788
        %1814 = vmatprep.subr.bf16.mxu0 0
        %1815 = vmatpush1.bf16.msra.mxu0 %v1787
        %1816 = vmatprep.subr.bf16.mxu0 0
        %1817 = vmatpush1.bf16.msra.mxu0 %v1786
        %1818 = vmatprep.subr.bf16.mxu0 0
        %1819 = vmatpush2.bf16.msra.mxu0 0
        %1820 = vmatprep.subr.bf16.mxu0 0
        %1821 = vmatpush2.bf16.msra.mxu0 0
        %1822 = vmatprep.subr.bf16.mxu0 0
        %1823 = vmatpush2.bf16.msra.mxu0 0
        %1824 = vmatprep.subr.bf16.mxu0 0
        %1825 = vmatpush2.bf16.msra.mxu0 0
        %1826 = vmatprep.subr.bf16.mxu0 0
        %1827 = vmatpush2.bf16.msra.mxu0 0
        %1828 = vmatprep.subr.bf16.mxu0 0
        %1829 = vmatpush2.bf16.msra.mxu0 0
        %1830 = vmatprep.subr.bf16.mxu0 0
        %1831 = vmatpush2.bf16.msra.mxu0 0
        %1832 = vmatprep.subr.bf16.mxu0 0
        %1833 = vmatpush2.bf16.msra.mxu0 0
        %1834 = vmatprep.mubr.bf16.mxu0 0
        %1835 = vmatmul.mubr.bf16.gmra.mxu0 %v1733
        %v1836 = vpop.f32.mrf.mxu0
        %v1837 = vadd.f32 0.0, %v1836
        %v1838 = vpop.f32.mrf.mxu0
        %v1839 = vpop.f32.mrf.mxu0
        %v1840 = vadd.f32 0.0, %v1839
        %v1841 = vpop.f32.mrf.mxu0
        %1842 = vmatprep.mubr.bf16.mxu0 0
        %1843 = vmatmul.mubr.bf16.gmra.mxu0 %v1734
        %v1844 = vpop.f32.mrf.mxu0
        %v1845 = vadd.f32 0.0, %v1844
        %v1846 = vpop.f32.mrf.mxu0
        %v1847 = vpop.f32.mrf.mxu0
        %v1848 = vadd.f32 0.0, %v1847
        %v1849 = vpop.f32.mrf.mxu0
        %1850 = vmatprep.mubr.bf16.mxu0 0
        %1851 = vmatmul.mubr.bf16.gmra.mxu0 %v1735
        %v1852 = vpop.f32.mrf.mxu0
        %v1853 = vadd.f32 0.0, %v1852
        %v1854 = vpop.f32.mrf.mxu0
        %v1855 = vpop.f32.mrf.mxu0
        %v1856 = vadd.f32 0.0, %v1855
        %v1857 = vpop.f32.mrf.mxu0
        %1858 = vmatprep.mubr.bf16.mxu0 0
        %1859 = vmatmul.mubr.bf16.gmra.mxu0 %v1736
        %v1860 = vpop.f32.mrf.mxu0
        %v1861 = vadd.f32 0.0, %v1860
        %v1862 = vpop.f32.mrf.mxu0
        %v1863 = vpop.f32.mrf.mxu0
        %v1864 = vadd.f32 0.0, %v1863
        %v1865 = vpop.f32.mrf.mxu0
        %1866 = vdwg.mxu0
        %v1867 = vadd.f32 %v1725, %v1837
        %v1868 = vadd.f32 %v1726, %v1840
        %v1869 = vadd.f32 %v1727, %v1845
        %v1870 = vadd.f32 %v1728, %v1848
        %v1871 = vadd.f32 %v1729, %v1853
        %v1872 = vadd.f32 %v1730, %v1856
        %v1873 = vadd.f32 %v1731, %v1861
        %v1874 = vadd.f32 %v1732, %v1864
        %v1876 = vrot.slane %v897, 7
        %v1877 = vsel %vm948, %v964, %v1876
        %v1879 = vsel %vm923, %v953, 0.0
        %v1880 = vsel %vm924, %v955, 0.0
        %v1881 = vsel %vm925, %v957, 0.0
        %v1882 = vsel %vm926, %v959, 0.0
        %v1883 = vsel %vm927, %v961, 0.0
        %v1884 = vsel %vm928, %v963, 0.0
        %v1885 = vsel %vm929, %v965, 0.0
        %v1886 = vsel %vm930, %v1877, 0.0
        %v1887 = vpack.c.bf16 %v1880, %v1879
        %v1888 = vpack.c.bf16 %v1882, %v1881
        %v1889 = vpack.c.bf16 %v1884, %v1883
        %v1890 = vpack.c.bf16 %v1886, %v1885
        %s1891 = scalar_lea.vmem %s3, 384
        %v1892 = vld [vmem:[%s1891] sm:$0xf]
        %v1893 = vld [vmem:[%s1891 + $0x4] sm:$0xf]
        %v1894 = vld [vmem:[%s1891 + $0x8] sm:$0xf]
        %v1895 = vld [vmem:[%s1891 + $0xc] sm:$0xf]
        %v1896 = vld [vmem:[%s1891 + $0x10] sm:$0xf]
        %v1897 = vld [vmem:[%s1891 + $0x14] sm:$0xf]
        %v1898 = vld [vmem:[%s1891 + $0x18] sm:$0xf]
        %v1899 = vld [vmem:[%s1891 + $0x1c] sm:$0xf]
        %v1900 = vld [vmem:[%s1891 + $0x20] sm:$0xf]
        %v1901 = vld [vmem:[%s1891 + $0x24] sm:$0xf]
        %v1902 = vld [vmem:[%s1891 + $0x28] sm:$0xf]
        %v1903 = vld [vmem:[%s1891 + $0x2c] sm:$0xf]
        %v1904 = vld [vmem:[%s1891 + $0x30] sm:$0xf]
        %v1905 = vld [vmem:[%s1891 + $0x34] sm:$0xf]
        %v1906 = vld [vmem:[%s1891 + $0x38] sm:$0xf]
        %v1907 = vld [vmem:[%s1891 + $0x3c] sm:$0xf]
        %v1924 = vunpack.c.l.b16 %v1892
        %v1925 = vunpack.c.l.b16 %v1893
        %v1926 = vunpack.c.l.b16 %v1894
        %v1927 = vunpack.c.l.b16 %v1895
        %v1928 = vunpack.c.l.b16 %v1896
        %v1929 = vunpack.c.l.b16 %v1897
        %v1930 = vunpack.c.l.b16 %v1898
        %v1931 = vunpack.c.l.b16 %v1899
        %v1932 = vunpack.c.l.b16 %v1900
        %v1933 = vunpack.c.l.b16 %v1901
        %v1934 = vunpack.c.l.b16 %v1902
        %v1935 = vunpack.c.l.b16 %v1903
        %v1936 = vunpack.c.l.b16 %v1904
        %v1937 = vunpack.c.l.b16 %v1905
        %v1938 = vunpack.c.l.b16 %v1906
        %v1939 = vunpack.c.l.b16 %v1907
        %v1940 = vpack.c.b16 %v1925, %v1924
        %v1941 = vpack.c.b16 %v1927, %v1926
        %v1942 = vpack.c.b16 %v1929, %v1928
        %v1943 = vpack.c.b16 %v1931, %v1930
        %v1944 = vpack.c.b16 %v1933, %v1932
        %v1945 = vpack.c.b16 %v1935, %v1934
        %v1946 = vpack.c.b16 %v1937, %v1936
        %v1947 = vpack.c.b16 %v1939, %v1938
        %1956 = vmatprep.subr.bf16.mxu0 0
        %1957 = vmatpush1.bf16.msra.mxu0 %v1947
        %1958 = vmatprep.subr.bf16.mxu0 0
        %1959 = vmatpush1.bf16.msra.mxu0 %v1946
        %1960 = vmatprep.subr.bf16.mxu0 0
        %1961 = vmatpush1.bf16.msra.mxu0 %v1945
        %1962 = vmatprep.subr.bf16.mxu0 0
        %1963 = vmatpush1.bf16.msra.mxu0 %v1944
        %1964 = vmatprep.subr.bf16.mxu0 0
        %1965 = vmatpush1.bf16.msra.mxu0 %v1943
        %1966 = vmatprep.subr.bf16.mxu0 0
        %1967 = vmatpush1.bf16.msra.mxu0 %v1942
        %1968 = vmatprep.subr.bf16.mxu0 0
        %1969 = vmatpush1.bf16.msra.mxu0 %v1941
        %1970 = vmatprep.subr.bf16.mxu0 0
        %1971 = vmatpush1.bf16.msra.mxu0 %v1940
        %1972 = vmatprep.subr.bf16.mxu0 0
        %1973 = vmatpush2.bf16.msra.mxu0 0
        %1974 = vmatprep.subr.bf16.mxu0 0
        %1975 = vmatpush2.bf16.msra.mxu0 0
        %1976 = vmatprep.subr.bf16.mxu0 0
        %1977 = vmatpush2.bf16.msra.mxu0 0
        %1978 = vmatprep.subr.bf16.mxu0 0
        %1979 = vmatpush2.bf16.msra.mxu0 0
        %1980 = vmatprep.subr.bf16.mxu0 0
        %1981 = vmatpush2.bf16.msra.mxu0 0
        %1982 = vmatprep.subr.bf16.mxu0 0
        %1983 = vmatpush2.bf16.msra.mxu0 0
        %1984 = vmatprep.subr.bf16.mxu0 0
        %1985 = vmatpush2.bf16.msra.mxu0 0
        %1986 = vmatprep.subr.bf16.mxu0 0
        %1987 = vmatpush2.bf16.msra.mxu0 0
        %1988 = vmatprep.mubr.bf16.mxu0 0
        %1989 = vmatmul.mubr.bf16.gmra.mxu0 %v1887
        %v1990 = vpop.f32.mrf.mxu0
        %v1991 = vadd.f32 0.0, %v1990
        %v1992 = vpop.f32.mrf.mxu0
        %v1993 = vpop.f32.mrf.mxu0
        %v1994 = vadd.f32 0.0, %v1993
        %v1995 = vpop.f32.mrf.mxu0
        %1996 = vmatprep.mubr.bf16.mxu0 0
        %1997 = vmatmul.mubr.bf16.gmra.mxu0 %v1888
        %v1998 = vpop.f32.mrf.mxu0
        %v1999 = vadd.f32 0.0, %v1998
        %v2000 = vpop.f32.mrf.mxu0
        %v2001 = vpop.f32.mrf.mxu0
        %v2002 = vadd.f32 0.0, %v2001
        %v2003 = vpop.f32.mrf.mxu0
        %2004 = vmatprep.mubr.bf16.mxu0 0
        %2005 = vmatmul.mubr.bf16.gmra.mxu0 %v1889
        %v2006 = vpop.f32.mrf.mxu0
        %v2007 = vadd.f32 0.0, %v2006
        %v2008 = vpop.f32.mrf.mxu0
        %v2009 = vpop.f32.mrf.mxu0
        %v2010 = vadd.f32 0.0, %v2009
        %v2011 = vpop.f32.mrf.mxu0
        %2012 = vmatprep.mubr.bf16.mxu0 0
        %2013 = vmatmul.mubr.bf16.gmra.mxu0 %v1890
        %v2014 = vpop.f32.mrf.mxu0
        %v2015 = vadd.f32 0.0, %v2014
        %v2016 = vpop.f32.mrf.mxu0
        %v2017 = vpop.f32.mrf.mxu0
        %v2018 = vadd.f32 0.0, %v2017
        %v2019 = vpop.f32.mrf.mxu0
        %2020 = vdwg.mxu0
        %v2021 = vadd.f32 %v1867, %v1991
        %v2022 = vadd.f32 %v1868, %v1994
        %v2023 = vadd.f32 %v1869, %v1999
        %v2024 = vadd.f32 %v1870, %v2002
        %v2025 = vadd.f32 %v1871, %v2007
        %v2026 = vadd.f32 %v1872, %v2010
        %v2027 = vadd.f32 %v1873, %v2015
        %v2028 = vadd.f32 %v1874, %v2018
        %v2029 = vpack.c.bf16 %v881, %v880
        %v2030 = vpack.c.bf16 %v883, %v882
        %v2031 = vpack.c.bf16 %v885, %v884
        %v2032 = vpack.c.bf16 %v887, %v886
        %s2033 = scalar_lea.vmem %s3, 448
        %v2034 = vld [vmem:[%s2033] sm:$0xf]
        %v2035 = vld [vmem:[%s2033 + $0x4] sm:$0xf]
        %v2036 = vld [vmem:[%s2033 + $0x8] sm:$0xf]
        %v2037 = vld [vmem:[%s2033 + $0xc] sm:$0xf]
        %v2038 = vld [vmem:[%s2033 + $0x10] sm:$0xf]
        %v2039 = vld [vmem:[%s2033 + $0x14] sm:$0xf]
        %v2040 = vld [vmem:[%s2033 + $0x18] sm:$0xf]
        %v2041 = vld [vmem:[%s2033 + $0x1c] sm:$0xf]
        %v2042 = vld [vmem:[%s2033 + $0x20] sm:$0xf]
        %v2043 = vld [vmem:[%s2033 + $0x24] sm:$0xf]
        %v2044 = vld [vmem:[%s2033 + $0x28] sm:$0xf]
        %v2045 = vld [vmem:[%s2033 + $0x2c] sm:$0xf]
        %v2046 = vld [vmem:[%s2033 + $0x30] sm:$0xf]
        %v2047 = vld [vmem:[%s2033 + $0x34] sm:$0xf]
        %v2048 = vld [vmem:[%s2033 + $0x38] sm:$0xf]
        %v2049 = vld [vmem:[%s2033 + $0x3c] sm:$0xf]
        %v2066 = vunpack.c.l.b16 %v2034
        %v2067 = vunpack.c.l.b16 %v2035
        %v2068 = vunpack.c.l.b16 %v2036
        %v2069 = vunpack.c.l.b16 %v2037
        %v2070 = vunpack.c.l.b16 %v2038
        %v2071 = vunpack.c.l.b16 %v2039
        %v2072 = vunpack.c.l.b16 %v2040
        %v2073 = vunpack.c.l.b16 %v2041
        %v2074 = vunpack.c.l.b16 %v2042
        %v2075 = vunpack.c.l.b16 %v2043
        %v2076 = vunpack.c.l.b16 %v2044
        %v2077 = vunpack.c.l.b16 %v2045
        %v2078 = vunpack.c.l.b16 %v2046
        %v2079 = vunpack.c.l.b16 %v2047
        %v2080 = vunpack.c.l.b16 %v2048
        %v2081 = vunpack.c.l.b16 %v2049
        %v2082 = vpack.c.b16 %v2067, %v2066
        %v2083 = vpack.c.b16 %v2069, %v2068
        %v2084 = vpack.c.b16 %v2071, %v2070
        %v2085 = vpack.c.b16 %v2073, %v2072
        %v2086 = vpack.c.b16 %v2075, %v2074
        %v2087 = vpack.c.b16 %v2077, %v2076
        %v2088 = vpack.c.b16 %v2079, %v2078
        %v2089 = vpack.c.b16 %v2081, %v2080
        %2098 = vmatprep.subr.bf16.mxu0 0
        %2099 = vmatpush1.bf16.msra.mxu0 %v2089
        %2100 = vmatprep.subr.bf16.mxu0 0
        %2101 = vmatpush1.bf16.msra.mxu0 %v2088
        %2102 = vmatprep.subr.bf16.mxu0 0
        %2103 = vmatpush1.bf16.msra.mxu0 %v2087
        %2104 = vmatprep.subr.bf16.mxu0 0
        %2105 = vmatpush1.bf16.msra.mxu0 %v2086
        %2106 = vmatprep.subr.bf16.mxu0 0
        %2107 = vmatpush1.bf16.msra.mxu0 %v2085
        %2108 = vmatprep.subr.bf16.mxu0 0
        %2109 = vmatpush1.bf16.msra.mxu0 %v2084
        %2110 = vmatprep.subr.bf16.mxu0 0
        %2111 = vmatpush1.bf16.msra.mxu0 %v2083
        %2112 = vmatprep.subr.bf16.mxu0 0
        %2113 = vmatpush1.bf16.msra.mxu0 %v2082
        %2114 = vmatprep.subr.bf16.mxu0 0
        %2115 = vmatpush2.bf16.msra.mxu0 0
        %2116 = vmatprep.subr.bf16.mxu0 0
        %2117 = vmatpush2.bf16.msra.mxu0 0
        %2118 = vmatprep.subr.bf16.mxu0 0
        %2119 = vmatpush2.bf16.msra.mxu0 0
        %2120 = vmatprep.subr.bf16.mxu0 0
        %2121 = vmatpush2.bf16.msra.mxu0 0
        %2122 = vmatprep.subr.bf16.mxu0 0
        %2123 = vmatpush2.bf16.msra.mxu0 0
        %2124 = vmatprep.subr.bf16.mxu0 0
        %2125 = vmatpush2.bf16.msra.mxu0 0
        %2126 = vmatprep.subr.bf16.mxu0 0
        %2127 = vmatpush2.bf16.msra.mxu0 0
        %2128 = vmatprep.subr.bf16.mxu0 0
        %2129 = vmatpush2.bf16.msra.mxu0 0
        %2130 = vmatprep.mubr.bf16.mxu0 0
        %2131 = vmatmul.mubr.bf16.gmra.mxu0 %v2029
        %v2132 = vpop.f32.mrf.mxu0
        %v2133 = vadd.f32 0.0, %v2132
        %v2134 = vpop.f32.mrf.mxu0
        %v2135 = vpop.f32.mrf.mxu0
        %v2136 = vadd.f32 0.0, %v2135
        %v2137 = vpop.f32.mrf.mxu0
        %2138 = vmatprep.mubr.bf16.mxu0 0
        %2139 = vmatmul.mubr.bf16.gmra.mxu0 %v2030
        %v2140 = vpop.f32.mrf.mxu0
        %v2141 = vadd.f32 0.0, %v2140
        %v2142 = vpop.f32.mrf.mxu0
        %v2143 = vpop.f32.mrf.mxu0
        %v2144 = vadd.f32 0.0, %v2143
        %v2145 = vpop.f32.mrf.mxu0
        %2146 = vmatprep.mubr.bf16.mxu0 0
        %2147 = vmatmul.mubr.bf16.gmra.mxu0 %v2031
        %v2148 = vpop.f32.mrf.mxu0
        %v2149 = vadd.f32 0.0, %v2148
        %v2150 = vpop.f32.mrf.mxu0
        %v2151 = vpop.f32.mrf.mxu0
        %v2152 = vadd.f32 0.0, %v2151
        %v2153 = vpop.f32.mrf.mxu0
        %2154 = vmatprep.mubr.bf16.mxu0 0
        %2155 = vmatmul.mubr.bf16.gmra.mxu0 %v2032
        %v2156 = vpop.f32.mrf.mxu0
        %v2157 = vadd.f32 0.0, %v2156
        %v2158 = vpop.f32.mrf.mxu0
        %v2159 = vpop.f32.mrf.mxu0
        %v2160 = vadd.f32 0.0, %v2159
        %v2161 = vpop.f32.mrf.mxu0
        %2162 = vdwg.mxu0
        %v2163 = vadd.f32 %v2021, %v2133
        %v2164 = vadd.f32 %v2022, %v2136
        %v2165 = vadd.f32 %v2023, %v2141
        %v2166 = vadd.f32 %v2024, %v2144
        %v2167 = vadd.f32 %v2025, %v2149
        %v2168 = vadd.f32 %v2026, %v2152
        %v2169 = vadd.f32 %v2027, %v2157
        %v2170 = vadd.f32 %v2028, %v2160
        %v2171 = vpack.c.bf16 %v891, %v890
        %v2172 = vpack.c.bf16 %v893, %v892
        %v2173 = vpack.c.bf16 %v895, %v894
        %v2174 = vpack.c.bf16 %v897, %v896
        %s2175 = scalar_lea.vmem %s3, 512
        %v2176 = vld [vmem:[%s2175] sm:$0xf]
        %v2177 = vld [vmem:[%s2175 + $0x4] sm:$0xf]
        %v2178 = vld [vmem:[%s2175 + $0x8] sm:$0xf]
        %v2179 = vld [vmem:[%s2175 + $0xc] sm:$0xf]
        %v2180 = vld [vmem:[%s2175 + $0x10] sm:$0xf]
        %v2181 = vld [vmem:[%s2175 + $0x14] sm:$0xf]
        %v2182 = vld [vmem:[%s2175 + $0x18] sm:$0xf]
        %v2183 = vld [vmem:[%s2175 + $0x1c] sm:$0xf]
        %v2184 = vld [vmem:[%s2175 + $0x20] sm:$0xf]
        %v2185 = vld [vmem:[%s2175 + $0x24] sm:$0xf]
        %v2186 = vld [vmem:[%s2175 + $0x28] sm:$0xf]
        %v2187 = vld [vmem:[%s2175 + $0x2c] sm:$0xf]
        %v2188 = vld [vmem:[%s2175 + $0x30] sm:$0xf]
        %v2189 = vld [vmem:[%s2175 + $0x34] sm:$0xf]
        %v2190 = vld [vmem:[%s2175 + $0x38] sm:$0xf]
        %v2191 = vld [vmem:[%s2175 + $0x3c] sm:$0xf]
        %v2208 = vunpack.c.l.b16 %v2176
        %v2209 = vunpack.c.l.b16 %v2177
        %v2210 = vunpack.c.l.b16 %v2178
        %v2211 = vunpack.c.l.b16 %v2179
        %v2212 = vunpack.c.l.b16 %v2180
        %v2213 = vunpack.c.l.b16 %v2181
        %v2214 = vunpack.c.l.b16 %v2182
        %v2215 = vunpack.c.l.b16 %v2183
        %v2216 = vunpack.c.l.b16 %v2184
        %v2217 = vunpack.c.l.b16 %v2185
        %v2218 = vunpack.c.l.b16 %v2186
        %v2219 = vunpack.c.l.b16 %v2187
        %v2220 = vunpack.c.l.b16 %v2188
        %v2221 = vunpack.c.l.b16 %v2189
        %v2222 = vunpack.c.l.b16 %v2190
        %v2223 = vunpack.c.l.b16 %v2191
        %v2224 = vpack.c.b16 %v2209, %v2208
        %v2225 = vpack.c.b16 %v2211, %v2210
        %v2226 = vpack.c.b16 %v2213, %v2212
        %v2227 = vpack.c.b16 %v2215, %v2214
        %v2228 = vpack.c.b16 %v2217, %v2216
        %v2229 = vpack.c.b16 %v2219, %v2218
        %v2230 = vpack.c.b16 %v2221, %v2220
        %v2231 = vpack.c.b16 %v2223, %v2222
        %2240 = vmatprep.subr.bf16.mxu0 0
        %2241 = vmatpush1.bf16.msra.mxu0 %v2231
        %2242 = vmatprep.subr.bf16.mxu0 0
        %2243 = vmatpush1.bf16.msra.mxu0 %v2230
        %2244 = vmatprep.subr.bf16.mxu0 0
        %2245 = vmatpush1.bf16.msra.mxu0 %v2229
        %2246 = vmatprep.subr.bf16.mxu0 0
        %2247 = vmatpush1.bf16.msra.mxu0 %v2228
        %2248 = vmatprep.subr.bf16.mxu0 0
        %2249 = vmatpush1.bf16.msra.mxu0 %v2227
        %2250 = vmatprep.subr.bf16.mxu0 0
        %2251 = vmatpush1.bf16.msra.mxu0 %v2226
        %2252 = vmatprep.subr.bf16.mxu0 0
        %2253 = vmatpush1.bf16.msra.mxu0 %v2225
        %2254 = vmatprep.subr.bf16.mxu0 0
        %2255 = vmatpush1.bf16.msra.mxu0 %v2224
        %2256 = vmatprep.subr.bf16.mxu0 0
        %2257 = vmatpush2.bf16.msra.mxu0 0
        %2258 = vmatprep.subr.bf16.mxu0 0
        %2259 = vmatpush2.bf16.msra.mxu0 0
        %2260 = vmatprep.subr.bf16.mxu0 0
        %2261 = vmatpush2.bf16.msra.mxu0 0
        %2262 = vmatprep.subr.bf16.mxu0 0
        %2263 = vmatpush2.bf16.msra.mxu0 0
        %2264 = vmatprep.subr.bf16.mxu0 0
        %2265 = vmatpush2.bf16.msra.mxu0 0
        %2266 = vmatprep.subr.bf16.mxu0 0
        %2267 = vmatpush2.bf16.msra.mxu0 0
        %2268 = vmatprep.subr.bf16.mxu0 0
        %2269 = vmatpush2.bf16.msra.mxu0 0
        %2270 = vmatprep.subr.bf16.mxu0 0
        %2271 = vmatpush2.bf16.msra.mxu0 0
        %2272 = vmatprep.mubr.bf16.mxu0 0
        %2273 = vmatmul.mubr.bf16.gmra.mxu0 %v2171
        %v2274 = vpop.f32.mrf.mxu0
        %v2275 = vadd.f32 0.0, %v2274
        %v2276 = vpop.f32.mrf.mxu0
        %v2277 = vpop.f32.mrf.mxu0
        %v2278 = vadd.f32 0.0, %v2277
        %v2279 = vpop.f32.mrf.mxu0
        %2280 = vmatprep.mubr.bf16.mxu0 0
        %2281 = vmatmul.mubr.bf16.gmra.mxu0 %v2172
        %v2282 = vpop.f32.mrf.mxu0
        %v2283 = vadd.f32 0.0, %v2282
        %v2284 = vpop.f32.mrf.mxu0
        %v2285 = vpop.f32.mrf.mxu0
        %v2286 = vadd.f32 0.0, %v2285
        %v2287 = vpop.f32.mrf.mxu0
        %2288 = vmatprep.mubr.bf16.mxu0 0
        %2289 = vmatmul.mubr.bf16.gmra.mxu0 %v2173
        %v2290 = vpop.f32.mrf.mxu0
        %v2291 = vadd.f32 0.0, %v2290
        %v2292 = vpop.f32.mrf.mxu0
        %v2293 = vpop.f32.mrf.mxu0
        %v2294 = vadd.f32 0.0, %v2293
        %v2295 = vpop.f32.mrf.mxu0
        %2296 = vmatprep.mubr.bf16.mxu0 0
        %2297 = vmatmul.mubr.bf16.gmra.mxu0 %v2174
        %v2298 = vpop.f32.mrf.mxu0
        %v2299 = vadd.f32 0.0, %v2298
        %v2300 = vpop.f32.mrf.mxu0
        %v2301 = vpop.f32.mrf.mxu0
        %v2302 = vadd.f32 0.0, %v2301
        %v2303 = vpop.f32.mrf.mxu0
        %2304 = vdwg.mxu0
        %v2305 = vadd.f32 %v2163, %v2275
        %v2306 = vadd.f32 %v2164, %v2278
        %v2307 = vadd.f32 %v2165, %v2283
        %v2308 = vadd.f32 %v2166, %v2286
        %v2309 = vadd.f32 %v2167, %v2291
        %v2310 = vadd.f32 %v2168, %v2294
        %v2311 = vadd.f32 %v2169, %v2299
        %v2312 = vadd.f32 %v2170, %v2302
        %v2313 = vlaneseq
        %v2314 = vshrl.u32 %v2313, 7
        %v2315 = vsub.s32 0, %v2314
        %v2316 = vrot.slane %v364, %v2315
        %v2317 = vmul.f32 %v2305, %v2316
        %v2318 = vmul.f32 %v2306, %v2316
        %v2319 = vmul.f32 %v2307, %v2316
        %v2320 = vmul.f32 %v2308, %v2316
        %v2321 = vmul.f32 %v2309, %v2316
        %v2322 = vmul.f32 %v2310, %v2316
        %v2323 = vmul.f32 %v2311, %v2316
        %v2324 = vmul.f32 %v2312, %v2316
        %v2325 = vlaneseq
        %v2326 = vshrl.u32 %v2325, 7
        %v2327 = vsub.s32 0, %v2326
        %v2328 = vrot.slane %v365, %v2327
        %v2329 = vadd.f32 %v2317, %v2328
        %v2330 = vadd.f32 %v2318, %v2328
        %v2331 = vadd.f32 %v2319, %v2328
        %v2332 = vadd.f32 %v2320, %v2328
        %v2333 = vadd.f32 %v2321, %v2328
        %v2334 = vadd.f32 %v2322, %v2328
        %v2335 = vadd.f32 %v2323, %v2328
        %v2336 = vadd.f32 %v2324, %v2328
        %v2337 = vmax.f32 %v2329, 0.0
        %v2338 = vmax.f32 %v2330, 0.0
        %v2339 = vmax.f32 %v2331, 0.0
        %v2340 = vmax.f32 %v2332, 0.0
        %v2341 = vmax.f32 %v2333, 0.0
        %v2342 = vmax.f32 %v2334, 0.0
        %v2343 = vmax.f32 %v2335, 0.0
        %v2344 = vmax.f32 %v2336, 0.0
        %v2345 = vpack.c.bf16 %v2338, %v2337
        %v2346 = vpack.c.bf16 %v2340, %v2339
        %v2347 = vpack.c.bf16 %v2342, %v2341
        %v2348 = vpack.c.bf16 %v2344, %v2343
        %v2361 = vunpack.c.l.b16 %v368
        %v2362 = vunpack.c.l.b16 %v369
        %v2363 = vunpack.c.l.b16 %v370
        %v2364 = vunpack.c.l.b16 %v371
        %v2365 = vunpack.c.l.b16 %v372
        %v2366 = vunpack.c.l.b16 %v373
        %v2367 = vunpack.c.l.b16 %v374
        %v2368 = vunpack.c.l.b16 %v375
        %v2369 = vunpack.c.l.b16 %v376
        %v2370 = vunpack.c.l.b16 %v377
        %v2371 = vunpack.c.l.b16 %v378
        %v2372 = vunpack.c.l.b16 %v379
        %v2373 = vpack.c.b16 %v2362, %v2361
        %v2374 = vpack.c.b16 %v2364, %v2363
        %v2375 = vpack.c.b16 %v2366, %v2365
        %v2376 = vpack.c.b16 %v2368, %v2367
        %v2377 = vpack.c.b16 %v2370, %v2369
        %v2378 = vpack.c.b16 %v2372, %v2371
        %vm2379 = vcmask 523264
        %v2381 = vsel %vm2379, %v2373, 0
        %v2384 = vsel %vm2379, %v2374, 0
        %v2387 = vsel %vm2379, %v2375, 0
        %v2390 = vsel %vm2379, %v2376, 0
        %v2393 = vsel %vm2379, %v2377, 0
        %v2396 = vsel %vm2379, %v2378, 0
        %2398 = vmatprep.subr.bf16.mxu0 0
        %2399 = vmatpush1.bf16.msra.mxu0 0
        %2400 = vmatprep.subr.bf16.mxu0 0
        %2401 = vmatpush1.bf16.msra.mxu0 0
        %2402 = vmatprep.subr.bf16.mxu0 0
        %2403 = vmatpush1.bf16.msra.mxu0 0
        %2404 = vmatprep.subr.bf16.mxu0 0
        %2405 = vmatpush1.bf16.msra.mxu0 0
        %2406 = vmatprep.subr.bf16.mxu0 0
        %2407 = vmatpush1.bf16.msra.mxu0 %v2348
        %2408 = vmatprep.subr.bf16.mxu0 0
        %2409 = vmatpush1.bf16.msra.mxu0 %v2347
        %2410 = vmatprep.subr.bf16.mxu0 0
        %2411 = vmatpush1.bf16.msra.mxu0 %v2346
        %2412 = vmatprep.subr.bf16.mxu0 0
        %2413 = vmatpush1.bf16.msra.mxu0 %v2345
        %2414 = vmatprep.subr.bf16.mxu0 0
        %2415 = vmatpush2.bf16.msra.mxu0 0
        %2416 = vmatprep.subr.bf16.mxu0 0
        %2417 = vmatpush2.bf16.msra.mxu0 0
        %2418 = vmatprep.subr.bf16.mxu0 0
        %2419 = vmatpush2.bf16.msra.mxu0 0
        %2420 = vmatprep.subr.bf16.mxu0 0
        %2421 = vmatpush2.bf16.msra.mxu0 0
        %2422 = vmatprep.subr.bf16.mxu0 0
        %2423 = vmatpush2.bf16.msra.mxu0 0
        %2424 = vmatprep.subr.bf16.mxu0 0
        %2425 = vmatpush2.bf16.msra.mxu0 0
        %2426 = vmatprep.subr.bf16.mxu0 0
        %2427 = vmatpush2.bf16.msra.mxu0 0
        %2428 = vmatprep.subr.bf16.mxu0 0
        %2429 = vmatpush2.bf16.msra.mxu0 0
        %2430 = vmatprep.mubr.bf16.mxu0 0
        %2431 = vmatmul.mubr.bf16.gmra.mxu0 %v2381
        %v2432 = vpop.f32.mrf.mxu0
        %v2433 = vpop.f32.mrf.mxu0
        %v2434 = vpop.f32.mrf.mxu0
        %v2435 = vadd.f32 0.0, %v2434
        %v2436 = vpop.f32.mrf.mxu0
        %2437 = vmatprep.mubr.bf16.mxu0 0
        %2438 = vmatmul.mubr.bf16.gmra.mxu0 %v2384
        %v2439 = vpop.f32.mrf.mxu0
        %v2440 = vadd.f32 0.0, %v2439
        %v2441 = vpop.f32.mrf.mxu0
        %v2442 = vpop.f32.mrf.mxu0
        %v2443 = vadd.f32 0.0, %v2442
        %v2444 = vpop.f32.mrf.mxu0
        %2445 = vmatprep.mubr.bf16.mxu0 0
        %2446 = vmatmul.mubr.bf16.gmra.mxu0 %v2387
        %v2447 = vpop.f32.mrf.mxu0
        %v2448 = vadd.f32 0.0, %v2447
        %v2449 = vpop.f32.mrf.mxu0
        %v2450 = vpop.f32.mrf.mxu0
        %v2451 = vadd.f32 0.0, %v2450
        %v2452 = vpop.f32.mrf.mxu0
        %2453 = vmatprep.mubr.bf16.mxu0 0
        %2454 = vmatmul.mubr.bf16.gmra.mxu0 %v2390
        %v2455 = vpop.f32.mrf.mxu0
        %v2456 = vadd.f32 0.0, %v2455
        %v2457 = vpop.f32.mrf.mxu0
        %v2458 = vpop.f32.mrf.mxu0
        %v2459 = vadd.f32 0.0, %v2458
        %v2460 = vpop.f32.mrf.mxu0
        %2461 = vmatprep.mubr.bf16.mxu0 0
        %2462 = vmatmul.mubr.bf16.gmra.mxu0 %v2393
        %v2463 = vpop.f32.mrf.mxu0
        %v2464 = vadd.f32 0.0, %v2463
        %v2465 = vpop.f32.mrf.mxu0
        %v2466 = vpop.f32.mrf.mxu0
        %v2467 = vadd.f32 0.0, %v2466
        %v2468 = vpop.f32.mrf.mxu0
        %2469 = vmatprep.mubr.bf16.mxu0 0
        %2470 = vmatmul.mubr.bf16.gmra.mxu0 %v2396
        %v2471 = vpop.f32.mrf.mxu0
        %v2472 = vadd.f32 0.0, %v2471
        %v2473 = vpop.f32.mrf.mxu0
        %v2474 = vpop.f32.mrf.mxu0
        %v2475 = vadd.f32 0.0, %v2474
        %v2476 = vpop.f32.mrf.mxu0
        %2477 = vdwg.mxu0
        %v2478 = vand.u32 %v899, 3
        %v2479 = vand.u32 %v900, 3
        %vm2480 = vcmp.ge.s32.totalorder %v899, 4
        %vm2481 = vcmp.ge.s32.totalorder %v900, 4
        %vm2482 = vcmp.ge.s32.totalorder %v2478, 1
        %vm2483 = vcmp.ge.s32.totalorder %v2479, 1
        %vm2484 = vmand %vm2480, %vm2482
        %vm2485 = vmand %vm2481, %vm2483
        %vm2489 = vcmask 1044480
        %v2490 = vrot.slane %v2467, 3
        %v2491 = vrot.slane %v2472, 3
        %v2492 = vsel %vm2489, %v2490, %v2491
        %v2493 = vrot.slane %v2475, 3
        %v2494 = vsel %vm2489, %v2491, %v2493
        %v2497 = vsel %vm2484, %v2492, 0.0
        %v2498 = vsel %vm2485, %v2494, 0.0
        %v2499 = vpack.c.bf16 %v2498, %v2497
        %v2500 = vld [vmem:[%s6] sm:$0xf]
        %v2501 = vld [vmem:[%s6 + $0x4] sm:$0xf]
        %v2502 = vld [vmem:[%s6 + $0x8] sm:$0xf]
        %v2503 = vld [vmem:[%s6 + $0xc] sm:$0xf]
        %v2504 = vld [vmem:[%s6 + $0x10] sm:$0xf]
        %v2505 = vld [vmem:[%s6 + $0x14] sm:$0xf]
        %v2506 = vld [vmem:[%s6 + $0x18] sm:$0xf]
        %v2507 = vld [vmem:[%s6 + $0x1c] sm:$0xf]
        %v2508 = vld [vmem:[%s6 + $0x20] sm:$0xf]
        %v2509 = vld [vmem:[%s6 + $0x24] sm:$0xf]
        %v2510 = vld [vmem:[%s6 + $0x28] sm:$0xf]
        %v2511 = vld [vmem:[%s6 + $0x2c] sm:$0xf]
        %v2512 = vld [vmem:[%s6 + $0x30] sm:$0xf]
        %v2513 = vld [vmem:[%s6 + $0x34] sm:$0xf]
        %v2514 = vld [vmem:[%s6 + $0x38] sm:$0xf]
        %v2515 = vld [vmem:[%s6 + $0x3c] sm:$0xf]
        %vm2519 = vcmask 1043456
        %v2520 = vrot.slane %v2456, 4
        %v2521 = vrot.slane %v2459, 4
        %v2522 = vsel %vm2519, %v2520, %v2521
        %v2523 = vrot.slane %v2464, 4
        %v2524 = vsel %vm2519, %v2521, %v2523
        %v2527 = vsel %vm2480, %v2522, 0.0
        %v2528 = vsel %vm2481, %v2524, 0.0
        %v2529 = vpack.c.bf16 %v2528, %v2527
        %s2530 = scalar_lea.vmem %s6, 64
        %v2531 = vld [vmem:[%s2530] sm:$0xf]
        %v2532 = vld [vmem:[%s2530 + $0x4] sm:$0xf]
        %v2533 = vld [vmem:[%s2530 + $0x8] sm:$0xf]
        %v2534 = vld [vmem:[%s2530 + $0xc] sm:$0xf]
        %v2535 = vld [vmem:[%s2530 + $0x10] sm:$0xf]
        %v2536 = vld [vmem:[%s2530 + $0x14] sm:$0xf]
        %v2537 = vld [vmem:[%s2530 + $0x18] sm:$0xf]
        %v2538 = vld [vmem:[%s2530 + $0x1c] sm:$0xf]
        %v2539 = vld [vmem:[%s2530 + $0x20] sm:$0xf]
        %v2540 = vld [vmem:[%s2530 + $0x24] sm:$0xf]
        %v2541 = vld [vmem:[%s2530 + $0x28] sm:$0xf]
        %v2542 = vld [vmem:[%s2530 + $0x2c] sm:$0xf]
        %v2543 = vld [vmem:[%s2530 + $0x30] sm:$0xf]
        %v2544 = vld [vmem:[%s2530 + $0x34] sm:$0xf]
        %v2545 = vld [vmem:[%s2530 + $0x38] sm:$0xf]
        %v2546 = vld [vmem:[%s2530 + $0x3c] sm:$0xf]
        %v2563 = vunpack.c.l.b16 %v2531
        %v2564 = vunpack.c.l.b16 %v2532
        %v2565 = vunpack.c.l.b16 %v2533
        %v2566 = vunpack.c.l.b16 %v2534
        %v2567 = vunpack.c.l.b16 %v2535
        %v2568 = vunpack.c.l.b16 %v2536
        %v2569 = vunpack.c.l.b16 %v2537
        %v2570 = vunpack.c.l.b16 %v2538
        %v2571 = vunpack.c.l.b16 %v2539
        %v2572 = vunpack.c.l.b16 %v2540
        %v2573 = vunpack.c.l.b16 %v2541
        %v2574 = vunpack.c.l.b16 %v2542
        %v2575 = vunpack.c.l.b16 %v2543
        %v2576 = vunpack.c.l.b16 %v2544
        %v2577 = vunpack.c.l.b16 %v2545
        %v2578 = vunpack.c.l.b16 %v2546
        %v2579 = vpack.c.b16 %v2564, %v2563
        %v2580 = vpack.c.b16 %v2566, %v2565
        %v2581 = vpack.c.b16 %v2568, %v2567
        %v2582 = vpack.c.b16 %v2570, %v2569
        %v2583 = vpack.c.b16 %v2572, %v2571
        %v2584 = vpack.c.b16 %v2574, %v2573
        %v2585 = vpack.c.b16 %v2576, %v2575
        %v2586 = vpack.c.b16 %v2578, %v2577
        %2595 = vmatprep.subr.bf16.mxu0 0
        %2596 = vmatpush1.bf16.msra.mxu0 %v2586
        %2597 = vmatprep.subr.bf16.mxu0 0
        %2598 = vmatpush1.bf16.msra.mxu0 %v2585
        %2599 = vmatprep.subr.bf16.mxu0 0
        %2600 = vmatpush1.bf16.msra.mxu0 %v2584
        %2601 = vmatprep.subr.bf16.mxu0 0
        %2602 = vmatpush1.bf16.msra.mxu0 %v2583
        %2603 = vmatprep.subr.bf16.mxu0 0
        %2604 = vmatpush1.bf16.msra.mxu0 %v2582
        %2605 = vmatprep.subr.bf16.mxu0 0
        %2606 = vmatpush1.bf16.msra.mxu0 %v2581
        %2607 = vmatprep.subr.bf16.mxu0 0
        %2608 = vmatpush1.bf16.msra.mxu0 %v2580
        %2609 = vmatprep.subr.bf16.mxu0 0
        %2610 = vmatpush1.bf16.msra.mxu0 %v2579
        %2611 = vmatprep.subr.bf16.mxu0 0
        %2612 = vmatpush2.bf16.msra.mxu0 0
        %2613 = vmatprep.subr.bf16.mxu0 0
        %2614 = vmatpush2.bf16.msra.mxu0 0
        %2615 = vmatprep.subr.bf16.mxu0 0
        %2616 = vmatpush2.bf16.msra.mxu0 0
        %2617 = vmatprep.subr.bf16.mxu0 0
        %2618 = vmatpush2.bf16.msra.mxu0 0
        %2619 = vmatprep.subr.bf16.mxu0 0
        %2620 = vmatpush2.bf16.msra.mxu0 0
        %2621 = vmatprep.subr.bf16.mxu0 0
        %2622 = vmatpush2.bf16.msra.mxu0 0
        %2623 = vmatprep.subr.bf16.mxu0 0
        %2624 = vmatpush2.bf16.msra.mxu0 0
        %2625 = vmatprep.subr.bf16.mxu0 0
        %2626 = vmatpush2.bf16.msra.mxu0 0
        %2627 = vmatprep.mubr.bf16.mxu0 0
        %2628 = vmatmul.mubr.bf16.gmra.mxu0 %v2529
        %v2629 = vpop.f32.mrf.mxu0
        %v2630 = vadd.f32 0.0, %v2629
        %v2631 = vpop.f32.mrf.mxu0
        %v2632 = vpop.f32.mrf.mxu0
        %v2633 = vadd.f32 0.0, %v2632
        %v2634 = vpop.f32.mrf.mxu0
        %2635 = vdwg.mxu0
        %v2652 = vunpack.c.l.b16 %v2500
        %v2653 = vunpack.c.l.b16 %v2501
        %v2654 = vunpack.c.l.b16 %v2502
        %v2655 = vunpack.c.l.b16 %v2503
        %v2656 = vunpack.c.l.b16 %v2504
        %v2657 = vunpack.c.l.b16 %v2505
        %v2658 = vunpack.c.l.b16 %v2506
        %v2659 = vunpack.c.l.b16 %v2507
        %v2660 = vunpack.c.l.b16 %v2508
        %v2661 = vunpack.c.l.b16 %v2509
        %v2662 = vunpack.c.l.b16 %v2510
        %v2663 = vunpack.c.l.b16 %v2511
        %v2664 = vunpack.c.l.b16 %v2512
        %v2665 = vunpack.c.l.b16 %v2513
        %v2666 = vunpack.c.l.b16 %v2514
        %v2667 = vunpack.c.l.b16 %v2515
        %v2668 = vpack.c.b16 %v2653, %v2652
        %v2669 = vpack.c.b16 %v2655, %v2654
        %v2670 = vpack.c.b16 %v2657, %v2656
        %v2671 = vpack.c.b16 %v2659, %v2658
        %v2672 = vpack.c.b16 %v2661, %v2660
        %v2673 = vpack.c.b16 %v2663, %v2662
        %v2674 = vpack.c.b16 %v2665, %v2664
        %v2675 = vpack.c.b16 %v2667, %v2666
        %2684 = vmatprep.subr.bf16.mxu0 0
        %2685 = vmatpush1.bf16.msra.mxu0 %v2675
        %2686 = vmatprep.subr.bf16.mxu0 0
        %2687 = vmatpush1.bf16.msra.mxu0 %v2674
        %2688 = vmatprep.subr.bf16.mxu0 0
        %2689 = vmatpush1.bf16.msra.mxu0 %v2673
        %2690 = vmatprep.subr.bf16.mxu0 0
        %2691 = vmatpush1.bf16.msra.mxu0 %v2672
        %2692 = vmatprep.subr.bf16.mxu0 0
        %2693 = vmatpush1.bf16.msra.mxu0 %v2671
        %2694 = vmatprep.subr.bf16.mxu0 0
        %2695 = vmatpush1.bf16.msra.mxu0 %v2670
        %2696 = vmatprep.subr.bf16.mxu0 0
        %2697 = vmatpush1.bf16.msra.mxu0 %v2669
        %2698 = vmatprep.subr.bf16.mxu0 0
        %2699 = vmatpush1.bf16.msra.mxu0 %v2668
        %2700 = vmatprep.subr.bf16.mxu0 0
        %2701 = vmatpush2.bf16.msra.mxu0 0
        %2702 = vmatprep.subr.bf16.mxu0 0
        %2703 = vmatpush2.bf16.msra.mxu0 0
        %2704 = vmatprep.subr.bf16.mxu0 0
        %2705 = vmatpush2.bf16.msra.mxu0 0
        %2706 = vmatprep.subr.bf16.mxu0 0
        %2707 = vmatpush2.bf16.msra.mxu0 0
        %2708 = vmatprep.subr.bf16.mxu0 0
        %2709 = vmatpush2.bf16.msra.mxu0 0
        %2710 = vmatprep.subr.bf16.mxu0 0
        %2711 = vmatpush2.bf16.msra.mxu0 0
        %2712 = vmatprep.subr.bf16.mxu0 0
        %2713 = vmatpush2.bf16.msra.mxu0 0
        %2714 = vmatprep.subr.bf16.mxu0 0
        %2715 = vmatpush2.bf16.msra.mxu0 0
        %2716 = vmatprep.mubr.bf16.mxu0 0
        %2717 = vmatmul.mubr.bf16.gmra.mxu0 %v2499
        %v2718 = vpop.f32.mrf.mxu0
        %v2719 = vadd.f32 %v2630, %v2718
        %v2720 = vpop.f32.mrf.mxu0
        %v2721 = vpop.f32.mrf.mxu0
        %v2722 = vadd.f32 %v2633, %v2721
        %v2723 = vpop.f32.mrf.mxu0
        %2724 = vdwg.mxu0
        %v2725 = vrot.slane %v2467, 4
        %v2726 = vrot.slane %v2472, 4
        %v2727 = vsel %vm2519, %v2725, %v2726
        %v2728 = vrot.slane %v2475, 4
        %v2729 = vsel %vm2519, %v2726, %v2728
        %v2732 = vsel %vm2480, %v2727, 0.0
        %v2733 = vsel %vm2481, %v2729, 0.0
        %v2734 = vpack.c.bf16 %v2733, %v2732
        %s2735 = scalar_lea.vmem %s6, 128
        %v2736 = vld [vmem:[%s2735] sm:$0xf]
        %v2737 = vld [vmem:[%s2735 + $0x4] sm:$0xf]
        %v2738 = vld [vmem:[%s2735 + $0x8] sm:$0xf]
        %v2739 = vld [vmem:[%s2735 + $0xc] sm:$0xf]
        %v2740 = vld [vmem:[%s2735 + $0x10] sm:$0xf]
        %v2741 = vld [vmem:[%s2735 + $0x14] sm:$0xf]
        %v2742 = vld [vmem:[%s2735 + $0x18] sm:$0xf]
        %v2743 = vld [vmem:[%s2735 + $0x1c] sm:$0xf]
        %v2744 = vld [vmem:[%s2735 + $0x20] sm:$0xf]
        %v2745 = vld [vmem:[%s2735 + $0x24] sm:$0xf]
        %v2746 = vld [vmem:[%s2735 + $0x28] sm:$0xf]
        %v2747 = vld [vmem:[%s2735 + $0x2c] sm:$0xf]
        %v2748 = vld [vmem:[%s2735 + $0x30] sm:$0xf]
        %v2749 = vld [vmem:[%s2735 + $0x34] sm:$0xf]
        %v2750 = vld [vmem:[%s2735 + $0x38] sm:$0xf]
        %v2751 = vld [vmem:[%s2735 + $0x3c] sm:$0xf]
        %v2768 = vunpack.c.l.b16 %v2736
        %v2769 = vunpack.c.l.b16 %v2737
        %v2770 = vunpack.c.l.b16 %v2738
        %v2771 = vunpack.c.l.b16 %v2739
        %v2772 = vunpack.c.l.b16 %v2740
        %v2773 = vunpack.c.l.b16 %v2741
        %v2774 = vunpack.c.l.b16 %v2742
        %v2775 = vunpack.c.l.b16 %v2743
        %v2776 = vunpack.c.l.b16 %v2744
        %v2777 = vunpack.c.l.b16 %v2745
        %v2778 = vunpack.c.l.b16 %v2746
        %v2779 = vunpack.c.l.b16 %v2747
        %v2780 = vunpack.c.l.b16 %v2748
        %v2781 = vunpack.c.l.b16 %v2749
        %v2782 = vunpack.c.l.b16 %v2750
        %v2783 = vunpack.c.l.b16 %v2751
        %v2784 = vpack.c.b16 %v2769, %v2768
        %v2785 = vpack.c.b16 %v2771, %v2770
        %v2786 = vpack.c.b16 %v2773, %v2772
        %v2787 = vpack.c.b16 %v2775, %v2774
        %v2788 = vpack.c.b16 %v2777, %v2776
        %v2789 = vpack.c.b16 %v2779, %v2778
        %v2790 = vpack.c.b16 %v2781, %v2780
        %v2791 = vpack.c.b16 %v2783, %v2782
        %2800 = vmatprep.subr.bf16.mxu0 0
        %2801 = vmatpush1.bf16.msra.mxu0 %v2791
        %2802 = vmatprep.subr.bf16.mxu0 0
        %2803 = vmatpush1.bf16.msra.mxu0 %v2790
        %2804 = vmatprep.subr.bf16.mxu0 0
        %2805 = vmatpush1.bf16.msra.mxu0 %v2789
        %2806 = vmatprep.subr.bf16.mxu0 0
        %2807 = vmatpush1.bf16.msra.mxu0 %v2788
        %2808 = vmatprep.subr.bf16.mxu0 0
        %2809 = vmatpush1.bf16.msra.mxu0 %v2787
        %2810 = vmatprep.subr.bf16.mxu0 0
        %2811 = vmatpush1.bf16.msra.mxu0 %v2786
        %2812 = vmatprep.subr.bf16.mxu0 0
        %2813 = vmatpush1.bf16.msra.mxu0 %v2785
        %2814 = vmatprep.subr.bf16.mxu0 0
        %2815 = vmatpush1.bf16.msra.mxu0 %v2784
        %2816 = vmatprep.subr.bf16.mxu0 0
        %2817 = vmatpush2.bf16.msra.mxu0 0
        %2818 = vmatprep.subr.bf16.mxu0 0
        %2819 = vmatpush2.bf16.msra.mxu0 0
        %2820 = vmatprep.subr.bf16.mxu0 0
        %2821 = vmatpush2.bf16.msra.mxu0 0
        %2822 = vmatprep.subr.bf16.mxu0 0
        %2823 = vmatpush2.bf16.msra.mxu0 0
        %2824 = vmatprep.subr.bf16.mxu0 0
        %2825 = vmatpush2.bf16.msra.mxu0 0
        %2826 = vmatprep.subr.bf16.mxu0 0
        %2827 = vmatpush2.bf16.msra.mxu0 0
        %2828 = vmatprep.subr.bf16.mxu0 0
        %2829 = vmatpush2.bf16.msra.mxu0 0
        %2830 = vmatprep.subr.bf16.mxu0 0
        %2831 = vmatpush2.bf16.msra.mxu0 0
        %2832 = vmatprep.mubr.bf16.mxu0 0
        %2833 = vmatmul.mubr.bf16.gmra.mxu0 %v2734
        %v2834 = vpop.f32.mrf.mxu0
        %v2835 = vadd.f32 0.0, %v2834
        %v2836 = vpop.f32.mrf.mxu0
        %v2837 = vpop.f32.mrf.mxu0
        %v2838 = vadd.f32 0.0, %v2837
        %v2839 = vpop.f32.mrf.mxu0
        %2840 = vdwg.mxu0
        %v2841 = vadd.f32 %v2719, %v2835
        %v2842 = vadd.f32 %v2722, %v2838
        %v2846 = vrot.slane %v2443, 7
        %v2847 = vrot.slane %v2448, 7
        %v2848 = vsel %vm948, %v2846, %v2847
        %v2849 = vrot.slane %v2451, 7
        %v2850 = vsel %vm948, %v2847, %v2849
        %v2853 = vsel %vm2482, %v2848, 0.0
        %v2854 = vsel %vm2483, %v2850, 0.0
        %v2855 = vpack.c.bf16 %v2854, %v2853
        %s2856 = scalar_lea.vmem %s6, 192
        %v2857 = vld [vmem:[%s2856] sm:$0xf]
        %v2858 = vld [vmem:[%s2856 + $0x4] sm:$0xf]
        %v2859 = vld [vmem:[%s2856 + $0x8] sm:$0xf]
        %v2860 = vld [vmem:[%s2856 + $0xc] sm:$0xf]
        %v2861 = vld [vmem:[%s2856 + $0x10] sm:$0xf]
        %v2862 = vld [vmem:[%s2856 + $0x14] sm:$0xf]
        %v2863 = vld [vmem:[%s2856 + $0x18] sm:$0xf]
        %v2864 = vld [vmem:[%s2856 + $0x1c] sm:$0xf]
        %v2865 = vld [vmem:[%s2856 + $0x20] sm:$0xf]
        %v2866 = vld [vmem:[%s2856 + $0x24] sm:$0xf]
        %v2867 = vld [vmem:[%s2856 + $0x28] sm:$0xf]
        %v2868 = vld [vmem:[%s2856 + $0x2c] sm:$0xf]
        %v2869 = vld [vmem:[%s2856 + $0x30] sm:$0xf]
        %v2870 = vld [vmem:[%s2856 + $0x34] sm:$0xf]
        %v2871 = vld [vmem:[%s2856 + $0x38] sm:$0xf]
        %v2872 = vld [vmem:[%s2856 + $0x3c] sm:$0xf]
        %v2889 = vunpack.c.l.b16 %v2857
        %v2890 = vunpack.c.l.b16 %v2858
        %v2891 = vunpack.c.l.b16 %v2859
        %v2892 = vunpack.c.l.b16 %v2860
        %v2893 = vunpack.c.l.b16 %v2861
        %v2894 = vunpack.c.l.b16 %v2862
        %v2895 = vunpack.c.l.b16 %v2863
        %v2896 = vunpack.c.l.b16 %v2864
        %v2897 = vunpack.c.l.b16 %v2865
        %v2898 = vunpack.c.l.b16 %v2866
        %v2899 = vunpack.c.l.b16 %v2867
        %v2900 = vunpack.c.l.b16 %v2868
        %v2901 = vunpack.c.l.b16 %v2869
        %v2902 = vunpack.c.l.b16 %v2870
        %v2903 = vunpack.c.l.b16 %v2871
        %v2904 = vunpack.c.l.b16 %v2872
        %v2905 = vpack.c.b16 %v2890, %v2889
        %v2906 = vpack.c.b16 %v2892, %v2891
        %v2907 = vpack.c.b16 %v2894, %v2893
        %v2908 = vpack.c.b16 %v2896, %v2895
        %v2909 = vpack.c.b16 %v2898, %v2897
        %v2910 = vpack.c.b16 %v2900, %v2899
        %v2911 = vpack.c.b16 %v2902, %v2901
        %v2912 = vpack.c.b16 %v2904, %v2903
        %2921 = vmatprep.subr.bf16.mxu0 0
        %2922 = vmatpush1.bf16.msra.mxu0 %v2912
        %2923 = vmatprep.subr.bf16.mxu0 0
        %2924 = vmatpush1.bf16.msra.mxu0 %v2911
        %2925 = vmatprep.subr.bf16.mxu0 0
        %2926 = vmatpush1.bf16.msra.mxu0 %v2910
        %2927 = vmatprep.subr.bf16.mxu0 0
        %2928 = vmatpush1.bf16.msra.mxu0 %v2909
        %2929 = vmatprep.subr.bf16.mxu0 0
        %2930 = vmatpush1.bf16.msra.mxu0 %v2908
        %2931 = vmatprep.subr.bf16.mxu0 0
        %2932 = vmatpush1.bf16.msra.mxu0 %v2907
        %2933 = vmatprep.subr.bf16.mxu0 0
        %2934 = vmatpush1.bf16.msra.mxu0 %v2906
        %2935 = vmatprep.subr.bf16.mxu0 0
        %2936 = vmatpush1.bf16.msra.mxu0 %v2905
        %2937 = vmatprep.subr.bf16.mxu0 0
        %2938 = vmatpush2.bf16.msra.mxu0 0
        %2939 = vmatprep.subr.bf16.mxu0 0
        %2940 = vmatpush2.bf16.msra.mxu0 0
        %2941 = vmatprep.subr.bf16.mxu0 0
        %2942 = vmatpush2.bf16.msra.mxu0 0
        %2943 = vmatprep.subr.bf16.mxu0 0
        %2944 = vmatpush2.bf16.msra.mxu0 0
        %2945 = vmatprep.subr.bf16.mxu0 0
        %2946 = vmatpush2.bf16.msra.mxu0 0
        %2947 = vmatprep.subr.bf16.mxu0 0
        %2948 = vmatpush2.bf16.msra.mxu0 0
        %2949 = vmatprep.subr.bf16.mxu0 0
        %2950 = vmatpush2.bf16.msra.mxu0 0
        %2951 = vmatprep.subr.bf16.mxu0 0
        %2952 = vmatpush2.bf16.msra.mxu0 0
        %2953 = vmatprep.mubr.bf16.mxu0 0
        %2954 = vmatmul.mubr.bf16.gmra.mxu0 %v2855
        %v2955 = vpop.f32.mrf.mxu0
        %v2956 = vadd.f32 0.0, %v2955
        %v2957 = vpop.f32.mrf.mxu0
        %v2958 = vpop.f32.mrf.mxu0
        %v2959 = vadd.f32 0.0, %v2958
        %v2960 = vpop.f32.mrf.mxu0
        %2961 = vdwg.mxu0
        %v2962 = vadd.f32 %v2841, %v2956
        %v2963 = vadd.f32 %v2842, %v2959
        %v2964 = vpack.c.bf16 %v2440, %v2435
        %s2965 = scalar_lea.vmem %s6, 256
        %v2966 = vld [vmem:[%s2965] sm:$0xf]
        %v2967 = vld [vmem:[%s2965 + $0x4] sm:$0xf]
        %v2968 = vld [vmem:[%s2965 + $0x8] sm:$0xf]
        %v2969 = vld [vmem:[%s2965 + $0xc] sm:$0xf]
        %v2970 = vld [vmem:[%s2965 + $0x10] sm:$0xf]
        %v2971 = vld [vmem:[%s2965 + $0x14] sm:$0xf]
        %v2972 = vld [vmem:[%s2965 + $0x18] sm:$0xf]
        %v2973 = vld [vmem:[%s2965 + $0x1c] sm:$0xf]
        %v2974 = vld [vmem:[%s2965 + $0x20] sm:$0xf]
        %v2975 = vld [vmem:[%s2965 + $0x24] sm:$0xf]
        %v2976 = vld [vmem:[%s2965 + $0x28] sm:$0xf]
        %v2977 = vld [vmem:[%s2965 + $0x2c] sm:$0xf]
        %v2978 = vld [vmem:[%s2965 + $0x30] sm:$0xf]
        %v2979 = vld [vmem:[%s2965 + $0x34] sm:$0xf]
        %v2980 = vld [vmem:[%s2965 + $0x38] sm:$0xf]
        %v2981 = vld [vmem:[%s2965 + $0x3c] sm:$0xf]
        %v2998 = vunpack.c.l.b16 %v2966
        %v2999 = vunpack.c.l.b16 %v2967
        %v3000 = vunpack.c.l.b16 %v2968
        %v3001 = vunpack.c.l.b16 %v2969
        %v3002 = vunpack.c.l.b16 %v2970
        %v3003 = vunpack.c.l.b16 %v2971
        %v3004 = vunpack.c.l.b16 %v2972
        %v3005 = vunpack.c.l.b16 %v2973
        %v3006 = vunpack.c.l.b16 %v2974
        %v3007 = vunpack.c.l.b16 %v2975
        %v3008 = vunpack.c.l.b16 %v2976
        %v3009 = vunpack.c.l.b16 %v2977
        %v3010 = vunpack.c.l.b16 %v2978
        %v3011 = vunpack.c.l.b16 %v2979
        %v3012 = vunpack.c.l.b16 %v2980
        %v3013 = vunpack.c.l.b16 %v2981
        %v3014 = vpack.c.b16 %v2999, %v2998
        %v3015 = vpack.c.b16 %v3001, %v3000
        %v3016 = vpack.c.b16 %v3003, %v3002
        %v3017 = vpack.c.b16 %v3005, %v3004
        %v3018 = vpack.c.b16 %v3007, %v3006
        %v3019 = vpack.c.b16 %v3009, %v3008
        %v3020 = vpack.c.b16 %v3011, %v3010
        %v3021 = vpack.c.b16 %v3013, %v3012
        %3030 = vmatprep.subr.bf16.mxu0 0
        %3031 = vmatpush1.bf16.msra.mxu0 %v3021
        %3032 = vmatprep.subr.bf16.mxu0 0
        %3033 = vmatpush1.bf16.msra.mxu0 %v3020
        %3034 = vmatprep.subr.bf16.mxu0 0
        %3035 = vmatpush1.bf16.msra.mxu0 %v3019
        %3036 = vmatprep.subr.bf16.mxu0 0
        %3037 = vmatpush1.bf16.msra.mxu0 %v3018
        %3038 = vmatprep.subr.bf16.mxu0 0
        %3039 = vmatpush1.bf16.msra.mxu0 %v3017
        %3040 = vmatprep.subr.bf16.mxu0 0
        %3041 = vmatpush1.bf16.msra.mxu0 %v3016
        %3042 = vmatprep.subr.bf16.mxu0 0
        %3043 = vmatpush1.bf16.msra.mxu0 %v3015
        %3044 = vmatprep.subr.bf16.mxu0 0
        %3045 = vmatpush1.bf16.msra.mxu0 %v3014
        %3046 = vmatprep.subr.bf16.mxu0 0
        %3047 = vmatpush2.bf16.msra.mxu0 0
        %3048 = vmatprep.subr.bf16.mxu0 0
        %3049 = vmatpush2.bf16.msra.mxu0 0
        %3050 = vmatprep.subr.bf16.mxu0 0
        %3051 = vmatpush2.bf16.msra.mxu0 0
        %3052 = vmatprep.subr.bf16.mxu0 0
        %3053 = vmatpush2.bf16.msra.mxu0 0
        %3054 = vmatprep.subr.bf16.mxu0 0
        %3055 = vmatpush2.bf16.msra.mxu0 0
        %3056 = vmatprep.subr.bf16.mxu0 0
        %3057 = vmatpush2.bf16.msra.mxu0 0
        %3058 = vmatprep.subr.bf16.mxu0 0
        %3059 = vmatpush2.bf16.msra.mxu0 0
        %3060 = vmatprep.subr.bf16.mxu0 0
        %3061 = vmatpush2.bf16.msra.mxu0 0
        %3062 = vmatprep.mubr.bf16.mxu0 0
        %3063 = vmatmul.mubr.bf16.gmra.mxu0 %v2964
        %v3064 = vpop.f32.mrf.mxu0
        %v3065 = vadd.f32 0.0, %v3064
        %v3066 = vpop.f32.mrf.mxu0
        %v3067 = vpop.f32.mrf.mxu0
        %v3068 = vadd.f32 0.0, %v3067
        %v3069 = vpop.f32.mrf.mxu0
        %3070 = vdwg.mxu0
        %v3071 = vadd.f32 %v2962, %v3065
        %v3072 = vadd.f32 %v2963, %v3068
        %v3073 = vpack.c.bf16 %v2451, %v2448
        %s3074 = scalar_lea.vmem %s6, 320
        %v3075 = vld [vmem:[%s3074] sm:$0xf]
        %v3076 = vld [vmem:[%s3074 + $0x4] sm:$0xf]
        %v3077 = vld [vmem:[%s3074 + $0x8] sm:$0xf]
        %v3078 = vld [vmem:[%s3074 + $0xc] sm:$0xf]
        %v3079 = vld [vmem:[%s3074 + $0x10] sm:$0xf]
        %v3080 = vld [vmem:[%s3074 + $0x14] sm:$0xf]
        %v3081 = vld [vmem:[%s3074 + $0x18] sm:$0xf]
        %v3082 = vld [vmem:[%s3074 + $0x1c] sm:$0xf]
        %v3083 = vld [vmem:[%s3074 + $0x20] sm:$0xf]
        %v3084 = vld [vmem:[%s3074 + $0x24] sm:$0xf]
        %v3085 = vld [vmem:[%s3074 + $0x28] sm:$0xf]
        %v3086 = vld [vmem:[%s3074 + $0x2c] sm:$0xf]
        %v3087 = vld [vmem:[%s3074 + $0x30] sm:$0xf]
        %v3088 = vld [vmem:[%s3074 + $0x34] sm:$0xf]
        %v3089 = vld [vmem:[%s3074 + $0x38] sm:$0xf]
        %v3090 = vld [vmem:[%s3074 + $0x3c] sm:$0xf]
        %v3107 = vunpack.c.l.b16 %v3075
        %v3108 = vunpack.c.l.b16 %v3076
        %v3109 = vunpack.c.l.b16 %v3077
        %v3110 = vunpack.c.l.b16 %v3078
        %v3111 = vunpack.c.l.b16 %v3079
        %v3112 = vunpack.c.l.b16 %v3080
        %v3113 = vunpack.c.l.b16 %v3081
        %v3114 = vunpack.c.l.b16 %v3082
        %v3115 = vunpack.c.l.b16 %v3083
        %v3116 = vunpack.c.l.b16 %v3084
        %v3117 = vunpack.c.l.b16 %v3085
        %v3118 = vunpack.c.l.b16 %v3086
        %v3119 = vunpack.c.l.b16 %v3087
        %v3120 = vunpack.c.l.b16 %v3088
        %v3121 = vunpack.c.l.b16 %v3089
        %v3122 = vunpack.c.l.b16 %v3090
        %v3123 = vpack.c.b16 %v3108, %v3107
        %v3124 = vpack.c.b16 %v3110, %v3109
        %v3125 = vpack.c.b16 %v3112, %v3111
        %v3126 = vpack.c.b16 %v3114, %v3113
        %v3127 = vpack.c.b16 %v3116, %v3115
        %v3128 = vpack.c.b16 %v3118, %v3117
        %v3129 = vpack.c.b16 %v3120, %v3119
        %v3130 = vpack.c.b16 %v3122, %v3121
        %3139 = vmatprep.subr.bf16.mxu0 0
        %3140 = vmatpush1.bf16.msra.mxu0 %v3130
        %3141 = vmatprep.subr.bf16.mxu0 0
        %3142 = vmatpush1.bf16.msra.mxu0 %v3129
        %3143 = vmatprep.subr.bf16.mxu0 0
        %3144 = vmatpush1.bf16.msra.mxu0 %v3128
        %3145 = vmatprep.subr.bf16.mxu0 0
        %3146 = vmatpush1.bf16.msra.mxu0 %v3127
        %3147 = vmatprep.subr.bf16.mxu0 0
        %3148 = vmatpush1.bf16.msra.mxu0 %v3126
        %3149 = vmatprep.subr.bf16.mxu0 0
        %3150 = vmatpush1.bf16.msra.mxu0 %v3125
        %3151 = vmatprep.subr.bf16.mxu0 0
        %3152 = vmatpush1.bf16.msra.mxu0 %v3124
        %3153 = vmatprep.subr.bf16.mxu0 0
        %3154 = vmatpush1.bf16.msra.mxu0 %v3123
        %3155 = vmatprep.subr.bf16.mxu0 0
        %3156 = vmatpush2.bf16.msra.mxu0 0
        %3157 = vmatprep.subr.bf16.mxu0 0
        %3158 = vmatpush2.bf16.msra.mxu0 0
        %3159 = vmatprep.subr.bf16.mxu0 0
        %3160 = vmatpush2.bf16.msra.mxu0 0
        %3161 = vmatprep.subr.bf16.mxu0 0
        %3162 = vmatpush2.bf16.msra.mxu0 0
        %3163 = vmatprep.subr.bf16.mxu0 0
        %3164 = vmatpush2.bf16.msra.mxu0 0
        %3165 = vmatprep.subr.bf16.mxu0 0
        %3166 = vmatpush2.bf16.msra.mxu0 0
        %3167 = vmatprep.subr.bf16.mxu0 0
        %3168 = vmatpush2.bf16.msra.mxu0 0
        %3169 = vmatprep.subr.bf16.mxu0 0
        %3170 = vmatpush2.bf16.msra.mxu0 0
        %3171 = vmatprep.mubr.bf16.mxu0 0
        %3172 = vmatmul.mubr.bf16.gmra.mxu0 %v3073
        %v3173 = vpop.f32.mrf.mxu0
        %v3174 = vadd.f32 0.0, %v3173
        %v3175 = vpop.f32.mrf.mxu0
        %v3176 = vpop.f32.mrf.mxu0
        %v3177 = vadd.f32 0.0, %v3176
        %v3178 = vpop.f32.mrf.mxu0
        %3179 = vdwg.mxu0
        %v3180 = vadd.f32 %v3071, %v3174
        %v3181 = vadd.f32 %v3072, %v3177
        %v3182 = vrot.slane %v2467, 7
        %v3183 = vrot.slane %v2472, 7
        %v3184 = vsel %vm948, %v3182, %v3183
        %v3185 = vrot.slane %v2475, 7
        %v3186 = vsel %vm948, %v3183, %v3185
        %v3189 = vsel %vm2482, %v3184, 0.0
        %v3190 = vsel %vm2483, %v3186, 0.0
        %v3191 = vpack.c.bf16 %v3190, %v3189
        %s3192 = scalar_lea.vmem %s6, 384
        %v3193 = vld [vmem:[%s3192] sm:$0xf]
        %v3194 = vld [vmem:[%s3192 + $0x4] sm:$0xf]
        %v3195 = vld [vmem:[%s3192 + $0x8] sm:$0xf]
        %v3196 = vld [vmem:[%s3192 + $0xc] sm:$0xf]
        %v3197 = vld [vmem:[%s3192 + $0x10] sm:$0xf]
        %v3198 = vld [vmem:[%s3192 + $0x14] sm:$0xf]
        %v3199 = vld [vmem:[%s3192 + $0x18] sm:$0xf]
        %v3200 = vld [vmem:[%s3192 + $0x1c] sm:$0xf]
        %v3201 = vld [vmem:[%s3192 + $0x20] sm:$0xf]
        %v3202 = vld [vmem:[%s3192 + $0x24] sm:$0xf]
        %v3203 = vld [vmem:[%s3192 + $0x28] sm:$0xf]
        %v3204 = vld [vmem:[%s3192 + $0x2c] sm:$0xf]
        %v3205 = vld [vmem:[%s3192 + $0x30] sm:$0xf]
        %v3206 = vld [vmem:[%s3192 + $0x34] sm:$0xf]
        %v3207 = vld [vmem:[%s3192 + $0x38] sm:$0xf]
        %v3208 = vld [vmem:[%s3192 + $0x3c] sm:$0xf]
        %v3225 = vunpack.c.l.b16 %v3193
        %v3226 = vunpack.c.l.b16 %v3194
        %v3227 = vunpack.c.l.b16 %v3195
        %v3228 = vunpack.c.l.b16 %v3196
        %v3229 = vunpack.c.l.b16 %v3197
        %v3230 = vunpack.c.l.b16 %v3198
        %v3231 = vunpack.c.l.b16 %v3199
        %v3232 = vunpack.c.l.b16 %v3200
        %v3233 = vunpack.c.l.b16 %v3201
        %v3234 = vunpack.c.l.b16 %v3202
        %v3235 = vunpack.c.l.b16 %v3203
        %v3236 = vunpack.c.l.b16 %v3204
        %v3237 = vunpack.c.l.b16 %v3205
        %v3238 = vunpack.c.l.b16 %v3206
        %v3239 = vunpack.c.l.b16 %v3207
        %v3240 = vunpack.c.l.b16 %v3208
        %v3241 = vpack.c.b16 %v3226, %v3225
        %v3242 = vpack.c.b16 %v3228, %v3227
        %v3243 = vpack.c.b16 %v3230, %v3229
        %v3244 = vpack.c.b16 %v3232, %v3231
        %v3245 = vpack.c.b16 %v3234, %v3233
        %v3246 = vpack.c.b16 %v3236, %v3235
        %v3247 = vpack.c.b16 %v3238, %v3237
        %v3248 = vpack.c.b16 %v3240, %v3239
        %3257 = vmatprep.subr.bf16.mxu0 0
        %3258 = vmatpush1.bf16.msra.mxu0 %v3248
        %3259 = vmatprep.subr.bf16.mxu0 0
        %3260 = vmatpush1.bf16.msra.mxu0 %v3247
        %3261 = vmatprep.subr.bf16.mxu0 0
        %3262 = vmatpush1.bf16.msra.mxu0 %v3246
        %3263 = vmatprep.subr.bf16.mxu0 0
        %3264 = vmatpush1.bf16.msra.mxu0 %v3245
        %3265 = vmatprep.subr.bf16.mxu0 0
        %3266 = vmatpush1.bf16.msra.mxu0 %v3244
        %3267 = vmatprep.subr.bf16.mxu0 0
        %3268 = vmatpush1.bf16.msra.mxu0 %v3243
        %3269 = vmatprep.subr.bf16.mxu0 0
        %3270 = vmatpush1.bf16.msra.mxu0 %v3242
        %3271 = vmatprep.subr.bf16.mxu0 0
        %3272 = vmatpush1.bf16.msra.mxu0 %v3241
        %3273 = vmatprep.subr.bf16.mxu0 0
        %3274 = vmatpush2.bf16.msra.mxu0 0
        %3275 = vmatprep.subr.bf16.mxu0 0
        %3276 = vmatpush2.bf16.msra.mxu0 0
        %3277 = vmatprep.subr.bf16.mxu0 0
        %3278 = vmatpush2.bf16.msra.mxu0 0
        %3279 = vmatprep.subr.bf16.mxu0 0
        %3280 = vmatpush2.bf16.msra.mxu0 0
        %3281 = vmatprep.subr.bf16.mxu0 0
        %3282 = vmatpush2.bf16.msra.mxu0 0
        %3283 = vmatprep.subr.bf16.mxu0 0
        %3284 = vmatpush2.bf16.msra.mxu0 0
        %3285 = vmatprep.subr.bf16.mxu0 0
        %3286 = vmatpush2.bf16.msra.mxu0 0
        %3287 = vmatprep.subr.bf16.mxu0 0
        %3288 = vmatpush2.bf16.msra.mxu0 0
        %3289 = vmatprep.mubr.bf16.mxu0 0
        %3290 = vmatmul.mubr.bf16.gmra.mxu0 %v3191
        %v3291 = vpop.f32.mrf.mxu0
        %v3292 = vadd.f32 0.0, %v3291
        %v3293 = vpop.f32.mrf.mxu0
        %v3294 = vpop.f32.mrf.mxu0
        %v3295 = vadd.f32 0.0, %v3294
        %v3296 = vpop.f32.mrf.mxu0
        %3297 = vdwg.mxu0
        %v3298 = vadd.f32 %v3180, %v3292
        %v3299 = vadd.f32 %v3181, %v3295
        %v3300 = vpack.c.bf16 %v2464, %v2459
        %s3301 = scalar_lea.vmem %s6, 448
        %v3302 = vld [vmem:[%s3301] sm:$0xf]
        %v3303 = vld [vmem:[%s3301 + $0x4] sm:$0xf]
        %v3304 = vld [vmem:[%s3301 + $0x8] sm:$0xf]
        %v3305 = vld [vmem:[%s3301 + $0xc] sm:$0xf]
        %v3306 = vld [vmem:[%s3301 + $0x10] sm:$0xf]
        %v3307 = vld [vmem:[%s3301 + $0x14] sm:$0xf]
        %v3308 = vld [vmem:[%s3301 + $0x18] sm:$0xf]
        %v3309 = vld [vmem:[%s3301 + $0x1c] sm:$0xf]
        %v3310 = vld [vmem:[%s3301 + $0x20] sm:$0xf]
        %v3311 = vld [vmem:[%s3301 + $0x24] sm:$0xf]
        %v3312 = vld [vmem:[%s3301 + $0x28] sm:$0xf]
        %v3313 = vld [vmem:[%s3301 + $0x2c] sm:$0xf]
        %v3314 = vld [vmem:[%s3301 + $0x30] sm:$0xf]
        %v3315 = vld [vmem:[%s3301 + $0x34] sm:$0xf]
        %v3316 = vld [vmem:[%s3301 + $0x38] sm:$0xf]
        %v3317 = vld [vmem:[%s3301 + $0x3c] sm:$0xf]
        %v3334 = vunpack.c.l.b16 %v3302
        %v3335 = vunpack.c.l.b16 %v3303
        %v3336 = vunpack.c.l.b16 %v3304
        %v3337 = vunpack.c.l.b16 %v3305
        %v3338 = vunpack.c.l.b16 %v3306
        %v3339 = vunpack.c.l.b16 %v3307
        %v3340 = vunpack.c.l.b16 %v3308
        %v3341 = vunpack.c.l.b16 %v3309
        %v3342 = vunpack.c.l.b16 %v3310
        %v3343 = vunpack.c.l.b16 %v3311
        %v3344 = vunpack.c.l.b16 %v3312
        %v3345 = vunpack.c.l.b16 %v3313
        %v3346 = vunpack.c.l.b16 %v3314
        %v3347 = vunpack.c.l.b16 %v3315
        %v3348 = vunpack.c.l.b16 %v3316
        %v3349 = vunpack.c.l.b16 %v3317
        %v3350 = vpack.c.b16 %v3335, %v3334
        %v3351 = vpack.c.b16 %v3337, %v3336
        %v3352 = vpack.c.b16 %v3339, %v3338
        %v3353 = vpack.c.b16 %v3341, %v3340
        %v3354 = vpack.c.b16 %v3343, %v3342
        %v3355 = vpack.c.b16 %v3345, %v3344
        %v3356 = vpack.c.b16 %v3347, %v3346
        %v3357 = vpack.c.b16 %v3349, %v3348
        %3366 = vmatprep.subr.bf16.mxu0 0
        %3367 = vmatpush1.bf16.msra.mxu0 %v3357
        %3368 = vmatprep.subr.bf16.mxu0 0
        %3369 = vmatpush1.bf16.msra.mxu0 %v3356
        %3370 = vmatprep.subr.bf16.mxu0 0
        %3371 = vmatpush1.bf16.msra.mxu0 %v3355
        %3372 = vmatprep.subr.bf16.mxu0 0
        %3373 = vmatpush1.bf16.msra.mxu0 %v3354
        %3374 = vmatprep.subr.bf16.mxu0 0
        %3375 = vmatpush1.bf16.msra.mxu0 %v3353
        %3376 = vmatprep.subr.bf16.mxu0 0
        %3377 = vmatpush1.bf16.msra.mxu0 %v3352
        %3378 = vmatprep.subr.bf16.mxu0 0
        %3379 = vmatpush1.bf16.msra.mxu0 %v3351
        %3380 = vmatprep.subr.bf16.mxu0 0
        %3381 = vmatpush1.bf16.msra.mxu0 %v3350
        %3382 = vmatprep.subr.bf16.mxu0 0
        %3383 = vmatpush2.bf16.msra.mxu0 0
        %3384 = vmatprep.subr.bf16.mxu0 0
        %3385 = vmatpush2.bf16.msra.mxu0 0
        %3386 = vmatprep.subr.bf16.mxu0 0
        %3387 = vmatpush2.bf16.msra.mxu0 0
        %3388 = vmatprep.subr.bf16.mxu0 0
        %3389 = vmatpush2.bf16.msra.mxu0 0
        %3390 = vmatprep.subr.bf16.mxu0 0
        %3391 = vmatpush2.bf16.msra.mxu0 0
        %3392 = vmatprep.subr.bf16.mxu0 0
        %3393 = vmatpush2.bf16.msra.mxu0 0
        %3394 = vmatprep.subr.bf16.mxu0 0
        %3395 = vmatpush2.bf16.msra.mxu0 0
        %3396 = vmatprep.subr.bf16.mxu0 0
        %3397 = vmatpush2.bf16.msra.mxu0 0
        %3398 = vmatprep.mubr.bf16.mxu0 0
        %3399 = vmatmul.mubr.bf16.gmra.mxu0 %v3300
        %v3400 = vpop.f32.mrf.mxu0
        %v3401 = vadd.f32 0.0, %v3400
        %v3402 = vpop.f32.mrf.mxu0
        %v3403 = vpop.f32.mrf.mxu0
        %v3404 = vadd.f32 0.0, %v3403
        %v3405 = vpop.f32.mrf.mxu0
        %3406 = vdwg.mxu0
        %v3407 = vadd.f32 %v3298, %v3401
        %v3408 = vadd.f32 %v3299, %v3404
        %v3409 = vpack.c.bf16 %v2475, %v2472
        %s3410 = scalar_lea.vmem %s6, 512
        %v3411 = vld [vmem:[%s3410] sm:$0xf]
        %v3412 = vld [vmem:[%s3410 + $0x4] sm:$0xf]
        %v3413 = vld [vmem:[%s3410 + $0x8] sm:$0xf]
        %v3414 = vld [vmem:[%s3410 + $0xc] sm:$0xf]
        %v3415 = vld [vmem:[%s3410 + $0x10] sm:$0xf]
        %v3416 = vld [vmem:[%s3410 + $0x14] sm:$0xf]
        %v3417 = vld [vmem:[%s3410 + $0x18] sm:$0xf]
        %v3418 = vld [vmem:[%s3410 + $0x1c] sm:$0xf]
        %v3419 = vld [vmem:[%s3410 + $0x20] sm:$0xf]
        %v3420 = vld [vmem:[%s3410 + $0x24] sm:$0xf]
        %v3421 = vld [vmem:[%s3410 + $0x28] sm:$0xf]
        %v3422 = vld [vmem:[%s3410 + $0x2c] sm:$0xf]
        %v3423 = vld [vmem:[%s3410 + $0x30] sm:$0xf]
        %v3424 = vld [vmem:[%s3410 + $0x34] sm:$0xf]
        %v3425 = vld [vmem:[%s3410 + $0x38] sm:$0xf]
        %v3426 = vld [vmem:[%s3410 + $0x3c] sm:$0xf]
        %v3443 = vunpack.c.l.b16 %v3411
        %v3444 = vunpack.c.l.b16 %v3412
        %v3445 = vunpack.c.l.b16 %v3413
        %v3446 = vunpack.c.l.b16 %v3414
        %v3447 = vunpack.c.l.b16 %v3415
        %v3448 = vunpack.c.l.b16 %v3416
        %v3449 = vunpack.c.l.b16 %v3417
        %v3450 = vunpack.c.l.b16 %v3418
        %v3451 = vunpack.c.l.b16 %v3419
        %v3452 = vunpack.c.l.b16 %v3420
        %v3453 = vunpack.c.l.b16 %v3421
        %v3454 = vunpack.c.l.b16 %v3422
        %v3455 = vunpack.c.l.b16 %v3423
        %v3456 = vunpack.c.l.b16 %v3424
        %v3457 = vunpack.c.l.b16 %v3425
        %v3458 = vunpack.c.l.b16 %v3426
        %v3459 = vpack.c.b16 %v3444, %v3443
        %v3460 = vpack.c.b16 %v3446, %v3445
        %v3461 = vpack.c.b16 %v3448, %v3447
        %v3462 = vpack.c.b16 %v3450, %v3449
        %v3463 = vpack.c.b16 %v3452, %v3451
        %v3464 = vpack.c.b16 %v3454, %v3453
        %v3465 = vpack.c.b16 %v3456, %v3455
        %v3466 = vpack.c.b16 %v3458, %v3457
        %3475 = vmatprep.subr.bf16.mxu0 0
        %3476 = vmatpush1.bf16.msra.mxu0 %v3466
        %3477 = vmatprep.subr.bf16.mxu0 0
        %3478 = vmatpush1.bf16.msra.mxu0 %v3465
        %3479 = vmatprep.subr.bf16.mxu0 0
        %3480 = vmatpush1.bf16.msra.mxu0 %v3464
        %3481 = vmatprep.subr.bf16.mxu0 0
        %3482 = vmatpush1.bf16.msra.mxu0 %v3463
        %3483 = vmatprep.subr.bf16.mxu0 0
        %3484 = vmatpush1.bf16.msra.mxu0 %v3462
        %3485 = vmatprep.subr.bf16.mxu0 0
        %3486 = vmatpush1.bf16.msra.mxu0 %v3461
        %3487 = vmatprep.subr.bf16.mxu0 0
        %3488 = vmatpush1.bf16.msra.mxu0 %v3460
        %3489 = vmatprep.subr.bf16.mxu0 0
        %3490 = vmatpush1.bf16.msra.mxu0 %v3459
        %3491 = vmatprep.subr.bf16.mxu0 0
        %3492 = vmatpush2.bf16.msra.mxu0 0
        %3493 = vmatprep.subr.bf16.mxu0 0
        %3494 = vmatpush2.bf16.msra.mxu0 0
        %3495 = vmatprep.subr.bf16.mxu0 0
        %3496 = vmatpush2.bf16.msra.mxu0 0
        %3497 = vmatprep.subr.bf16.mxu0 0
        %3498 = vmatpush2.bf16.msra.mxu0 0
        %3499 = vmatprep.subr.bf16.mxu0 0
        %3500 = vmatpush2.bf16.msra.mxu0 0
        %3501 = vmatprep.subr.bf16.mxu0 0
        %3502 = vmatpush2.bf16.msra.mxu0 0
        %3503 = vmatprep.subr.bf16.mxu0 0
        %3504 = vmatpush2.bf16.msra.mxu0 0
        %3505 = vmatprep.subr.bf16.mxu0 0
        %3506 = vmatpush2.bf16.msra.mxu0 0
        %3507 = vmatprep.mubr.bf16.mxu0 0
        %3508 = vmatmul.mubr.bf16.gmra.mxu0 %v3409
        %v3509 = vpop.f32.mrf.mxu0
        %v3510 = vadd.f32 0.0, %v3509
        %v3511 = vpop.f32.mrf.mxu0
        %v3512 = vpop.f32.mrf.mxu0
        %v3513 = vadd.f32 0.0, %v3512
        %v3514 = vpop.f32.mrf.mxu0
        %3515 = vdwg.mxu0
        %v3516 = vadd.f32 %v3407, %v3510
        %v3517 = vadd.f32 %v3408, %v3513
        %v3518 = vlaneseq
        %v3519 = vshrl.u32 %v3518, 7
        %v3520 = vsub.s32 0, %v3519
        %v3521 = vrot.slane %v366, %v3520
        %v3522 = vmul.f32 %v3516, %v3521
        %v3523 = vmul.f32 %v3517, %v3521
        %v3524 = vlaneseq
        %v3525 = vshrl.u32 %v3524, 7
        %v3526 = vsub.s32 0, %v3525
        %v3527 = vrot.slane %v367, %v3526
        %v3528 = vadd.f32 %v3522, %v3527
        %v3529 = vadd.f32 %v3523, %v3527
        %v3530 = vmax.f32 %v3528, 0.0
        %v3531 = vmax.f32 %v3529, 0.0
        %vm3532 = vcmask 130048
        %v3534 = vsel %vm3532, 0.0625, 0
        %3536 = vmatprep.subr.mxu0 0.0
        %3537 = vmatpush1.msra.mxu0 0.0
        %3538 = vmatprep.subr.mxu0 0.0
        %3539 = vmatpush1.msra.mxu0 0.0
        %3540 = vmatprep.subr.mxu0 0.0
        %3541 = vmatpush1.msra.mxu0 0.0
        %3542 = vmatprep.subr.mxu0 0.0
        %3543 = vmatpush1.msra.mxu0 0.0
        %3544 = vmatprep.subr.mxu0 0.0
        %3545 = vmatpush1.msra.mxu0 0.0
        %3546 = vmatprep.subr.mxu0 0.0
        %3547 = vmatpush1.msra.mxu0 0.0
        %3548 = vmatprep.subr.mxu0 0.0
        %3549 = vmatpush1.msra.mxu0 0.0
        %3550 = vmatprep.subr.mxu0 0.0
        %3551 = vmatpush1.msra.mxu0 0.0
        %3552 = vmatprep.subr.mxu0 0.0
        %3553 = vmatpush1.msra.mxu0 0.0
        %3554 = vmatprep.subr.mxu0 0.0
        %3555 = vmatpush1.msra.mxu0 0.0
        %3556 = vmatprep.subr.mxu0 0.0
        %3557 = vmatpush1.msra.mxu0 0.0
        %3558 = vmatprep.subr.mxu0 0.0
        %3559 = vmatpush1.msra.mxu0 0.0
        %3560 = vmatprep.subr.mxu0 0.0
        %3561 = vmatpush1.msra.mxu0 0.0
        %3562 = vmatprep.subr.mxu0 0.0
        %3563 = vmatpush1.msra.mxu0 0.0
        %3564 = vmatprep.subr.mxu0 0.0
        %3565 = vmatpush1.msra.mxu0 %v3531
        %3566 = vmatprep.subr.mxu0 0.0
        %3567 = vmatpush1.msra.mxu0 %v3530
        %3568 = vmatprep.subr.mxu0 0.0
        %3569 = vmatpush2.msra.mxu0 0.0
        %3570 = vmatprep.subr.mxu0 0.0
        %3571 = vmatpush2.msra.mxu0 0.0
        %3572 = vmatprep.subr.mxu0 0.0
        %3573 = vmatpush2.msra.mxu0 0.0
        %3574 = vmatprep.subr.mxu0 0.0
        %3575 = vmatpush2.msra.mxu0 0.0
        %3576 = vmatprep.subr.mxu0 0.0
        %3577 = vmatpush2.msra.mxu0 0.0
        %3578 = vmatprep.subr.mxu0 0.0
        %3579 = vmatpush2.msra.mxu0 0.0
        %3580 = vmatprep.subr.mxu0 0.0
        %3581 = vmatpush2.msra.mxu0 0.0
        %3582 = vmatprep.subr.mxu0 0.0
        %3583 = vmatpush2.msra.mxu0 0.0
        %3584 = vmatprep.subr.mxu0 0.0
        %3585 = vmatpush2.msra.mxu0 0.0
        %3586 = vmatprep.subr.mxu0 0.0
        %3587 = vmatpush2.msra.mxu0 0.0
        %3588 = vmatprep.subr.mxu0 0.0
        %3589 = vmatpush2.msra.mxu0 0.0
        %3590 = vmatprep.subr.mxu0 0.0
        %3591 = vmatpush2.msra.mxu0 0.0
        %3592 = vmatprep.subr.mxu0 0.0
        %3593 = vmatpush2.msra.mxu0 0.0
        %3594 = vmatprep.subr.mxu0 0.0
        %3595 = vmatpush2.msra.mxu0 0.0
        %3596 = vmatprep.subr.mxu0 0.0
        %3597 = vmatpush2.msra.mxu0 0.0
        %3598 = vmatprep.subr.mxu0 0.0
        %3599 = vmatpush2.msra.mxu0 0.0
        %3600 = vmatprep.mubr.f32.mxu0 0.0
        %3601 = vmatmul.mubr.f32.gmra.mxu0 %v3534
        %v3602 = vpop.f32.mrf.mxu0
        %v3603 = vadd.f32 0.0, %v3602
        %v3604 = vpop.f32.mrf.mxu0
        %3605 = vdwg.mxu0
        %3606 = vst [vmem:[#allocation2] sm:$0x1] %v3603
        %v3607 = vld [vmem:[#allocation2] sm:$0x1]
        %v3608 = vld [vmem:[%s8] sm:$0xff]
        %v3609 = vld [vmem:[%s8 + $0x8] sm:$0xff]
        %v3610 = vld [vmem:[%s8 + $0x10] sm:$0xff]
        %v3611 = vld [vmem:[%s8 + $0x18] sm:$0xff]
        %v3612 = vld [vmem:[%s8 + $0x20] sm:$0xff]
        %v3613 = vld [vmem:[%s8 + $0x28] sm:$0xff]
        %v3614 = vld [vmem:[%s8 + $0x30] sm:$0xff]
        %v3615 = vld [vmem:[%s8 + $0x38] sm:$0xff]
        %v3616 = vld [vmem:[%s8 + $0x40] sm:$0xff]
        %v3617 = vld [vmem:[%s8 + $0x48] sm:$0xff]
        %v3618 = vld [vmem:[%s8 + $0x50] sm:$0xff]
        %v3619 = vld [vmem:[%s8 + $0x58] sm:$0xff]
        %v3620 = vld [vmem:[%s8 + $0x60] sm:$0xff]
        %v3621 = vld [vmem:[%s8 + $0x68] sm:$0xff]
        %v3622 = vld [vmem:[%s8 + $0x70] sm:$0xff]
        %v3623 = vld [vmem:[%s8 + $0x78] sm:$0xff]
        %v3624 = vld [vmem:[%s9] sm:$0x1]
        %3625 = vmatprep.subr.mxu0 0.0
        %3626 = vmatpush1.msra.mxu0 %v3623
        %3627 = vmatprep.subr.mxu0 0.0
        %3628 = vmatpush1.msra.mxu0 %v3622
        %3629 = vmatprep.subr.mxu0 0.0
        %3630 = vmatpush1.msra.mxu0 %v3621
        %3631 = vmatprep.subr.mxu0 0.0
        %3632 = vmatpush1.msra.mxu0 %v3620
        %3633 = vmatprep.subr.mxu0 0.0
        %3634 = vmatpush1.msra.mxu0 %v3619
        %3635 = vmatprep.subr.mxu0 0.0
        %3636 = vmatpush1.msra.mxu0 %v3618
        %3637 = vmatprep.subr.mxu0 0.0
        %3638 = vmatpush1.msra.mxu0 %v3617
        %3639 = vmatprep.subr.mxu0 0.0
        %3640 = vmatpush1.msra.mxu0 %v3616
        %3641 = vmatprep.subr.mxu0 0.0
        %3642 = vmatpush1.msra.mxu0 %v3615
        %3643 = vmatprep.subr.mxu0 0.0
        %3644 = vmatpush1.msra.mxu0 %v3614
        %3645 = vmatprep.subr.mxu0 0.0
        %3646 = vmatpush1.msra.mxu0 %v3613
        %3647 = vmatprep.subr.mxu0 0.0
        %3648 = vmatpush1.msra.mxu0 %v3612
        %3649 = vmatprep.subr.mxu0 0.0
        %3650 = vmatpush1.msra.mxu0 %v3611
        %3651 = vmatprep.subr.mxu0 0.0
        %3652 = vmatpush1.msra.mxu0 %v3610
        %3653 = vmatprep.subr.mxu0 0.0
        %3654 = vmatpush1.msra.mxu0 %v3609
        %3655 = vmatprep.subr.mxu0 0.0
        %3656 = vmatpush1.msra.mxu0 %v3608
        %3657 = vmatprep.subr.mxu0 0.0
        %3658 = vmatpush2.msra.mxu0 0.0
        %3659 = vmatprep.subr.mxu0 0.0
        %3660 = vmatpush2.msra.mxu0 0.0
        %3661 = vmatprep.subr.mxu0 0.0
        %3662 = vmatpush2.msra.mxu0 0.0
        %3663 = vmatprep.subr.mxu0 0.0
        %3664 = vmatpush2.msra.mxu0 0.0
        %3665 = vmatprep.subr.mxu0 0.0
        %3666 = vmatpush2.msra.mxu0 0.0
        %3667 = vmatprep.subr.mxu0 0.0
        %3668 = vmatpush2.msra.mxu0 0.0
        %3669 = vmatprep.subr.mxu0 0.0
        %3670 = vmatpush2.msra.mxu0 0.0
        %3671 = vmatprep.subr.mxu0 0.0
        %3672 = vmatpush2.msra.mxu0 0.0
        %3673 = vmatprep.subr.mxu0 0.0
        %3674 = vmatpush2.msra.mxu0 0.0
        %3675 = vmatprep.subr.mxu0 0.0
        %3676 = vmatpush2.msra.mxu0 0.0
        %3677 = vmatprep.subr.mxu0 0.0
        %3678 = vmatpush2.msra.mxu0 0.0
        %3679 = vmatprep.subr.mxu0 0.0
        %3680 = vmatpush2.msra.mxu0 0.0
        %3681 = vmatprep.subr.mxu0 0.0
        %3682 = vmatpush2.msra.mxu0 0.0
        %3683 = vmatprep.subr.mxu0 0.0
        %3684 = vmatpush2.msra.mxu0 0.0
        %3685 = vmatprep.subr.mxu0 0.0
        %3686 = vmatpush2.msra.mxu0 0.0
        %3687 = vmatprep.subr.mxu0 0.0
        %3688 = vmatpush2.msra.mxu0 0.0
        %3689 = vmatprep.mubr.f32.mxu0 0.0
        %3690 = vmatmul.mubr.f32.gmra.mxu0 %v3607
        %v3691 = vpop.f32.mrf.mxu0
        %v3692 = vadd.f32 %v3624, %v3691
        %v3693 = vpop.f32.mrf.mxu0
        %3694 = vdwg.mxu0
        %v3695 = vmax.f32 %v3692, 0.0
        %v3696 = vsel %vm948, %v3695, -inf
        %3697 = vmax.xlane.f32.xlu0 %v3696
        %v3698 = vpop.xlane.xlu0 %3697
        %v3699 = vsub.f32 %v3695, %v3698
        %v3700 = vmul.f32 %v3699, 1.442695
        %v3701 = vpow.pop %v3700
        %v3702 = vld [vmem:[%s9 + $0x1] sm:$0x1]
        %v3703 = vmul.f32 %v3701, %v3702
        %v3704 = vsel %vm948, %v3703, 0.0
        %3705 = vadd.xlane.f32.xlu0 %v3704
        %v3706 = vpop.xlane.xlu0 %3705
        %v3707 = vrcp.pop %v3706
        %v3708 = vmul.f32 %v3703, %v3707
        %3709 = vst [vmem:[%s351] sm:$0x1] %v3708
        %s3710 = sand.u32 %s247, 1
        %s3711 = scalar_lea.sflag [#allocation4], %s3710
        %s3712 = sand.u32 %s247, 1
        %s3713 = scalar_lea.vmem [#allocation3], %s3712
        // Predicated region
        $region61: #{model_forward.1} parent=59 // pred_check
          %p3714 = pneg %p257
        $region62: #{model_forward.1} parent=59 // pred_check_branch
          %3716 = sbr.rel (%p3714) target = $region64
        $region63: #{model_forward.1} parent=59 // pred_region
          %s3718 = ssub.s32 16, 16
          %3719 = vsyncadd %s3711, %s3718
          %s3720 = smul.addr %s24, 16
          %s3721 = scalar_lea.hbm %s10, %s3720
          %s3723 = sshll.u32 %s3713, 4
          %s3724 = int_to_ptr.vmem [resolvable:$true] %s3723
          %3726 = dma.vmem_to_hbm [thread:$0]  %s3724, 16, %s3721, %s3711
        $region64: #{model_forward.1} parent=59 // pred_fallthru
          _
      $region60: #{model_forward.1} parent=5 // pred_fallthru
        _
      %p3727 = scmp.le.s32.totalorder 2, %s19
      // Predicated region
      $region65: #{model_forward.1} parent=5 // pred_check
        %p3728 = pneg %p3727
      $region66: #{model_forward.1} parent=5 // pred_check_branch
        %3730 = sbr.rel (%p3728) target = $region68
      $region67: #{model_forward.1} parent=5 // pred_region
        %s3731 = ssub.s32 %s19, 2
        // Predicated region
        $region69: #{model_forward.1} parent=67 // pred_check
          %p3732 = pneg %p263
        $region70: #{model_forward.1} parent=67 // pred_check_branch
          %3734 = sbr.rel (%p3732) target = $region72
        $region71: #{model_forward.1} parent=67 // pred_region
          %s3735 = sand.u32 %s248, 1
          %s3736 = scalar_lea.sflag [#allocation4], %s3735
          %s3737 = sand.u32 %s248, 1
          %s3738 = scalar_lea.vmem [#allocation3], %s3737
          %3739 = dma.done %s3736, 16
        $region72: #{model_forward.1} parent=67 // pred_fallthru
          _
      $region68: #{model_forward.1} parent=5 // pred_fallthru
        _
    $region6: #{model_forward.1} parent=1 // loop_footer
      %s23 = sadd.s32 1, %s19
    $region7: #{model_forward.1} parent=1 // loop_footer_branch
      %18 = sbr.rel target = $region3
    $region8: #{model_forward.1} parent=1 // loop_exit
      _
    %3740 = vsyncpa [#allocation4], 1
    %s3741 = scalar_lea.sflag [#allocation4], 1
    %3742 = vsyncpa %s3741, 1

</llo_original>
